<compile_context>
chip_gen: v7x
topology: tpu7x:2x2x1
jax: 0.10.0
libtpu: 0.0.40
codegen_flags: <defaults>
</compile_context>

<pallas_src>
import jax
import jax.numpy as jnp
from jax.experimental import pallas as pl
from jax.experimental.pallas import tpu as pltpu


def _conv_as_matmul_matrix(wconv, H, W):
    """Build M (2*H*W, H*W) so that the SAME-padded, stride-1, bias-free
    Conv2d(2 -> 1, K, K) equals  spat.reshape(..., 2*H*W) @ M  for spatial maps
    flattened row-major as (channel, h, w)."""
    Cin, K = wconv.shape[1], wconv.shape[-1]
    P = K // 2
    w = wconv.reshape(Cin, K, K).astype(jnp.float32)

    iy = jnp.arange(H)[:, None]        # input row
    oy = jnp.arange(H)[None, :]        # output row
    dy = iy - oy + P                   # (H, H) kernel row index
    vy = (dy >= 0) & (dy < K)
    dy = jnp.clip(dy, 0, K - 1)

    ix = jnp.arange(W)[:, None]        # input col
    ox = jnp.arange(W)[None, :]        # output col
    dx = ix - ox + P                   # (W, W) kernel col index
    vx = (dx >= 0) & (dx < K)
    dx = jnp.clip(dx, 0, K - 1)

    # T[c, iy, oy, ix, ox] = w[c, iy-oy+P, ix-ox+P] if the tap is in range else 0
    T = w[:, dy[:, :, None, None], dx[None, None, :, :]]          # (Cin,H,H,W,W)
    mask = (vy[:, :, None, None] & vx[None, None, :, :]).astype(jnp.float32)
    T = T * mask
    # rows = (c, iy, ix), cols = (oy, ox)
    M = T.transpose(0, 1, 3, 2, 4).reshape(Cin * H * W, H * W)
    return M


def _make_cbam_kernel(C, HW, HWp, mxu_dtype, unroll_channels):
    """Kernel closure over the static configuration."""
    f32 = jnp.float32
    inv_hw = 1.0 / HW
    inv_c = 1.0 / C

    def kernel(x_ref, w1t_ref, w2t_ref, mt_ref, mb_ref, o_ref):
        # x_ref : (Bblk, C, HWp) input dtype, lane-dense (HWp multiple of 128)
        x_blk = x_ref[...]

        # ---------------- channel attention ----------------
        avg_c = jnp.sum(x_blk.astype(f32), axis=2) * inv_hw          # (Bblk, C) f32
        if HWp != HW:
            # mask the zero padding out of the max-pool
            lane = jax.lax.broadcasted_iota(jnp.int32, x_blk.shape, 2)
            x_for_max = jnp.where(lane < HW, x_blk,
                                  jnp.asarray(-jnp.inf, x_blk.dtype))
        else:
            x_for_max = x_blk
        max_c = jnp.max(x_for_max, axis=2).astype(f32)                # (Bblk, C) f32

        w1t = w1t_ref[...]                                            # (C, hidden) mxu_dtype
        w2t = w2t_ref[...]                                            # (hidden, C) mxu_dtype

        def mlp(v):                                                   # (Bblk, C) f32
            h = jnp.dot(v.astype(mxu_dtype), w1t, preferred_element_type=f32)
            h = jnp.maximum(h, 0.0)
            return jnp.dot(h.astype(mxu_dtype), w2t, preferred_element_type=f32)

        attn_ch = jax.nn.sigmoid(mlp(avg_c) + mlp(max_c))             # (Bblk, C) f32

        # ------- spatial pools fused with the channel gate (no xg buffer) -------
        if unroll_channels:
            xc = x_blk[:, 0, :].astype(f32) * attn_ch[:, 0:1]
            sum_s, max_s = xc, xc
            for c in range(1, C):
                xc = x_blk[:, c, :].astype(f32) * attn_ch[:, c:c + 1]
                sum_s = sum_s + xc
                max_s = jnp.maximum(max_s, xc)
        else:
            def body(c, carry):
                s, m = carry
                xc = x_ref[:, pl.ds(c, 1), :][:, 0, :].astype(f32)
                xc = xc * jax.lax.dynamic_slice_in_dim(attn_ch, c, 1, axis=1)
                return s + xc, jnp.maximum(m, xc)
            xc0 = x_blk[:, 0, :].astype(f32) * attn_ch[:, 0:1]
            sum_s, max_s = jax.lax.fori_loop(1, C, body, (xc0, xc0))
        avg_s = sum_s * inv_c                                         # (Bblk, HWp) f32

        # -------- spatial attention: 7x7 conv as two MXU matmuls (avg/max halves) --------
        conv = jnp.dot(avg_s.astype(mxu_dtype), mt_ref[...],
                       preferred_element_type=f32)
        conv = conv + jnp.dot(max_s.astype(mxu_dtype), mb_ref[...],
                              preferred_element_type=f32)
        attn_sp = jax.nn.sigmoid(conv)                                # (Bblk, HWp) f32

        # ---------------- single output pass ----------------
        o_ref[...] = ((x_blk.astype(f32) * attn_ch[:, :, None])
                      * attn_sp[:, None, :]).astype(o_ref.dtype)

    return kernel


def cbam_pallas(x, w1, w2, wconv, *, block_b=None, mxu_dtype=jnp.bfloat16):
    B, C, H, W = x.shape
    HW = H * W
    HWp = max(128, ((HW + 127) // 128) * 128)       # lane-dense padding
    hidden = w1.shape[0]
    itemsize = jnp.dtype(x.dtype).itemsize
    mxu_itemsize = jnp.dtype(mxu_dtype).itemsize

    # ---- MXU operands (bf16 by default, f32 accumulation in-kernel) ----
    w1t = jnp.asarray(w1, jnp.float32).T.astype(mxu_dtype)        # (C, hidden)
    w2t = jnp.asarray(w2, jnp.float32).T.astype(mxu_dtype)        # (hidden, C)
    M = _conv_as_matmul_matrix(wconv, H, W)                       # (2*HW, HW) f32
    mt, mb = M[:HW], M[HW:]                                       # avg / max halves
    if HWp != HW:
        pad = ((0, HWp - HW), (0, HWp - HW))
        mt = jnp.pad(mt, pad)
        mb = jnp.pad(mb, pad)
    mt = mt.astype(mxu_dtype)
    mb = mb.astype(mxu_dtype)

    # ---- per-generation VMEM budget (lift the 64 MiB cap on v5e/v6e) ----
    try:
        vmem_cap = int(pltpu.get_tpu_info().vmem_capacity_bytes)
    except Exception:
        vmem_cap = 64 << 20                                       # conservative fallback
    budget = min(int(vmem_cap * 0.8), 110 << 20)

    m_bytes = 2 * HWp * HWp * mxu_itemsize                        # both halves, one copy
    # conservative: assume the pipeline double-buffers the constants
    fixed = 2 * m_bytes + 4 * C * hidden * mxu_itemsize + (4 << 20)
    per_row = 6 * C * HWp * itemsize + 8 * HWp * 4                # blocks + f32 temporaries
    if budget - fixed < per_row * 8:
        # TODO(synk): stream M in (2*HWp, tile_n) column panels from HBM (emit_pipeline)
        # or switch to the K-banded per-row-offset form when the dense conv matrix
        # does not fit VMEM (very large H*W).
        raise NotImplementedError(
            "dense conv-as-matmul matrix does not fit VMEM for this feature-map size")

    # ---- batch-block sizing: multiple of 8, sized to VMEM, >= 4 grid steps if possible ----
    if block_b is None:
        block_b = max(8, min(256, ((budget - fixed) // per_row) // 8 * 8))
        while block_b > 8 and pl.cdiv(B, block_b) < 4:            # 2 steps per v7x TC
            block_b -= 8
    else:
        block_b = max(8, ((int(block_b) + 7) // 8) * 8)

    grid_b = pl.cdiv(B, block_b)
    B_pad = grid_b * block_b

    x_flat = x.reshape(B, C, HW)
    if HWp != HW:
        x_flat = jnp.pad(x_flat, ((0, 0), (0, 0), (0, HWp - HW)))
    if B_pad != B:
        x_flat = jnp.pad(x_flat, ((0, B_pad - B), (0, 0), (0, 0)))

    # ---- explicit VMEM inventory -> vmem_limit ----
    blk_bytes = block_b * C * HWp * itemsize
    inventory = 4 * blk_bytes + fixed + 8 * block_b * HWp * 4 + 2 * blk_bytes
    vmem_limit = int(min(budget, max(32 << 20, inventory)))

    cost = pl.CostEstimate(
        flops=int(10 * B_pad * C * HW + 8 * B_pad * C * hidden + 4 * B_pad * HW * HW),
        transcendentals=int(B_pad * (C + HW)),
        bytes_accessed=int(2 * B_pad * C * HWp * itemsize + 2 * m_bytes))

    kernel = _make_cbam_kernel(C, HW, HWp, mxu_dtype, unroll_channels=(C <= 32))

    def build(single_buffer_consts):
        const_kw = ({"pipeline_mode": pl.Buffered(1)} if single_buffer_consts else {})
        grid_spec = pltpu.PrefetchScalarGridSpec(
            num_scalar_prefetch=0,
            grid=(grid_b,),
            in_specs=[
                pl.BlockSpec((block_b, C, HWp), lambda b: (b, 0, 0)),
                pl.BlockSpec((C, hidden), lambda b: (0, 0), **const_kw),
                pl.BlockSpec((hidden, C), lambda b: (0, 0), **const_kw),
                pl.BlockSpec((HWp, HWp), lambda b: (0, 0), **const_kw),
                pl.BlockSpec((HWp, HWp), lambda b: (0, 0), **const_kw),
            ],
            out_specs=pl.BlockSpec((block_b, C, HWp), lambda b: (b, 0, 0)),
        )
        return pl.pallas_call(
            kernel,
            out_shape=jax.ShapeDtypeStruct((B_pad, C, HWp), x.dtype),
            grid_spec=grid_spec,
            compiler_params=pltpu.CompilerParams(
                dimension_semantics=("parallel",),
                vmem_limit_bytes=vmem_limit),
            cost_estimate=cost,
        )

    try:
        # single-buffer the grid-invariant operands (weights + conv matrix)
        out_flat = build(True)(x_flat, w1t, w2t, mt, mb)
    except Exception:
        # fallback if pl.Buffered(1) is rejected by this jax version
        out_flat = build(False)(x_flat, w1t, w2t, mt, mb)

    return out_flat[:B, :, :HW].reshape(B, C, H, W)


def cbam_ref(x, w1, w2, wconv):
    """Pure-JAX reference mirroring the PyTorch forward."""
    avg = jnp.mean(x, axis=(2, 3))                        # (B, C)
    mx = jnp.max(x, axis=(2, 3))                          # (B, C)

    def mlp(v):
        return jnp.maximum(v @ w1.T, 0.0) @ w2.T

    attn_ch = jax.nn.sigmoid(mlp(avg) + mlp(mx))[:, :, None, None]
    xg = x * attn_ch
    avg_s = jnp.mean(xg, axis=1, keepdims=True)
    max_s = jnp.max(xg, axis=1, keepdims=True)
    spat = jnp.concatenate([avg_s, max_s], axis=1)        # (B, 2, H, W)
    conv = jax.lax.conv_general_dilated(
        spat, wconv, window_strides=(1, 1), padding="SAME",
        dimension_numbers=("NCHW", "OIHW", "NCHW"))
    return xg * jax.nn.sigmoid(conv)


if __name__ == "__main__":
    B, C, H, W = 2, 4, 16, 16
    reduction_ratio = 16
    kernel_size = 7
    hidden = max(C // reduction_ratio, 1)

    key = jax.random.PRNGKey(0)
    kx, k1, k2, kc = jax.random.split(key, 4)
    x = jax.random.normal(kx, (B, C, H, W), dtype=jnp.float32)
    w1 = jax.random.normal(k1, (hidden, C), dtype=jnp.float32) * 0.5   # Linear(C->hidden)
    w2 = jax.random.normal(k2, (C, hidden), dtype=jnp.float32) * 0.5   # Linear(hidden->C)
    wconv = jax.random.normal(kc, (1, 2, kernel_size, kernel_size),
                              dtype=jnp.float32) * 0.1                 # Conv2d(2->1,7x7)

    ref = jax.block_until_ready(cbam_ref(x, w1, w2, wconv))

    # Default path: bf16 MXU operands, f32 accumulation -> mixed-precision tolerance.
    out_bf16 = jax.block_until_ready(cbam_pallas(x, w1, w2, wconv))
    assert out_bf16.shape == (B, C, H, W)
    err_bf16 = float(jnp.max(jnp.abs(out_bf16 - ref)))
    assert err_bf16 < 6e-2, f"bf16-operand max abs err {err_bf16}"

    # Full-f32 operand path: must match the reference tightly.
    out_f32 = jax.block_until_ready(
        cbam_pallas(x, w1, w2, wconv, mxu_dtype=jnp.float32))
    err_f32 = float(jnp.max(jnp.abs(out_f32 - ref)))
    assert jnp.allclose(out_f32, ref, atol=1e-4, rtol=1e-4), f"f32 max abs err {err_f32}"

    print("KERNEL_OK")
</pallas_src>

<mosaic_0001>
module attributes {stable_mosaic.version = 11 : i64} {
  func.func @kernel(%arg0: i32, %arg1: memref<8x4x256xf32, #tpu.memory_space<vmem>>, %arg2: memref<4x1xbf16, #tpu.memory_space<vmem>>, %arg3: memref<1x4xbf16, #tpu.memory_space<vmem>>, %arg4: memref<256x256xbf16, #tpu.memory_space<vmem>>, %arg5: memref<256x256xbf16, #tpu.memory_space<vmem>>, %arg6: memref<8x4x256xf32, #tpu.memory_space<vmem>>) attributes {dimension_semantics = [#tpu.dimension_semantics<parallel>], iteration_bounds = array<i64: 1>, scalar_prefetch = 0 : i64, scratch_operands = 0 : i64, tpu.core_type = #tpu.core_type<tc>, window_params = [{transform_indices = @transform_0, window_bounds = array<i64: 8, 4, 256>}, {pipeline_mode = #tpu.pipeline_mode<synchronous>, transform_indices = @transform_1, window_bounds = array<i64: 4, 1>}, {pipeline_mode = #tpu.pipeline_mode<synchronous>, transform_indices = @transform_2, window_bounds = array<i64: 1, 4>}, {pipeline_mode = #tpu.pipeline_mode<synchronous>, transform_indices = @transform_3, window_bounds = array<i64: 256, 256>}, {pipeline_mode = #tpu.pipeline_mode<synchronous>, transform_indices = @transform_4, window_bounds = array<i64: 256, 256>}, {transform_indices = @transform_5, window_bounds = array<i64: 8, 4, 256>}]} {
    %c0 = arith.constant 0 : index
    %c0_0 = arith.constant 0 : index
    %c0_1 = arith.constant 0 : index
    %0 = vector.load %arg1[%c0, %c0_0, %c0_1] : memref<8x4x256xf32, #tpu.memory_space<vmem>>, vector<8x4x256xf32>
    %cst = arith.constant dense<0.000000e+00> : vector<8x4xf32>
    %1 = vector.multi_reduction <add>, %0, %cst [2] : vector<8x4x256xf32> to vector<8x4xf32>
    %cst_2 = arith.constant 3.906250e-03 : f32
    %2 = vector.broadcast %cst_2 : f32 to vector<8x4xf32>
    %3 = arith.mulf %1, %2 : vector<8x4xf32>
    %cst_3 = arith.constant dense<0xFF800000> : vector<8x4xf32>
    %4 = vector.multi_reduction <maximumf>, %0, %cst_3 [2] : vector<8x4x256xf32> to vector<8x4xf32>
    %c0_4 = arith.constant 0 : index
    %c0_5 = arith.constant 0 : index
    %5 = vector.load %arg2[%c0_4, %c0_5] : memref<4x1xbf16, #tpu.memory_space<vmem>>, vector<4x1xbf16>
    %c0_6 = arith.constant 0 : index
    %c0_7 = arith.constant 0 : index
    %6 = vector.load %arg3[%c0_6, %c0_7] : memref<1x4xbf16, #tpu.memory_space<vmem>>, vector<1x4xbf16>
    %7 = arith.truncf %3 : vector<8x4xf32> to vector<8x4xbf16>
    %cst_8 = arith.constant dense<0.000000e+00> : vector<8x1xf32>
    %8 = tpu.matmul %7, %5, %cst_8 {dimension_numbers = #tpu.dot_dimension_numbers<[1], [0], [0], [1], [0, 0, 1, 1], [], []>} : vector<8x4xbf16>, vector<4x1xbf16>, vector<8x1xf32> -> vector<8x1xf32>
    %cst_9 = arith.constant 0.000000e+00 : f32
    %9 = vector.broadcast %cst_9 : f32 to vector<8x1xf32>
    %10 = arith.maximumf %8, %9 : vector<8x1xf32>
    %11 = arith.truncf %10 : vector<8x1xf32> to vector<8x1xbf16>
    %cst_10 = arith.constant dense<0.000000e+00> : vector<8x4xf32>
    %12 = tpu.matmul %11, %6, %cst_10 {dimension_numbers = #tpu.dot_dimension_numbers<[1], [0], [0], [1], [0, 0, 1, 1], [], []>} : vector<8x1xbf16>, vector<1x4xbf16>, vector<8x4xf32> -> vector<8x4xf32>
    %13 = arith.truncf %4 : vector<8x4xf32> to vector<8x4xbf16>
    %cst_11 = arith.constant dense<0.000000e+00> : vector<8x1xf32>
    %14 = tpu.matmul %13, %5, %cst_11 {dimension_numbers = #tpu.dot_dimension_numbers<[1], [0], [0], [1], [0, 0, 1, 1], [], []>} : vector<8x4xbf16>, vector<4x1xbf16>, vector<8x1xf32> -> vector<8x1xf32>
    %cst_12 = arith.constant 0.000000e+00 : f32
    %15 = vector.broadcast %cst_12 : f32 to vector<8x1xf32>
    %16 = arith.maximumf %14, %15 : vector<8x1xf32>
    %17 = arith.truncf %16 : vector<8x1xf32> to vector<8x1xbf16>
    %cst_13 = arith.constant dense<0.000000e+00> : vector<8x4xf32>
    %18 = tpu.matmul %17, %6, %cst_13 {dimension_numbers = #tpu.dot_dimension_numbers<[1], [0], [0], [1], [0, 0, 1, 1], [], []>} : vector<8x1xbf16>, vector<1x4xbf16>, vector<8x4xf32> -> vector<8x4xf32>
    %19 = arith.addf %12, %18 : vector<8x4xf32>
    %20 = arith.negf %19 : vector<8x4xf32>
    %21 = math.exp %20 : vector<8x4xf32>
    %cst_14 = arith.constant 1.000000e+00 : f32
    %22 = vector.broadcast %cst_14 : f32 to vector<8x4xf32>
    %23 = arith.addf %22, %21 : vector<8x4xf32>
    %24 = arith.divf %22, %23 : vector<8x4xf32>
    %25 = vector.extract_strided_slice %0 {offsets = [0, 0, 0], sizes = [8, 1, 256], strides = [1, 1, 1]} : vector<8x4x256xf32> to vector<8x1x256xf32>
    %26 = vector.shape_cast %25 : vector<8x1x256xf32> to vector<8x256xf32>
    %27 = vector.extract_strided_slice %24 {offsets = [0, 0], sizes = [8, 1], strides = [1, 1]} : vector<8x4xf32> to vector<8x1xf32>
    %28 = vector.broadcast %27 : vector<8x1xf32> to vector<8x256xf32>
    %29 = arith.mulf %26, %28 : vector<8x256xf32>
    %30 = vector.extract_strided_slice %0 {offsets = [0, 1, 0], sizes = [8, 1, 256], strides = [1, 1, 1]} : vector<8x4x256xf32> to vector<8x1x256xf32>
    %31 = vector.shape_cast %30 : vector<8x1x256xf32> to vector<8x256xf32>
    %32 = vector.extract_strided_slice %24 {offsets = [0, 1], sizes = [8, 1], strides = [1, 1]} : vector<8x4xf32> to vector<8x1xf32>
    %33 = vector.broadcast %32 : vector<8x1xf32> to vector<8x256xf32>
    %34 = arith.mulf %31, %33 : vector<8x256xf32>
    %35 = arith.addf %29, %34 : vector<8x256xf32>
    %36 = arith.maximumf %29, %34 : vector<8x256xf32>
    %37 = vector.extract_strided_slice %0 {offsets = [0, 2, 0], sizes = [8, 1, 256], strides = [1, 1, 1]} : vector<8x4x256xf32> to vector<8x1x256xf32>
    %38 = vector.shape_cast %37 : vector<8x1x256xf32> to vector<8x256xf32>
    %39 = vector.extract_strided_slice %24 {offsets = [0, 2], sizes = [8, 1], strides = [1, 1]} : vector<8x4xf32> to vector<8x1xf32>
    %40 = vector.broadcast %39 : vector<8x1xf32> to vector<8x256xf32>
    %41 = arith.mulf %38, %40 : vector<8x256xf32>
    %42 = arith.addf %35, %41 : vector<8x256xf32>
    %43 = arith.maximumf %36, %41 : vector<8x256xf32>
    %44 = vector.extract_strided_slice %0 {offsets = [0, 3, 0], sizes = [8, 1, 256], strides = [1, 1, 1]} : vector<8x4x256xf32> to vector<8x1x256xf32>
    %45 = vector.shape_cast %44 : vector<8x1x256xf32> to vector<8x256xf32>
    %46 = vector.extract_strided_slice %24 {offsets = [0, 3], sizes = [8, 1], strides = [1, 1]} : vector<8x4xf32> to vector<8x1xf32>
    %47 = vector.broadcast %46 : vector<8x1xf32> to vector<8x256xf32>
    %48 = arith.mulf %45, %47 : vector<8x256xf32>
    %49 = arith.addf %42, %48 : vector<8x256xf32>
    %50 = arith.maximumf %43, %48 : vector<8x256xf32>
    %cst_15 = arith.constant 2.500000e-01 : f32
    %51 = vector.broadcast %cst_15 : f32 to vector<8x256xf32>
    %52 = arith.mulf %49, %51 : vector<8x256xf32>
    %53 = arith.truncf %52 : vector<8x256xf32> to vector<8x256xbf16>
    %c0_16 = arith.constant 0 : index
    %c0_17 = arith.constant 0 : index
    %54 = vector.load %arg4[%c0_16, %c0_17] : memref<256x256xbf16, #tpu.memory_space<vmem>>, vector<256x256xbf16>
    %cst_18 = arith.constant dense<0.000000e+00> : vector<8x256xf32>
    %55 = tpu.matmul %53, %54, %cst_18 {dimension_numbers = #tpu.dot_dimension_numbers<[1], [0], [0], [1], [0, 0, 1, 1], [], []>} : vector<8x256xbf16>, vector<256x256xbf16>, vector<8x256xf32> -> vector<8x256xf32>
    %56 = arith.truncf %50 : vector<8x256xf32> to vector<8x256xbf16>
    %c0_19 = arith.constant 0 : index
    %c0_20 = arith.constant 0 : index
    %57 = vector.load %arg5[%c0_19, %c0_20] : memref<256x256xbf16, #tpu.memory_space<vmem>>, vector<256x256xbf16>
    %cst_21 = arith.constant dense<0.000000e+00> : vector<8x256xf32>
    %58 = tpu.matmul %56, %57, %cst_21 {dimension_numbers = #tpu.dot_dimension_numbers<[1], [0], [0], [1], [0, 0, 1, 1], [], []>} : vector<8x256xbf16>, vector<256x256xbf16>, vector<8x256xf32> -> vector<8x256xf32>
    %59 = arith.addf %55, %58 : vector<8x256xf32>
    %60 = arith.negf %59 : vector<8x256xf32>
    %61 = math.exp %60 : vector<8x256xf32>
    %cst_22 = arith.constant 1.000000e+00 : f32
    %62 = vector.broadcast %cst_22 : f32 to vector<8x256xf32>
    %63 = arith.addf %62, %61 : vector<8x256xf32>
    %64 = arith.divf %62, %63 : vector<8x256xf32>
    %65 = vector.shape_cast %24 : vector<8x4xf32> to vector<8x4x1xf32>
    %66 = vector.broadcast %65 : vector<8x4x1xf32> to vector<8x4x256xf32>
    %67 = arith.mulf %0, %66 : vector<8x4x256xf32>
    %68 = vector.shape_cast %64 : vector<8x256xf32> to vector<8x1x256xf32>
    %69 = vector.broadcast %68 : vector<8x1x256xf32> to vector<8x4x256xf32>
    %70 = arith.mulf %67, %69 : vector<8x4x256xf32>
    %c0_23 = arith.constant 0 : index
    %c0_24 = arith.constant 0 : index
    %c0_25 = arith.constant 0 : index
    %71 = vector.load %arg6[%c0_23, %c0_24, %c0_25] : memref<8x4x256xf32, #tpu.memory_space<vmem>>, vector<8x4x256xf32>
    tpu.vector_store %arg6[%c0_23, %c0_24, %c0_25], %70 {strides = array<i32>} : memref<8x4x256xf32, #tpu.memory_space<vmem>>, vector<8x4x256xf32>,
    return
  }
  func.func @transform_0(%arg0: i32) -> (i32, i32, i32) {
    %c0_i32 = arith.constant 0 : i32
    %c0_i32_0 = arith.constant 0 : i32
    %c0_i32_1 = arith.constant 0 : i32
    return %arg0, %c0_i32, %c0_i32_0 : i32, i32, i32
  }
  func.func @transform_1(%arg0: i32) -> (i32, i32) {
    %c0_i32 = arith.constant 0 : i32
    %c0_i32_0 = arith.constant 0 : i32
    %c0_i32_1 = arith.constant 0 : i32
    return %c0_i32, %c0_i32_0 : i32, i32
  }
  func.func @transform_2(%arg0: i32) -> (i32, i32) {
    %c0_i32 = arith.constant 0 : i32
    %c0_i32_0 = arith.constant 0 : i32
    %c0_i32_1 = arith.constant 0 : i32
    return %c0_i32, %c0_i32_0 : i32, i32
  }
  func.func @transform_3(%arg0: i32) -> (i32, i32) {
    %c0_i32 = arith.constant 0 : i32
    %c0_i32_0 = arith.constant 0 : i32
    %c0_i32_1 = arith.constant 0 : i32
    return %c0_i32, %c0_i32_0 : i32, i32
  }
  func.func @transform_4(%arg0: i32) -> (i32, i32) {
    %c0_i32 = arith.constant 0 : i32
    %c0_i32_0 = arith.constant 0 : i32
    %c0_i32_1 = arith.constant 0 : i32
    return %c0_i32, %c0_i32_0 : i32, i32
  }
  func.func @transform_5(%arg0: i32) -> (i32, i32, i32) {
    %c0_i32 = arith.constant 0 : i32
    %c0_i32_0 = arith.constant 0 : i32
    %c0_i32_1 = arith.constant 0 : i32
    return %arg0, %c0_i32, %c0_i32_0 : i32, i32, i32
  }
}

module attributes {stable_mosaic.version = 11 : i64} {
  func.func @kernel(%arg0: i32, %arg1: memref<8x4x256xf32, #tpu.memory_space<vmem>>, %arg2: memref<4x1xbf16, #tpu.memory_space<vmem>>, %arg3: memref<1x4xbf16, #tpu.memory_space<vmem>>, %arg4: memref<256x256xbf16, #tpu.memory_space<vmem>>, %arg5: memref<256x256xbf16, #tpu.memory_space<vmem>>, %arg6: memref<8x4x256xf32, #tpu.memory_space<vmem>>) attributes {dimension_semantics = [#tpu.dimension_semantics<parallel>], iteration_bounds = array<i64: 1>, scalar_prefetch = 0 : i64, scratch_operands = 0 : i64, tpu.core_type = #tpu.core_type<tc>, window_params = [{transform_indices = @transform_0, window_bounds = array<i64: 8, 4, 256>}, {pipeline_mode = #tpu.pipeline_mode<synchronous>, transform_indices = @transform_1, window_bounds = array<i64: 4, 1>}, {pipeline_mode = #tpu.pipeline_mode<synchronous>, transform_indices = @transform_2, window_bounds = array<i64: 1, 4>}, {pipeline_mode = #tpu.pipeline_mode<synchronous>, transform_indices = @transform_3, window_bounds = array<i64: 256, 256>}, {pipeline_mode = #tpu.pipeline_mode<synchronous>, transform_indices = @transform_4, window_bounds = array<i64: 256, 256>}, {transform_indices = @transform_5, window_bounds = array<i64: 8, 4, 256>}]} {
    %c0 = arith.constant 0 : index
    %c0_0 = arith.constant 0 : index
    %c0_1 = arith.constant 0 : index
    %0 = vector.load %arg1[%c0, %c0_0, %c0_1] : memref<8x4x256xf32, #tpu.memory_space<vmem>>, vector<8x4x256xf32>
    %cst = arith.constant dense<0.000000e+00> : vector<8x4xf32>
    %1 = vector.multi_reduction <add>, %0, %cst [2] : vector<8x4x256xf32> to vector<8x4xf32>
    %cst_2 = arith.constant 3.906250e-03 : f32
    %2 = vector.broadcast %cst_2 : f32 to vector<8x4xf32>
    %3 = arith.mulf %1, %2 : vector<8x4xf32>
    %cst_3 = arith.constant dense<0xFF800000> : vector<8x4xf32>
    %4 = vector.multi_reduction <maximumf>, %0, %cst_3 [2] : vector<8x4x256xf32> to vector<8x4xf32>
    %c0_4 = arith.constant 0 : index
    %c0_5 = arith.constant 0 : index
    %5 = vector.load %arg2[%c0_4, %c0_5] : memref<4x1xbf16, #tpu.memory_space<vmem>>, vector<4x1xbf16>
    %c0_6 = arith.constant 0 : index
    %c0_7 = arith.constant 0 : index
    %6 = vector.load %arg3[%c0_6, %c0_7] : memref<1x4xbf16, #tpu.memory_space<vmem>>, vector<1x4xbf16>
    %7 = arith.truncf %3 : vector<8x4xf32> to vector<8x4xbf16>
    %cst_8 = arith.constant dense<0.000000e+00> : vector<8x1xf32>
    %8 = tpu.matmul %7, %5, %cst_8 {dimension_numbers = #tpu.dot_dimension_numbers<[1], [0], [0], [1], [0, 0, 1, 1], [], []>} : vector<8x4xbf16>, vector<4x1xbf16>, vector<8x1xf32> -> vector<8x1xf32>
    %cst_9 = arith.constant 0.000000e+00 : f32
    %9 = vector.broadcast %cst_9 : f32 to vector<8x1xf32>
    %10 = arith.maximumf %8, %9 : vector<8x1xf32>
    %11 = arith.truncf %10 : vector<8x1xf32> to vector<8x1xbf16>
    %cst_10 = arith.constant dense<0.000000e+00> : vector<8x4xf32>
    %12 = tpu.matmul %11, %6, %cst_10 {dimension_numbers = #tpu.dot_dimension_numbers<[1], [0], [0], [1], [0, 0, 1, 1], [], []>} : vector<8x1xbf16>, vector<1x4xbf16>, vector<8x4xf32> -> vector<8x4xf32>
    %13 = arith.truncf %4 : vector<8x4xf32> to vector<8x4xbf16>
    %cst_11 = arith.constant dense<0.000000e+00> : vector<8x1xf32>
    %14 = tpu.matmul %13, %5, %cst_11 {dimension_numbers = #tpu.dot_dimension_numbers<[1], [0], [0], [1], [0, 0, 1, 1], [], []>} : vector<8x4xbf16>, vector<4x1xbf16>, vector<8x1xf32> -> vector<8x1xf32>
    %cst_12 = arith.constant 0.000000e+00 : f32
    %15 = vector.broadcast %cst_12 : f32 to vector<8x1xf32>
    %16 = arith.maximumf %14, %15 : vector<8x1xf32>
    %17 = arith.truncf %16 : vector<8x1xf32> to vector<8x1xbf16>
    %cst_13 = arith.constant dense<0.000000e+00> : vector<8x4xf32>
    %18 = tpu.matmul %17, %6, %cst_13 {dimension_numbers = #tpu.dot_dimension_numbers<[1], [0], [0], [1], [0, 0, 1, 1], [], []>} : vector<8x1xbf16>, vector<1x4xbf16>, vector<8x4xf32> -> vector<8x4xf32>
    %19 = arith.addf %12, %18 : vector<8x4xf32>
    %20 = arith.negf %19 : vector<8x4xf32>
    %21 = math.exp %20 : vector<8x4xf32>
    %cst_14 = arith.constant 1.000000e+00 : f32
    %22 = vector.broadcast %cst_14 : f32 to vector<8x4xf32>
    %23 = arith.addf %22, %21 : vector<8x4xf32>
    %24 = arith.divf %22, %23 : vector<8x4xf32>
    %25 = vector.extract_strided_slice %0 {offsets = [0, 0, 0], sizes = [8, 1, 256], strides = [1, 1, 1]} : vector<8x4x256xf32> to vector<8x1x256xf32>
    %26 = vector.shape_cast %25 : vector<8x1x256xf32> to vector<8x256xf32>
    %27 = vector.extract_strided_slice %24 {offsets = [0, 0], sizes = [8, 1], strides = [1, 1]} : vector<8x4xf32> to vector<8x1xf32>
    %28 = vector.broadcast %27 : vector<8x1xf32> to vector<8x256xf32>
    %29 = arith.mulf %26, %28 : vector<8x256xf32>
    %30 = vector.extract_strided_slice %0 {offsets = [0, 1, 0], sizes = [8, 1, 256], strides = [1, 1, 1]} : vector<8x4x256xf32> to vector<8x1x256xf32>
    %31 = vector.shape_cast %30 : vector<8x1x256xf32> to vector<8x256xf32>
    %32 = vector.extract_strided_slice %24 {offsets = [0, 1], sizes = [8, 1], strides = [1, 1]} : vector<8x4xf32> to vector<8x1xf32>
    %33 = vector.broadcast %32 : vector<8x1xf32> to vector<8x256xf32>
    %34 = arith.mulf %31, %33 : vector<8x256xf32>
    %35 = arith.addf %29, %34 : vector<8x256xf32>
    %36 = arith.maximumf %29, %34 : vector<8x256xf32>
    %37 = vector.extract_strided_slice %0 {offsets = [0, 2, 0], sizes = [8, 1, 256], strides = [1, 1, 1]} : vector<8x4x256xf32> to vector<8x1x256xf32>
    %38 = vector.shape_cast %37 : vector<8x1x256xf32> to vector<8x256xf32>
    %39 = vector.extract_strided_slice %24 {offsets = [0, 2], sizes = [8, 1], strides = [1, 1]} : vector<8x4xf32> to vector<8x1xf32>
    %40 = vector.broadcast %39 : vector<8x1xf32> to vector<8x256xf32>
    %41 = arith.mulf %38, %40 : vector<8x256xf32>
    %42 = arith.addf %35, %41 : vector<8x256xf32>
    %43 = arith.maximumf %36, %41 : vector<8x256xf32>
    %44 = vector.extract_strided_slice %0 {offsets = [0, 3, 0], sizes = [8, 1, 256], strides = [1, 1, 1]} : vector<8x4x256xf32> to vector<8x1x256xf32>
    %45 = vector.shape_cast %44 : vector<8x1x256xf32> to vector<8x256xf32>
    %46 = vector.extract_strided_slice %24 {offsets = [0, 3], sizes = [8, 1], strides = [1, 1]} : vector<8x4xf32> to vector<8x1xf32>
    %47 = vector.broadcast %46 : vector<8x1xf32> to vector<8x256xf32>
    %48 = arith.mulf %45, %47 : vector<8x256xf32>
    %49 = arith.addf %42, %48 : vector<8x256xf32>
    %50 = arith.maximumf %43, %48 : vector<8x256xf32>
    %cst_15 = arith.constant 2.500000e-01 : f32
    %51 = vector.broadcast %cst_15 : f32 to vector<8x256xf32>
    %52 = arith.mulf %49, %51 : vector<8x256xf32>
    %53 = arith.truncf %52 : vector<8x256xf32> to vector<8x256xbf16>
    %c0_16 = arith.constant 0 : index
    %c0_17 = arith.constant 0 : index
    %54 = vector.load %arg4[%c0_16, %c0_17] : memref<256x256xbf16, #tpu.memory_space<vmem>>, vector<256x256xbf16>
    %cst_18 = arith.constant dense<0.000000e+00> : vector<8x256xf32>
    %55 = tpu.matmul %53, %54, %cst_18 {dimension_numbers = #tpu.dot_dimension_numbers<[1], [0], [0], [1], [0, 0, 1, 1], [], []>} : vector<8x256xbf16>, vector<256x256xbf16>, vector<8x256xf32> -> vector<8x256xf32>
    %56 = arith.truncf %50 : vector<8x256xf32> to vector<8x256xbf16>
    %c0_19 = arith.constant 0 : index
    %c0_20 = arith.constant 0 : index
    %57 = vector.load %arg5[%c0_19, %c0_20] : memref<256x256xbf16, #tpu.memory_space<vmem>>, vector<256x256xbf16>
    %cst_21 = arith.constant dense<0.000000e+00> : vector<8x256xf32>
    %58 = tpu.matmul %56, %57, %cst_21 {dimension_numbers = #tpu.dot_dimension_numbers<[1], [0], [0], [1], [0, 0, 1, 1], [], []>} : vector<8x256xbf16>, vector<256x256xbf16>, vector<8x256xf32> -> vector<8x256xf32>
    %59 = arith.addf %55, %58 : vector<8x256xf32>
    %60 = arith.negf %59 : vector<8x256xf32>
    %61 = math.exp %60 : vector<8x256xf32>
    %cst_22 = arith.constant 1.000000e+00 : f32
    %62 = vector.broadcast %cst_22 : f32 to vector<8x256xf32>
    %63 = arith.addf %62, %61 : vector<8x256xf32>
    %64 = arith.divf %62, %63 : vector<8x256xf32>
    %65 = vector.shape_cast %24 : vector<8x4xf32> to vector<8x4x1xf32>
    %66 = vector.broadcast %65 : vector<8x4x1xf32> to vector<8x4x256xf32>
    %67 = arith.mulf %0, %66 : vector<8x4x256xf32>
    %68 = vector.shape_cast %64 : vector<8x256xf32> to vector<8x1x256xf32>
    %69 = vector.broadcast %68 : vector<8x1x256xf32> to vector<8x4x256xf32>
    %70 = arith.mulf %67, %69 : vector<8x4x256xf32>
    %c0_23 = arith.constant 0 : index
    %c0_24 = arith.constant 0 : index
    %c0_25 = arith.constant 0 : index
    %71 = vector.load %arg6[%c0_23, %c0_24, %c0_25] : memref<8x4x256xf32, #tpu.memory_space<vmem>>, vector<8x4x256xf32>
    tpu.vector_store %arg6[%c0_23, %c0_24, %c0_25], %70 {strides = array<i32>} : memref<8x4x256xf32, #tpu.memory_space<vmem>>, vector<8x4x256xf32>,
    return
  }
  func.func @transform_0(%arg0: i32) -> (i32, i32, i32) {
    %c0_i32 = arith.constant 0 : i32
    %c0_i32_0 = arith.constant 0 : i32
    %c0_i32_1 = arith.constant 0 : i32
    return %arg0, %c0_i32, %c0_i32_0 : i32, i32, i32
  }
  func.func @transform_1(%arg0: i32) -> (i32, i32) {
    %c0_i32 = arith.constant 0 : i32
    %c0_i32_0 = arith.constant 0 : i32
    %c0_i32_1 = arith.constant 0 : i32
    return %c0_i32, %c0_i32_0 : i32, i32
  }
  func.func @transform_2(%arg0: i32) -> (i32, i32) {
    %c0_i32 = arith.constant 0 : i32
    %c0_i32_0 = arith.constant 0 : i32
    %c0_i32_1 = arith.constant 0 : i32
    return %c0_i32, %c0_i32_0 : i32, i32
  }
  func.func @transform_3(%arg0: i32) -> (i32, i32) {
    %c0_i32 = arith.constant 0 : i32
    %c0_i32_0 = arith.constant 0 : i32
    %c0_i32_1 = arith.constant 0 : i32
    return %c0_i32, %c0_i32_0 : i32, i32
  }
  func.func @transform_4(%arg0: i32) -> (i32, i32) {
    %c0_i32 = arith.constant 0 : i32
    %c0_i32_0 = arith.constant 0 : i32
    %c0_i32_1 = arith.constant 0 : i32
    return %c0_i32, %c0_i32_0 : i32, i32
  }
  func.func @transform_5(%arg0: i32) -> (i32, i32, i32) {
    %c0_i32 = arith.constant 0 : i32
    %c0_i32_0 = arith.constant 0 : i32
    %c0_i32_1 = arith.constant 0 : i32
    return %arg0, %c0_i32, %c0_i32_0 : i32, i32, i32
  }
}

</mosaic_0001>

<llo_original>
// kernel: tpu_custom_call.1
$region0: #{tpu_custom_call.1}
  #allocation0 [shape = 'u32[]', space=smem, size = 0x4, offset = 0x4, fixed_abs, tag = 'smem constant byte address 0x4 - core index']
  #allocation1 [shape = 'u32[144,128]{1,0:T(1,128)}', space=vmem, size = 0x12000, scoped, tag = 'internal scratch']
  %s0 = inlined_call_operand.hbm [shape: f32[8,4,256], index: 0, kind: input, shape index: {}]
  %s1 = inlined_call_operand.vmem [shape: bf16[4,1], index: 1, kind: input, shape index: {}]
  %s2 = inlined_call_operand.vmem [shape: bf16[1,4], index: 2, kind: input, shape index: {}]
  %s3 = inlined_call_operand.hbm [shape: bf16[256,256], index: 3, kind: input, shape index: {}]
  %s4 = inlined_call_operand.hbm [shape: bf16[256,256], index: 4, kind: input, shape index: {}]
  %s5 = inlined_call_operand.hbm [shape: f32[8,4,256], index: 5, kind: output, shape index: {}]
  %s6 = sld [smem:[#allocation0]]
  $region42: #{tpu_custom_call.1} parent=0
    _
  %s8 = ssub.s32 1, %s6
  %s9 = scalar_select 0, %s8, %s6
  $region1: #{tpu_custom_call.1} parent=0
    #allocation2 [shape = 'u8[32768]{0}', space=vmem, size = 0x8000, scoped, tag = 'input window, operand 0, single buffered']
    #allocation3 [shape = 's32[1]{0}', space=sflag, size = 0x4, scoped, tag = 'scoped memory for tpu_custom_call.1']
    #allocation4 [shape = 's32[1]{0}', space=sflag, size = 0x4, scoped, tag = 'scoped memory for tpu_custom_call.1']
    #allocation5 [shape = 'u8[131072]{0}', space=vmem, size = 0x20000, scoped, tag = 'input window, operand 3, single buffered']
    #allocation6 [shape = 's32[1]{0}', space=sflag, size = 0x4, scoped, tag = 'scoped memory for tpu_custom_call.1']
    #allocation7 [shape = 'u8[131072]{0}', space=vmem, size = 0x20000, scoped, tag = 'input window, operand 4, single buffered']
    #allocation8 [shape = 'u8[32768]{0}', space=vmem, size = 0x8000, scoped, tag = 'output window, operand 0, single buffered']
    %10 = vsyncpa [#allocation3], 0
    %11 = vsyncpa [#allocation6], 0
    %12 = vsyncpa [#allocation4], 0
    // Predicated region
    $region2: #{tpu_custom_call.1} parent=1 // pred_check
      _
    $region3: #{tpu_custom_call.1} parent=1 // pred_check_branch
      %14 = sbr.rel (0) target = $region5
    $region4: #{tpu_custom_call.1} parent=1 // pred_region
      %s16 = ssub.s32 1024, 1024
      %17 = vsyncadd [#allocation3], %s16
      %s18 = sshll.u32 [#allocation2], 4
      %s19 = int_to_ptr.vmem [resolvable:$true] %s18
      %24 = dma.hbm_to_vmem [thread:$0]  %s0, 1024, %s19, [#allocation3], 128, 128, 8
    $region5: #{tpu_custom_call.1} parent=1 // pred_fallthru
      _
    // Predicated region
    $region6: #{tpu_custom_call.1} parent=1 // pred_check
      _
    $region7: #{tpu_custom_call.1} parent=1 // pred_check_branch
      %26 = sbr.rel (0) target = $region9
    $region8: #{tpu_custom_call.1} parent=1 // pred_region
      _
    $region9: #{tpu_custom_call.1} parent=1 // pred_fallthru
      _
    // Predicated region
    $region10: #{tpu_custom_call.1} parent=1 // pred_check
      _
    $region11: #{tpu_custom_call.1} parent=1 // pred_check_branch
      %28 = sbr.rel (0) target = $region13
    $region12: #{tpu_custom_call.1} parent=1 // pred_region
      _
    $region13: #{tpu_custom_call.1} parent=1 // pred_fallthru
      _
    // Predicated region
    $region14: #{tpu_custom_call.1} parent=1 // pred_check
      _
    $region15: #{tpu_custom_call.1} parent=1 // pred_check_branch
      %30 = sbr.rel (0) target = $region17
    $region16: #{tpu_custom_call.1} parent=1 // pred_region
      %s32 = ssub.s32 4096, 4096
      %33 = vsyncadd [#allocation6], %s32
      %s34 = sshll.u32 [#allocation5], 4
      %s35 = int_to_ptr.vmem [resolvable:$true] %s34
      %40 = dma.hbm_to_vmem [thread:$0]  %s3, 4096, %s35, [#allocation6], 128, 128, 8
    $region17: #{tpu_custom_call.1} parent=1 // pred_fallthru
      _
    // Predicated region
    $region18: #{tpu_custom_call.1} parent=1 // pred_check
      _
    $region19: #{tpu_custom_call.1} parent=1 // pred_check_branch
      %42 = sbr.rel (0) target = $region21
    $region20: #{tpu_custom_call.1} parent=1 // pred_region
      %s44 = ssub.s32 4096, 4096
      %45 = vsyncadd [#allocation6], %s44
      %s46 = sshll.u32 [#allocation7], 4
      %s47 = int_to_ptr.vmem [resolvable:$true] %s46
      %52 = dma.hbm_to_vmem [thread:$0]  %s4, 4096, %s47, [#allocation6], 128, 128, 8
    $region21: #{tpu_custom_call.1} parent=1 // pred_fallthru
      _
    // Predicated region
    $region22: #{tpu_custom_call.1} parent=1 // pred_check
      _
    $region23: #{tpu_custom_call.1} parent=1 // pred_check_branch
      %54 = sbr.rel (0) target = $region25
    $region24: #{tpu_custom_call.1} parent=1 // pred_region
      %55 = dma.done [#allocation3], 1024
    $region25: #{tpu_custom_call.1} parent=1 // pred_fallthru
      _
    // Predicated region
    $region26: #{tpu_custom_call.1} parent=1 // pred_check
      _
    $region27: #{tpu_custom_call.1} parent=1 // pred_check_branch
      %57 = sbr.rel (0) target = $region29
    $region28: #{tpu_custom_call.1} parent=1 // pred_region
      %58 = dma.done [#allocation6], 4096
    $region29: #{tpu_custom_call.1} parent=1 // pred_fallthru
      _
    // Predicated region
    $region30: #{tpu_custom_call.1} parent=1 // pred_check
      _
    $region31: #{tpu_custom_call.1} parent=1 // pred_check_branch
      %60 = sbr.rel (0) target = $region33
    $region32: #{tpu_custom_call.1} parent=1 // pred_region
      %61 = dma.done [#allocation6], 4096
    $region33: #{tpu_custom_call.1} parent=1 // pred_fallthru
      _
    %v63 = vld [vmem:[#allocation2] sm:$0xff]
    %v64 = vld [vmem:[#allocation2 + $0x8] sm:$0xff]
    %v65 = vld [vmem:[#allocation2 + $0x10] sm:$0xff]
    %v66 = vld [vmem:[#allocation2 + $0x18] sm:$0xff]
    %v67 = vld [vmem:[#allocation2 + $0x20] sm:$0xff]
    %v68 = vld [vmem:[#allocation2 + $0x28] sm:$0xff]
    %v69 = vld [vmem:[#allocation2 + $0x30] sm:$0xff]
    %v70 = vld [vmem:[#allocation2 + $0x38] sm:$0xff]
    %v79 = vcombine.high %v63, %v63
    %v80 = vcombine.high %v64, %v64
    %v81 = vcombine.high %v65, %v65
    %v82 = vcombine.high %v66, %v66
    %v83 = vcombine.high %v67, %v67
    %v84 = vcombine.high %v68, %v68
    %v85 = vcombine.high %v69, %v69
    %v86 = vcombine.high %v70, %v70
    %vm95 = vcmask 1043456
    %v96 = vsel %vm95, %v63, 0.0
    %v97 = vsel %vm95, %v79, 0.0
    %v98 = vadd.f32 %v96, %v97
    %99 = vadd.xlane.f32.xlu0 %v98
    %v100 = vpop.xlane.xlu0 %99
    %v101 = vsel %vm95, %v64, 0.0
    %v102 = vsel %vm95, %v80, 0.0
    %v103 = vadd.f32 %v101, %v102
    %104 = vadd.xlane.f32.xlu0 %v103
    %v105 = vpop.xlane.xlu0 %104
    %v106 = vsel %vm95, %v65, 0.0
    %v107 = vsel %vm95, %v81, 0.0
    %v108 = vadd.f32 %v106, %v107
    %109 = vadd.xlane.f32.xlu0 %v108
    %v110 = vpop.xlane.xlu0 %109
    %v111 = vsel %vm95, %v66, 0.0
    %v112 = vsel %vm95, %v82, 0.0
    %v113 = vadd.f32 %v111, %v112
    %114 = vadd.xlane.f32.xlu0 %v113
    %v115 = vpop.xlane.xlu0 %114
    %v116 = vsel %vm95, %v67, 0.0
    %v117 = vsel %vm95, %v83, 0.0
    %v118 = vadd.f32 %v116, %v117
    %119 = vadd.xlane.f32.xlu0 %v118
    %v120 = vpop.xlane.xlu0 %119
    %v121 = vsel %vm95, %v68, 0.0
    %v122 = vsel %vm95, %v84, 0.0
    %v123 = vadd.f32 %v121, %v122
    %124 = vadd.xlane.f32.xlu0 %v123
    %v125 = vpop.xlane.xlu0 %124
    %v126 = vsel %vm95, %v69, 0.0
    %v127 = vsel %vm95, %v85, 0.0
    %v128 = vadd.f32 %v126, %v127
    %129 = vadd.xlane.f32.xlu0 %v128
    %v130 = vpop.xlane.xlu0 %129
    %v131 = vsel %vm95, %v70, 0.0
    %v132 = vsel %vm95, %v86, 0.0
    %v133 = vadd.f32 %v131, %v132
    %134 = vadd.xlane.f32.xlu0 %v133
    %v135 = vpop.xlane.xlu0 %134
    %v136 = vmul.f32 %v100, 0.00390625
    %v137 = vmul.f32 %v105, 0.00390625
    %v138 = vmul.f32 %v110, 0.00390625
    %v139 = vmul.f32 %v115, 0.00390625
    %v140 = vmul.f32 %v120, 0.00390625
    %v141 = vmul.f32 %v125, 0.00390625
    %v142 = vmul.f32 %v130, 0.00390625
    %v143 = vmul.f32 %v135, 0.00390625
    %v144 = vsel %vm95, %v63, -inf
    %v145 = vsel %vm95, %v79, -inf
    %v146 = vmax.f32 %v144, %v145
    %147 = vmax.xlane.f32.xlu0 %v146
    %v148 = vpop.xlane.xlu0 %147
    %v149 = vsel %vm95, %v64, -inf
    %v150 = vsel %vm95, %v80, -inf
    %v151 = vmax.f32 %v149, %v150
    %152 = vmax.xlane.f32.xlu0 %v151
    %v153 = vpop.xlane.xlu0 %152
    %v154 = vsel %vm95, %v65, -inf
    %v155 = vsel %vm95, %v81, -inf
    %v156 = vmax.f32 %v154, %v155
    %157 = vmax.xlane.f32.xlu0 %v156
    %v158 = vpop.xlane.xlu0 %157
    %v159 = vsel %vm95, %v66, -inf
    %v160 = vsel %vm95, %v82, -inf
    %v161 = vmax.f32 %v159, %v160
    %162 = vmax.xlane.f32.xlu0 %v161
    %v163 = vpop.xlane.xlu0 %162
    %v164 = vsel %vm95, %v67, -inf
    %v165 = vsel %vm95, %v83, -inf
    %v166 = vmax.f32 %v164, %v165
    %167 = vmax.xlane.f32.xlu0 %v166
    %v168 = vpop.xlane.xlu0 %167
    %v169 = vsel %vm95, %v68, -inf
    %v170 = vsel %vm95, %v84, -inf
    %v171 = vmax.f32 %v169, %v170
    %172 = vmax.xlane.f32.xlu0 %v171
    %v173 = vpop.xlane.xlu0 %172
    %v174 = vsel %vm95, %v69, -inf
    %v175 = vsel %vm95, %v85, -inf
    %v176 = vmax.f32 %v174, %v175
    %177 = vmax.xlane.f32.xlu0 %v176
    %v178 = vpop.xlane.xlu0 %177
    %v179 = vsel %vm95, %v70, -inf
    %v180 = vsel %vm95, %v86, -inf
    %v181 = vmax.f32 %v179, %v180
    %182 = vmax.xlane.f32.xlu0 %v181
    %v183 = vpop.xlane.xlu0 %182
    %v184 = vld [vmem:[%s1] sm:$0x3]
    %v185 = vld [vmem:[%s2] sm:$0x1]
    %v186 = vpack.c.bf16 %v136, %v136
    %v187 = vpack.c.bf16 %v137, %v137
    %v188 = vpack.c.bf16 %v138, %v138
    %v189 = vpack.c.bf16 %v139, %v139
    %v190 = vpack.c.bf16 %v140, %v140
    %v191 = vpack.c.bf16 %v141, %v141
    %v192 = vpack.c.bf16 %v142, %v142
    %v193 = vpack.c.bf16 %v143, %v143
    %v202 = vunpack.c.l.b16 %v186
    %v203 = vunpack.c.l.b16 %v187
    %v204 = vunpack.c.l.b16 %v188
    %v205 = vunpack.c.l.b16 %v189
    %v206 = vunpack.c.l.b16 %v190
    %v207 = vunpack.c.l.b16 %v191
    %v208 = vunpack.c.l.b16 %v192
    %v209 = vunpack.c.l.b16 %v193
    %v210 = vlaneseq
    %v211 = vand.u32 %v210, 127
    %v212 = vlaneseq
    %v213 = vshrl.u32 %v212, 7
    %v214 = vsub.s32 %v211, %v213
    %v215 = vrot.slane %v202, %v214
    %v216 = vlaneseq
    %v217 = vshrl.u32 %v216, 7
    %v218 = vsub.s32 %v211, %v217
    %v219 = vrot.slane %v203, %v218
    %v220 = vlaneseq
    %v221 = vshrl.u32 %v220, 7
    %v222 = vsub.s32 %v211, %v221
    %v223 = vrot.slane %v204, %v222
    %v224 = vlaneseq
    %v225 = vshrl.u32 %v224, 7
    %v226 = vsub.s32 %v211, %v225
    %v227 = vrot.slane %v205, %v226
    %v228 = vlaneseq
    %v229 = vshrl.u32 %v228, 7
    %v230 = vsub.s32 %v211, %v229
    %v231 = vrot.slane %v206, %v230
    %v232 = vlaneseq
    %v233 = vshrl.u32 %v232, 7
    %v234 = vsub.s32 %v211, %v233
    %v235 = vrot.slane %v207, %v234
    %v236 = vlaneseq
    %v237 = vshrl.u32 %v236, 7
    %v238 = vsub.s32 %v211, %v237
    %v239 = vrot.slane %v208, %v238
    %v240 = vlaneseq
    %v241 = vshrl.u32 %v240, 7
    %v242 = vsub.s32 %v211, %v241
    %v243 = vrot.slane %v209, %v242
    %vm244 = vcmask 1041409
    %v245 = vsel %vm244, %v219, %v215
    %vm246 = vcmask 1042434
    %v247 = vsel %vm246, %v223, %v245
    %vm248 = vcmask 1043459
    %v249 = vsel %vm248, %v227, %v247
    %vm250 = vcmask 1044484
    %v251 = vsel %vm250, %v231, %v249
    %vm252 = vcmask 1045509
    %v253 = vsel %vm252, %v235, %v251
    %vm254 = vcmask 1046534
    %v255 = vsel %vm254, %v239, %v253
    %vm256 = vcmask 1047559
    %v257 = vsel %vm256, %v243, %v255
    %v258 = vpack.c.b16 %v257, %v257
    %vm259 = vcmask 31744
    %v261 = vsel %vm259, %v258, 0
    %vm263 = vcmask 1041408
    %v265 = vsel %vm263, %v184, 0
    %267 = vmatprep.subr.bf16.mxu0 0
    %268 = vmatpush1.bf16.msra.mxu0 %v265
    %269 = vmatprep.subr.bf16.mxu0 0
    %270 = vmatpush1.bf16.msra.mxu0 0
    %271 = vmatprep.subr.bf16.mxu0 0
    %272 = vmatpush1.bf16.msra.mxu0 0
    %273 = vmatprep.subr.bf16.mxu0 0
    %274 = vmatpush1.bf16.msra.mxu0 0
    %275 = vmatprep.subr.bf16.mxu0 0
    %276 = vmatpush1.bf16.msra.mxu0 0
    %277 = vmatprep.subr.bf16.mxu0 0
    %278 = vmatpush1.bf16.msra.mxu0 0
    %279 = vmatprep.subr.bf16.mxu0 0
    %280 = vmatpush1.bf16.msra.mxu0 0
    %281 = vmatprep.subr.bf16.mxu0 0
    %282 = vmatpush1.bf16.msra.mxu0 0
    %283 = vmatprep.subr.bf16.mxu0 0
    %284 = vmatpush1.bf16.msra.mxu0 0
    %285 = vmatprep.subr.bf16.mxu0 0
    %286 = vmatpush1.bf16.msra.mxu0 0
    %287 = vmatprep.subr.bf16.mxu0 0
    %288 = vmatpush1.bf16.msra.mxu0 0
    %289 = vmatprep.subr.bf16.mxu0 0
    %290 = vmatpush1.bf16.msra.mxu0 0
    %291 = vmatprep.subr.bf16.mxu0 0
    %292 = vmatpush1.bf16.msra.mxu0 0
    %293 = vmatprep.subr.bf16.mxu0 0
    %294 = vmatpush1.bf16.msra.mxu0 0
    %295 = vmatprep.subr.bf16.mxu0 0
    %296 = vmatpush1.bf16.msra.mxu0 0
    %297 = vmatprep.subr.bf16.mxu0 0
    %298 = vmatpush1.bf16.msra.mxu0 0
    %299 = vmatprep.mubr.bf16.mxu0 0
    %300 = vmatmul.mubr.bf16.gmra.mrb[0].mxu0 %v261
    %v301 = vpop.f32.mrb[0].mxu0
    %v302 = vadd.f32 0.0, %v301
    %v303 = vpop.f32.mrb[0].mxu0
    %v304 = vpop.f32.mrb[0].mxu0
    %v305 = vpop.f32.mrb[0].mxu0
    %306 = vdwg.mxu0
    %v307 = vmax.f32 %v302, 0.0
    %v308 = vpack.c.bf16 %v307, %v307
    %v309 = vpack.c.bf16 %v148, %v148
    %v310 = vpack.c.bf16 %v153, %v153
    %v311 = vpack.c.bf16 %v158, %v158
    %v312 = vpack.c.bf16 %v163, %v163
    %v313 = vpack.c.bf16 %v168, %v168
    %v314 = vpack.c.bf16 %v173, %v173
    %v315 = vpack.c.bf16 %v178, %v178
    %v316 = vpack.c.bf16 %v183, %v183
    %v325 = vunpack.c.l.b16 %v309
    %v326 = vunpack.c.l.b16 %v310
    %v327 = vunpack.c.l.b16 %v311
    %v328 = vunpack.c.l.b16 %v312
    %v329 = vunpack.c.l.b16 %v313
    %v330 = vunpack.c.l.b16 %v314
    %v331 = vunpack.c.l.b16 %v315
    %v332 = vunpack.c.l.b16 %v316
    %v333 = vlaneseq
    %v334 = vshrl.u32 %v333, 7
    %v335 = vsub.s32 %v211, %v334
    %v336 = vrot.slane %v325, %v335
    %v337 = vlaneseq
    %v338 = vshrl.u32 %v337, 7
    %v339 = vsub.s32 %v211, %v338
    %v340 = vrot.slane %v326, %v339
    %v341 = vlaneseq
    %v342 = vshrl.u32 %v341, 7
    %v343 = vsub.s32 %v211, %v342
    %v344 = vrot.slane %v327, %v343
    %v345 = vlaneseq
    %v346 = vshrl.u32 %v345, 7
    %v347 = vsub.s32 %v211, %v346
    %v348 = vrot.slane %v328, %v347
    %v349 = vlaneseq
    %v350 = vshrl.u32 %v349, 7
    %v351 = vsub.s32 %v211, %v350
    %v352 = vrot.slane %v329, %v351
    %v353 = vlaneseq
    %v354 = vshrl.u32 %v353, 7
    %v355 = vsub.s32 %v211, %v354
    %v356 = vrot.slane %v330, %v355
    %v357 = vlaneseq
    %v358 = vshrl.u32 %v357, 7
    %v359 = vsub.s32 %v211, %v358
    %v360 = vrot.slane %v331, %v359
    %v361 = vlaneseq
    %v362 = vshrl.u32 %v361, 7
    %v363 = vsub.s32 %v211, %v362
    %v364 = vrot.slane %v332, %v363
    %v365 = vsel %vm244, %v340, %v336
    %v366 = vsel %vm246, %v344, %v365
    %v367 = vsel %vm248, %v348, %v366
    %v368 = vsel %vm250, %v352, %v367
    %v369 = vsel %vm252, %v356, %v368
    %v370 = vsel %vm254, %v360, %v369
    %v371 = vsel %vm256, %v364, %v370
    %v372 = vpack.c.b16 %v371, %v371
    %v374 = vsel %vm259, %v372, 0
    %376 = vmatprep.subr.bf16.mxu0 0
    %377 = vmatpush1.bf16.msra.mxu0 %v265
    %378 = vmatprep.subr.bf16.mxu0 0
    %379 = vmatpush1.bf16.msra.mxu0 0
    %380 = vmatprep.subr.bf16.mxu0 0
    %381 = vmatpush1.bf16.msra.mxu0 0
    %382 = vmatprep.subr.bf16.mxu0 0
    %383 = vmatpush1.bf16.msra.mxu0 0
    %384 = vmatprep.subr.bf16.mxu0 0
    %385 = vmatpush1.bf16.msra.mxu0 0
    %386 = vmatprep.subr.bf16.mxu0 0
    %387 = vmatpush1.bf16.msra.mxu0 0
    %388 = vmatprep.subr.bf16.mxu0 0
    %389 = vmatpush1.bf16.msra.mxu0 0
    %390 = vmatprep.subr.bf16.mxu0 0
    %391 = vmatpush1.bf16.msra.mxu0 0
    %392 = vmatprep.subr.bf16.mxu0 0
    %393 = vmatpush1.bf16.msra.mxu0 0
    %394 = vmatprep.subr.bf16.mxu0 0
    %395 = vmatpush1.bf16.msra.mxu0 0
    %396 = vmatprep.subr.bf16.mxu0 0
    %397 = vmatpush1.bf16.msra.mxu0 0
    %398 = vmatprep.subr.bf16.mxu0 0
    %399 = vmatpush1.bf16.msra.mxu0 0
    %400 = vmatprep.subr.bf16.mxu0 0
    %401 = vmatpush1.bf16.msra.mxu0 0
    %402 = vmatprep.subr.bf16.mxu0 0
    %403 = vmatpush1.bf16.msra.mxu0 0
    %404 = vmatprep.subr.bf16.mxu0 0
    %405 = vmatpush1.bf16.msra.mxu0 0
    %406 = vmatprep.subr.bf16.mxu0 0
    %407 = vmatpush1.bf16.msra.mxu0 0
    %408 = vmatprep.mubr.bf16.mxu0 0
    %409 = vmatmul.mubr.bf16.gmra.mrb[0].mxu0 %v374
    %v410 = vpop.f32.mrb[0].mxu0
    %v411 = vadd.f32 0.0, %v410
    %v412 = vpop.f32.mrb[0].mxu0
    %v413 = vpop.f32.mrb[0].mxu0
    %v414 = vpop.f32.mrb[0].mxu0
    %415 = vdwg.mxu0
    %v416 = vmax.f32 %v411, 0.0
    %v417 = vpack.c.bf16 %v416, %v416
    %vm418 = vcmask 7168
    %v420 = vsel %vm418, %v417, 0
    %vm422 = vcmask 1040384
    %v423 = vsel 0, 4294967295, 65535
    %v424 = vsel %vm422, %v423, 0
    %v426 = vand.u32 %v185, %v424
    %428 = vmatprep.subr.bf16.mxu0 0
    %429 = vmatpush1.bf16.msra.mxu0 %v426
    %430 = vmatprep.subr.bf16.mxu0 0
    %431 = vmatpush1.bf16.msra.mxu0 0
    %432 = vmatprep.subr.bf16.mxu0 0
    %433 = vmatpush1.bf16.msra.mxu0 0
    %434 = vmatprep.subr.bf16.mxu0 0
    %435 = vmatpush1.bf16.msra.mxu0 0
    %436 = vmatprep.subr.bf16.mxu0 0
    %437 = vmatpush1.bf16.msra.mxu0 0
    %438 = vmatprep.subr.bf16.mxu0 0
    %439 = vmatpush1.bf16.msra.mxu0 0
    %440 = vmatprep.subr.bf16.mxu0 0
    %441 = vmatpush1.bf16.msra.mxu0 0
    %442 = vmatprep.subr.bf16.mxu0 0
    %443 = vmatpush1.bf16.msra.mxu0 0
    %444 = vmatprep.subr.bf16.mxu0 0
    %445 = vmatpush1.bf16.msra.mxu0 0
    %446 = vmatprep.subr.bf16.mxu0 0
    %447 = vmatpush1.bf16.msra.mxu0 0
    %448 = vmatprep.subr.bf16.mxu0 0
    %449 = vmatpush1.bf16.msra.mxu0 0
    %450 = vmatprep.subr.bf16.mxu0 0
    %451 = vmatpush1.bf16.msra.mxu0 0
    %452 = vmatprep.subr.bf16.mxu0 0
    %453 = vmatpush1.bf16.msra.mxu0 0
    %454 = vmatprep.subr.bf16.mxu0 0
    %455 = vmatpush1.bf16.msra.mxu0 0
    %456 = vmatprep.subr.bf16.mxu0 0
    %457 = vmatpush1.bf16.msra.mxu0 0
    %458 = vmatprep.subr.bf16.mxu0 0
    %459 = vmatpush1.bf16.msra.mxu0 0
    %460 = vmatprep.mubr.bf16.mxu0 0
    %461 = vmatmul.mubr.bf16.gmra.mrb[0].mxu0 %v420
    %v462 = vpop.f32.mrb[0].mxu0
    %v463 = vadd.f32 0.0, %v462
    %v464 = vpop.f32.mrb[0].mxu0
    %v465 = vpop.f32.mrb[0].mxu0
    %v466 = vpop.f32.mrb[0].mxu0
    %467 = vdwg.mxu0
    %v469 = vsel %vm418, %v308, 0
    %471 = vmatprep.subr.bf16.mxu0 0
    %472 = vmatpush1.bf16.msra.mxu0 %v426
    %473 = vmatprep.subr.bf16.mxu0 0
    %474 = vmatpush1.bf16.msra.mxu0 0
    %475 = vmatprep.subr.bf16.mxu0 0
    %476 = vmatpush1.bf16.msra.mxu0 0
    %477 = vmatprep.subr.bf16.mxu0 0
    %478 = vmatpush1.bf16.msra.mxu0 0
    %479 = vmatprep.subr.bf16.mxu0 0
    %480 = vmatpush1.bf16.msra.mxu0 0
    %481 = vmatprep.subr.bf16.mxu0 0
    %482 = vmatpush1.bf16.msra.mxu0 0
    %483 = vmatprep.subr.bf16.mxu0 0
    %484 = vmatpush1.bf16.msra.mxu0 0
    %485 = vmatprep.subr.bf16.mxu0 0
    %486 = vmatpush1.bf16.msra.mxu0 0
    %487 = vmatprep.subr.bf16.mxu0 0
    %488 = vmatpush1.bf16.msra.mxu0 0
    %489 = vmatprep.subr.bf16.mxu0 0
    %490 = vmatpush1.bf16.msra.mxu0 0
    %491 = vmatprep.subr.bf16.mxu0 0
    %492 = vmatpush1.bf16.msra.mxu0 0
    %493 = vmatprep.subr.bf16.mxu0 0
    %494 = vmatpush1.bf16.msra.mxu0 0
    %495 = vmatprep.subr.bf16.mxu0 0
    %496 = vmatpush1.bf16.msra.mxu0 0
    %497 = vmatprep.subr.bf16.mxu0 0
    %498 = vmatpush1.bf16.msra.mxu0 0
    %499 = vmatprep.subr.bf16.mxu0 0
    %500 = vmatpush1.bf16.msra.mxu0 0
    %501 = vmatprep.subr.bf16.mxu0 0
    %502 = vmatpush1.bf16.msra.mxu0 0
    %503 = vmatprep.mubr.bf16.mxu0 0
    %504 = vmatmul.mubr.bf16.gmra.mrb[0].mxu0 %v469
    %v505 = vpop.f32.mrb[0].mxu0
    %v506 = vadd.f32 %v463, %v505
    %v507 = vpop.f32.mrb[0].mxu0
    %v508 = vpop.f32.mrb[0].mxu0
    %v509 = vpop.f32.mrb[0].mxu0
    %510 = vdwg.mxu0
    %v511 = vxor.u32 %v506, 2147483648
    %v512 = vmul.f32 %v511, 1.442695
    %v513 = vpow.pop %v512
    %v514 = vadd.f32 %v513, 1.0
    %v515 = vrcp.pop %v514
    %v516 = vmul.f32 1.0, %v515
    %518 = vset.pattern.permute.xlu0 0
    %519 = vperm.xlu0 %518, %v516
    %v520 = vpop.permute.xlu0 %519
    %v522 = vunpack.c.l.s4 839922192
    %v523 = vunpack.c.0.s8 %v522
    %v524 = vlaneseq
    %v525 = vshrl.u32 %v524, 7
    %v526 = vsub.s32 %v523, %v525
    %v527 = vrot.slane %v520, %v526
    %v529 = vunpack.c.l.s4 1985246804
    %v530 = vunpack.c.0.s8 %v529
    %v531 = vlaneseq
    %v532 = vshrl.u32 %v531, 7
    %v533 = vsub.s32 %v530, %v532
    %v534 = vrot.slane %v520, %v533
    %v535 = vrot.slane %v527, 1
    %v536 = vrot.slane %v527, 2
    %v537 = vrot.slane %v527, 3
    %v538 = vrot.slane %v534, 1
    %v539 = vrot.slane %v534, 2
    %v540 = vrot.slane %v534, 3
    %v549 = vmul.f32 %v63, %v527
    %v550 = vmul.f32 %v64, %v535
    %v551 = vmul.f32 %v65, %v536
    %v552 = vmul.f32 %v66, %v537
    %v553 = vmul.f32 %v67, %v534
    %v554 = vmul.f32 %v68, %v538
    %v555 = vmul.f32 %v69, %v539
    %v556 = vmul.f32 %v70, %v540
    %557 = vset.pattern.permute.xlu0 1
    %558 = vperm.xlu0 %557, %v516
    %v559 = vpop.permute.xlu0 %558
    %v561 = vunpack.c.l.s4 839922192
    %v562 = vunpack.c.0.s8 %v561
    %v563 = vlaneseq
    %v564 = vshrl.u32 %v563, 7
    %v565 = vsub.s32 %v562, %v564
    %v566 = vrot.slane %v559, %v565
    %v568 = vunpack.c.l.s4 1985246804
    %v569 = vunpack.c.0.s8 %v568
    %v570 = vlaneseq
    %v571 = vshrl.u32 %v570, 7
    %v572 = vsub.s32 %v569, %v571
    %v573 = vrot.slane %v559, %v572
    %v574 = vrot.slane %v566, 7
    %v575 = vrot.slane %v566, 1
    %v576 = vrot.slane %v566, 2
    %v577 = vrot.slane %v573, 7
    %v578 = vrot.slane %v573, 1
    %v579 = vrot.slane %v573, 2
    %v588 = vmul.f32 %v63, %v574
    %v589 = vmul.f32 %v64, %v566
    %v590 = vmul.f32 %v65, %v575
    %v591 = vmul.f32 %v66, %v576
    %v592 = vmul.f32 %v67, %v577
    %v593 = vmul.f32 %v68, %v573
    %v594 = vmul.f32 %v69, %v578
    %v595 = vmul.f32 %v70, %v579
    %v604 = vrot.slane %v588, 5
    %v605 = vrot.slane %v604, 4
    %v606 = vrot.slane %v589, 5
    %v607 = vrot.slane %v606, 4
    %v608 = vrot.slane %v590, 5
    %v609 = vrot.slane %v608, 4
    %v610 = vrot.slane %v591, 5
    %v611 = vrot.slane %v610, 4
    %v612 = vrot.slane %v592, 5
    %v613 = vrot.slane %v612, 4
    %v614 = vrot.slane %v593, 5
    %v615 = vrot.slane %v614, 4
    %v616 = vrot.slane %v594, 5
    %v617 = vrot.slane %v616, 4
    %v618 = vrot.slane %v595, 5
    %v619 = vrot.slane %v618, 4
    %v628 = vadd.f32 %v549, %v605
    %v629 = vadd.f32 %v550, %v607
    %v630 = vadd.f32 %v551, %v609
    %v631 = vadd.f32 %v552, %v611
    %v632 = vadd.f32 %v553, %v613
    %v633 = vadd.f32 %v554, %v615
    %v634 = vadd.f32 %v555, %v617
    %v635 = vadd.f32 %v556, %v619
    %v636 = vmax.f32 %v549, %v605
    %v637 = vmax.f32 %v550, %v607
    %v638 = vmax.f32 %v551, %v609
    %v639 = vmax.f32 %v552, %v611
    %v640 = vmax.f32 %v553, %v613
    %v641 = vmax.f32 %v554, %v615
    %v642 = vmax.f32 %v555, %v617
    %v643 = vmax.f32 %v556, %v619
    %644 = vset.pattern.permute.xlu0 2
    %645 = vperm.xlu0 %644, %v516
    %v646 = vpop.permute.xlu0 %645
    %v648 = vunpack.c.l.s4 839922192
    %v649 = vunpack.c.0.s8 %v648
    %v650 = vlaneseq
    %v651 = vshrl.u32 %v650, 7
    %v652 = vsub.s32 %v649, %v651
    %v653 = vrot.slane %v646, %v652
    %v655 = vunpack.c.l.s4 1985246804
    %v656 = vunpack.c.0.s8 %v655
    %v657 = vlaneseq
    %v658 = vshrl.u32 %v657, 7
    %v659 = vsub.s32 %v656, %v658
    %v660 = vrot.slane %v646, %v659
    %v661 = vrot.slane %v653, 6
    %v662 = vrot.slane %v653, 7
    %v663 = vrot.slane %v653, 1
    %v664 = vrot.slane %v660, 6
    %v665 = vrot.slane %v660, 7
    %v666 = vrot.slane %v660, 1
    %v675 = vmul.f32 %v63, %v661
    %v676 = vmul.f32 %v64, %v662
    %v677 = vmul.f32 %v65, %v653
    %v678 = vmul.f32 %v66, %v663
    %v679 = vmul.f32 %v67, %v664
    %v680 = vmul.f32 %v68, %v665
    %v681 = vmul.f32 %v69, %v660
    %v682 = vmul.f32 %v70, %v666
    %v691 = vrot.slane %v675, 6
    %v692 = vrot.slane %v691, 4
    %v693 = vrot.slane %v676, 6
    %v694 = vrot.slane %v693, 4
    %v695 = vrot.slane %v677, 6
    %v696 = vrot.slane %v695, 4
    %v697 = vrot.slane %v678, 6
    %v698 = vrot.slane %v697, 4
    %v699 = vrot.slane %v679, 6
    %v700 = vrot.slane %v699, 4
    %v701 = vrot.slane %v680, 6
    %v702 = vrot.slane %v701, 4
    %v703 = vrot.slane %v681, 6
    %v704 = vrot.slane %v703, 4
    %v705 = vrot.slane %v682, 6
    %v706 = vrot.slane %v705, 4
    %v715 = vadd.f32 %v628, %v692
    %v716 = vadd.f32 %v629, %v694
    %v717 = vadd.f32 %v630, %v696
    %v718 = vadd.f32 %v631, %v698
    %v719 = vadd.f32 %v632, %v700
    %v720 = vadd.f32 %v633, %v702
    %v721 = vadd.f32 %v634, %v704
    %v722 = vadd.f32 %v635, %v706
    %v723 = vmax.f32 %v636, %v692
    %v724 = vmax.f32 %v637, %v694
    %v725 = vmax.f32 %v638, %v696
    %v726 = vmax.f32 %v639, %v698
    %v727 = vmax.f32 %v640, %v700
    %v728 = vmax.f32 %v641, %v702
    %v729 = vmax.f32 %v642, %v704
    %v730 = vmax.f32 %v643, %v706
    %731 = vset.pattern.permute.xlu0 3
    %732 = vperm.xlu0 %731, %v516
    %v733 = vpop.permute.xlu0 %732
    %v735 = vunpack.c.l.s4 839922192
    %v736 = vunpack.c.0.s8 %v735
    %v737 = vlaneseq
    %v738 = vshrl.u32 %v737, 7
    %v739 = vsub.s32 %v736, %v738
    %v740 = vrot.slane %v733, %v739
    %v742 = vunpack.c.l.s4 1985246804
    %v743 = vunpack.c.0.s8 %v742
    %v744 = vlaneseq
    %v745 = vshrl.u32 %v744, 7
    %v746 = vsub.s32 %v743, %v745
    %v747 = vrot.slane %v733, %v746
    %v748 = vrot.slane %v740, 5
    %v749 = vrot.slane %v740, 6
    %v750 = vrot.slane %v740, 7
    %v751 = vrot.slane %v747, 5
    %v752 = vrot.slane %v747, 6
    %v753 = vrot.slane %v747, 7
    %v762 = vmul.f32 %v63, %v748
    %v763 = vmul.f32 %v64, %v749
    %v764 = vmul.f32 %v65, %v750
    %v765 = vmul.f32 %v66, %v740
    %v766 = vmul.f32 %v67, %v751
    %v767 = vmul.f32 %v68, %v752
    %v768 = vmul.f32 %v69, %v753
    %v769 = vmul.f32 %v70, %v747
    %v778 = vrot.slane %v762, 7
    %v779 = vrot.slane %v778, 4
    %v780 = vrot.slane %v763, 7
    %v781 = vrot.slane %v780, 4
    %v782 = vrot.slane %v764, 7
    %v783 = vrot.slane %v782, 4
    %v784 = vrot.slane %v765, 7
    %v785 = vrot.slane %v784, 4
    %v786 = vrot.slane %v766, 7
    %v787 = vrot.slane %v786, 4
    %v788 = vrot.slane %v767, 7
    %v789 = vrot.slane %v788, 4
    %v790 = vrot.slane %v768, 7
    %v791 = vrot.slane %v790, 4
    %v792 = vrot.slane %v769, 7
    %v793 = vrot.slane %v792, 4
    %v802 = vadd.f32 %v715, %v779
    %v803 = vadd.f32 %v716, %v781
    %v804 = vadd.f32 %v717, %v783
    %v805 = vadd.f32 %v718, %v785
    %v806 = vadd.f32 %v719, %v787
    %v807 = vadd.f32 %v720, %v789
    %v808 = vadd.f32 %v721, %v791
    %v809 = vadd.f32 %v722, %v793
    %v810 = vmax.f32 %v723, %v779
    %v811 = vmax.f32 %v724, %v781
    %v812 = vmax.f32 %v725, %v783
    %v813 = vmax.f32 %v726, %v785
    %v814 = vmax.f32 %v727, %v787
    %v815 = vmax.f32 %v728, %v789
    %v816 = vmax.f32 %v729, %v791
    %v817 = vmax.f32 %v730, %v793
    %v818 = vmul.f32 %v802, 0.25
    %v819 = vmul.f32 %v803, 0.25
    %v820 = vmul.f32 %v804, 0.25
    %v821 = vmul.f32 %v805, 0.25
    %v822 = vmul.f32 %v806, 0.25
    %v823 = vmul.f32 %v807, 0.25
    %v824 = vmul.f32 %v808, 0.25
    %v825 = vmul.f32 %v809, 0.25
    %v834 = vlaneseq
    %v835 = vshrl.u32 %v834, 7
    %v836 = vsub.s32 0, %v835
    %v837 = vrot.slane %v818, %v836
    %v838 = vlaneseq
    %v839 = vshrl.u32 %v838, 7
    %v840 = vsub.s32 4, %v839
    %v841 = vrot.slane %v818, %v840
    %v842 = vlaneseq
    %v843 = vshrl.u32 %v842, 7
    %v844 = vsub.s32 0, %v843
    %v845 = vrot.slane %v819, %v844
    %v846 = vlaneseq
    %v847 = vshrl.u32 %v846, 7
    %v848 = vsub.s32 4, %v847
    %v849 = vrot.slane %v819, %v848
    %v850 = vlaneseq
    %v851 = vshrl.u32 %v850, 7
    %v852 = vsub.s32 0, %v851
    %v853 = vrot.slane %v820, %v852
    %v854 = vlaneseq
    %v855 = vshrl.u32 %v854, 7
    %v856 = vsub.s32 4, %v855
    %v857 = vrot.slane %v820, %v856
    %v858 = vlaneseq
    %v859 = vshrl.u32 %v858, 7
    %v860 = vsub.s32 0, %v859
    %v861 = vrot.slane %v821, %v860
    %v862 = vlaneseq
    %v863 = vshrl.u32 %v862, 7
    %v864 = vsub.s32 4, %v863
    %v865 = vrot.slane %v821, %v864
    %v866 = vlaneseq
    %v867 = vshrl.u32 %v866, 7
    %v868 = vsub.s32 0, %v867
    %v869 = vrot.slane %v822, %v868
    %v870 = vlaneseq
    %v871 = vshrl.u32 %v870, 7
    %v872 = vsub.s32 4, %v871
    %v873 = vrot.slane %v822, %v872
    %v874 = vlaneseq
    %v875 = vshrl.u32 %v874, 7
    %v876 = vsub.s32 0, %v875
    %v877 = vrot.slane %v823, %v876
    %v878 = vlaneseq
    %v879 = vshrl.u32 %v878, 7
    %v880 = vsub.s32 4, %v879
    %v881 = vrot.slane %v823, %v880
    %v882 = vlaneseq
    %v883 = vshrl.u32 %v882, 7
    %v884 = vsub.s32 0, %v883
    %v885 = vrot.slane %v824, %v884
    %v886 = vlaneseq
    %v887 = vshrl.u32 %v886, 7
    %v888 = vsub.s32 4, %v887
    %v889 = vrot.slane %v824, %v888
    %v890 = vlaneseq
    %v891 = vshrl.u32 %v890, 7
    %v892 = vsub.s32 0, %v891
    %v893 = vrot.slane %v825, %v892
    %v894 = vlaneseq
    %v895 = vshrl.u32 %v894, 7
    %v896 = vsub.s32 4, %v895
    %v897 = vrot.slane %v825, %v896
    %v914 = vpack.c.bf16 %v837, %v837
    %v915 = vpack.c.bf16 %v841, %v841
    %v916 = vpack.c.bf16 %v845, %v845
    %v917 = vpack.c.bf16 %v849, %v849
    %v918 = vpack.c.bf16 %v853, %v853
    %v919 = vpack.c.bf16 %v857, %v857
    %v920 = vpack.c.bf16 %v861, %v861
    %v921 = vpack.c.bf16 %v865, %v865
    %v922 = vpack.c.bf16 %v869, %v869
    %v923 = vpack.c.bf16 %v873, %v873
    %v924 = vpack.c.bf16 %v877, %v877
    %v925 = vpack.c.bf16 %v881, %v881
    %v926 = vpack.c.bf16 %v885, %v885
    %v927 = vpack.c.bf16 %v889, %v889
    %v928 = vpack.c.bf16 %v893, %v893
    %v929 = vpack.c.bf16 %v897, %v897
    %v930 = vld [vmem:[#allocation5] sm:$0xff]
    %v931 = vld [vmem:[#allocation5 + $0x8] sm:$0xff]
    %v932 = vld [vmem:[#allocation5 + $0x10] sm:$0xff]
    %v933 = vld [vmem:[#allocation5 + $0x18] sm:$0xff]
    %v934 = vld [vmem:[#allocation5 + $0x20] sm:$0xff]
    %v935 = vld [vmem:[#allocation5 + $0x28] sm:$0xff]
    %v936 = vld [vmem:[#allocation5 + $0x30] sm:$0xff]
    %v937 = vld [vmem:[#allocation5 + $0x38] sm:$0xff]
    %v938 = vld [vmem:[#allocation5 + $0x40] sm:$0xff]
    %v939 = vld [vmem:[#allocation5 + $0x48] sm:$0xff]
    %v940 = vld [vmem:[#allocation5 + $0x50] sm:$0xff]
    %v941 = vld [vmem:[#allocation5 + $0x58] sm:$0xff]
    %v942 = vld [vmem:[#allocation5 + $0x60] sm:$0xff]
    %v943 = vld [vmem:[#allocation5 + $0x68] sm:$0xff]
    %v944 = vld [vmem:[#allocation5 + $0x70] sm:$0xff]
    %v945 = vld [vmem:[#allocation5 + $0x78] sm:$0xff]
    %v946 = vld [vmem:[#allocation5 + $0x80] sm:$0xff]
    %v947 = vld [vmem:[#allocation5 + $0x88] sm:$0xff]
    %v948 = vld [vmem:[#allocation5 + $0x90] sm:$0xff]
    %v949 = vld [vmem:[#allocation5 + $0x98] sm:$0xff]
    %v950 = vld [vmem:[#allocation5 + $0xa0] sm:$0xff]
    %v951 = vld [vmem:[#allocation5 + $0xa8] sm:$0xff]
    %v952 = vld [vmem:[#allocation5 + $0xb0] sm:$0xff]
    %v953 = vld [vmem:[#allocation5 + $0xb8] sm:$0xff]
    %v954 = vld [vmem:[#allocation5 + $0xc0] sm:$0xff]
    %v955 = vld [vmem:[#allocation5 + $0xc8] sm:$0xff]
    %v956 = vld [vmem:[#allocation5 + $0xd0] sm:$0xff]
    %v957 = vld [vmem:[#allocation5 + $0xd8] sm:$0xff]
    %v958 = vld [vmem:[#allocation5 + $0xe0] sm:$0xff]
    %v959 = vld [vmem:[#allocation5 + $0xe8] sm:$0xff]
    %v960 = vld [vmem:[#allocation5 + $0xf0] sm:$0xff]
    %v961 = vld [vmem:[#allocation5 + $0xf8] sm:$0xff]
    %v970 = vlaneseq
    %v971 = vshrl.u32 %v970, 7
    %v972 = vsub.s32 0, %v971
    %v973 = vrot.slane %v810, %v972
    %v974 = vlaneseq
    %v975 = vshrl.u32 %v974, 7
    %v976 = vsub.s32 4, %v975
    %v977 = vrot.slane %v810, %v976
    %v978 = vlaneseq
    %v979 = vshrl.u32 %v978, 7
    %v980 = vsub.s32 0, %v979
    %v981 = vrot.slane %v811, %v980
    %v982 = vlaneseq
    %v983 = vshrl.u32 %v982, 7
    %v984 = vsub.s32 4, %v983
    %v985 = vrot.slane %v811, %v984
    %v986 = vlaneseq
    %v987 = vshrl.u32 %v986, 7
    %v988 = vsub.s32 0, %v987
    %v989 = vrot.slane %v812, %v988
    %v990 = vlaneseq
    %v991 = vshrl.u32 %v990, 7
    %v992 = vsub.s32 4, %v991
    %v993 = vrot.slane %v812, %v992
    %v994 = vlaneseq
    %v995 = vshrl.u32 %v994, 7
    %v996 = vsub.s32 0, %v995
    %v997 = vrot.slane %v813, %v996
    %v998 = vlaneseq
    %v999 = vshrl.u32 %v998, 7
    %v1000 = vsub.s32 4, %v999
    %v1001 = vrot.slane %v813, %v1000
    %v1002 = vlaneseq
    %v1003 = vshrl.u32 %v1002, 7
    %v1004 = vsub.s32 0, %v1003
    %v1005 = vrot.slane %v814, %v1004
    %v1006 = vlaneseq
    %v1007 = vshrl.u32 %v1006, 7
    %v1008 = vsub.s32 4, %v1007
    %v1009 = vrot.slane %v814, %v1008
    %v1010 = vlaneseq
    %v1011 = vshrl.u32 %v1010, 7
    %v1012 = vsub.s32 0, %v1011
    %v1013 = vrot.slane %v815, %v1012
    %v1014 = vlaneseq
    %v1015 = vshrl.u32 %v1014, 7
    %v1016 = vsub.s32 4, %v1015
    %v1017 = vrot.slane %v815, %v1016
    %v1018 = vlaneseq
    %v1019 = vshrl.u32 %v1018, 7
    %v1020 = vsub.s32 0, %v1019
    %v1021 = vrot.slane %v816, %v1020
    %v1022 = vlaneseq
    %v1023 = vshrl.u32 %v1022, 7
    %v1024 = vsub.s32 4, %v1023
    %v1025 = vrot.slane %v816, %v1024
    %v1026 = vlaneseq
    %v1027 = vshrl.u32 %v1026, 7
    %v1028 = vsub.s32 0, %v1027
    %v1029 = vrot.slane %v817, %v1028
    %v1030 = vlaneseq
    %v1031 = vshrl.u32 %v1030, 7
    %v1032 = vsub.s32 4, %v1031
    %v1033 = vrot.slane %v817, %v1032
    %v1050 = vpack.c.bf16 %v973, %v973
    %v1051 = vpack.c.bf16 %v977, %v977
    %v1052 = vpack.c.bf16 %v981, %v981
    %v1053 = vpack.c.bf16 %v985, %v985
    %v1054 = vpack.c.bf16 %v989, %v989
    %v1055 = vpack.c.bf16 %v993, %v993
    %v1056 = vpack.c.bf16 %v997, %v997
    %v1057 = vpack.c.bf16 %v1001, %v1001
    %v1058 = vpack.c.bf16 %v1005, %v1005
    %v1059 = vpack.c.bf16 %v1009, %v1009
    %v1060 = vpack.c.bf16 %v1013, %v1013
    %v1061 = vpack.c.bf16 %v1017, %v1017
    %v1062 = vpack.c.bf16 %v1021, %v1021
    %v1063 = vpack.c.bf16 %v1025, %v1025
    %v1064 = vpack.c.bf16 %v1029, %v1029
    %v1065 = vpack.c.bf16 %v1033, %v1033
    %v1066 = vld [vmem:[#allocation7] sm:$0xff]
    %v1067 = vld [vmem:[#allocation7 + $0x8] sm:$0xff]
    %v1068 = vld [vmem:[#allocation7 + $0x10] sm:$0xff]
    %v1069 = vld [vmem:[#allocation7 + $0x18] sm:$0xff]
    %v1070 = vld [vmem:[#allocation7 + $0x20] sm:$0xff]
    %v1071 = vld [vmem:[#allocation7 + $0x28] sm:$0xff]
    %v1072 = vld [vmem:[#allocation7 + $0x30] sm:$0xff]
    %v1073 = vld [vmem:[#allocation7 + $0x38] sm:$0xff]
    %v1074 = vld [vmem:[#allocation7 + $0x40] sm:$0xff]
    %v1075 = vld [vmem:[#allocation7 + $0x48] sm:$0xff]
    %v1076 = vld [vmem:[#allocation7 + $0x50] sm:$0xff]
    %v1077 = vld [vmem:[#allocation7 + $0x58] sm:$0xff]
    %v1078 = vld [vmem:[#allocation7 + $0x60] sm:$0xff]
    %v1079 = vld [vmem:[#allocation7 + $0x68] sm:$0xff]
    %v1080 = vld [vmem:[#allocation7 + $0x70] sm:$0xff]
    %v1081 = vld [vmem:[#allocation7 + $0x78] sm:$0xff]
    %v1082 = vld [vmem:[#allocation7 + $0x80] sm:$0xff]
    %v1083 = vld [vmem:[#allocation7 + $0x88] sm:$0xff]
    %v1084 = vld [vmem:[#allocation7 + $0x90] sm:$0xff]
    %v1085 = vld [vmem:[#allocation7 + $0x98] sm:$0xff]
    %v1086 = vld [vmem:[#allocation7 + $0xa0] sm:$0xff]
    %v1087 = vld [vmem:[#allocation7 + $0xa8] sm:$0xff]
    %v1088 = vld [vmem:[#allocation7 + $0xb0] sm:$0xff]
    %v1089 = vld [vmem:[#allocation7 + $0xb8] sm:$0xff]
    %v1090 = vld [vmem:[#allocation7 + $0xc0] sm:$0xff]
    %v1091 = vld [vmem:[#allocation7 + $0xc8] sm:$0xff]
    %v1092 = vld [vmem:[#allocation7 + $0xd0] sm:$0xff]
    %v1093 = vld [vmem:[#allocation7 + $0xd8] sm:$0xff]
    %v1094 = vld [vmem:[#allocation7 + $0xe0] sm:$0xff]
    %v1095 = vld [vmem:[#allocation7 + $0xe8] sm:$0xff]
    %v1096 = vld [vmem:[#allocation7 + $0xf0] sm:$0xff]
    %v1097 = vld [vmem:[#allocation7 + $0xf8] sm:$0xff]
    %v1114 = vunpack.c.l.b16 %v1050
    %v1115 = vunpack.c.l.b16 %v1051
    %v1116 = vunpack.c.l.b16 %v1052
    %v1117 = vunpack.c.l.b16 %v1053
    %v1118 = vunpack.c.l.b16 %v1054
    %v1119 = vunpack.c.l.b16 %v1055
    %v1120 = vunpack.c.l.b16 %v1056
    %v1121 = vunpack.c.l.b16 %v1057
    %v1122 = vunpack.c.l.b16 %v1058
    %v1123 = vunpack.c.l.b16 %v1059
    %v1124 = vunpack.c.l.b16 %v1060
    %v1125 = vunpack.c.l.b16 %v1061
    %v1126 = vunpack.c.l.b16 %v1062
    %v1127 = vunpack.c.l.b16 %v1063
    %v1128 = vunpack.c.l.b16 %v1064
    %v1129 = vunpack.c.l.b16 %v1065
    %v1130 = vrot.slane %v1116, 7
    %v1131 = vsel %vm244, %v1130, %v1114
    %v1132 = vrot.slane %v1118, 6
    %v1133 = vsel %vm246, %v1132, %v1131
    %v1134 = vrot.slane %v1120, 5
    %v1135 = vsel %vm248, %v1134, %v1133
    %v1136 = vrot.slane %v1122, 4
    %v1137 = vsel %vm250, %v1136, %v1135
    %v1138 = vrot.slane %v1124, 3
    %v1139 = vsel %vm252, %v1138, %v1137
    %v1140 = vrot.slane %v1126, 2
    %v1141 = vsel %vm254, %v1140, %v1139
    %v1142 = vrot.slane %v1128, 1
    %v1143 = vsel %vm256, %v1142, %v1141
    %v1144 = vrot.slane %v1117, 7
    %v1145 = vsel %vm244, %v1144, %v1115
    %v1146 = vrot.slane %v1119, 6
    %v1147 = vsel %vm246, %v1146, %v1145
    %v1148 = vrot.slane %v1121, 5
    %v1149 = vsel %vm248, %v1148, %v1147
    %v1150 = vrot.slane %v1123, 4
    %v1151 = vsel %vm250, %v1150, %v1149
    %v1152 = vrot.slane %v1125, 3
    %v1153 = vsel %vm252, %v1152, %v1151
    %v1154 = vrot.slane %v1127, 2
    %v1155 = vsel %vm254, %v1154, %v1153
    %v1156 = vrot.slane %v1129, 1
    %v1157 = vsel %vm256, %v1156, %v1155
    %v1158 = vpack.c.b16 %v1143, %v1143
    %v1159 = vpack.c.b16 %v1157, %v1157
    %v1194 = vunpack.c.l.b16 %v1066
    %v1195 = vunpack.c.h.b16 %v1066
    %v1196 = vunpack.c.l.b16 %v1067
    %v1197 = vunpack.c.h.b16 %v1067
    %v1198 = vunpack.c.l.b16 %v1068
    %v1199 = vunpack.c.h.b16 %v1068
    %v1200 = vunpack.c.l.b16 %v1069
    %v1201 = vunpack.c.h.b16 %v1069
    %v1202 = vunpack.c.l.b16 %v1070
    %v1203 = vunpack.c.h.b16 %v1070
    %v1204 = vunpack.c.l.b16 %v1071
    %v1205 = vunpack.c.h.b16 %v1071
    %v1206 = vunpack.c.l.b16 %v1072
    %v1207 = vunpack.c.h.b16 %v1072
    %v1208 = vunpack.c.l.b16 %v1073
    %v1209 = vunpack.c.h.b16 %v1073
    %v1210 = vunpack.c.l.b16 %v1074
    %v1211 = vunpack.c.h.b16 %v1074
    %v1212 = vunpack.c.l.b16 %v1075
    %v1213 = vunpack.c.h.b16 %v1075
    %v1214 = vunpack.c.l.b16 %v1076
    %v1215 = vunpack.c.h.b16 %v1076
    %v1216 = vunpack.c.l.b16 %v1077
    %v1217 = vunpack.c.h.b16 %v1077
    %v1218 = vunpack.c.l.b16 %v1078
    %v1219 = vunpack.c.h.b16 %v1078
    %v1220 = vunpack.c.l.b16 %v1079
    %v1221 = vunpack.c.h.b16 %v1079
    %v1222 = vunpack.c.l.b16 %v1080
    %v1223 = vunpack.c.h.b16 %v1080
    %v1224 = vunpack.c.l.b16 %v1081
    %v1225 = vunpack.c.h.b16 %v1081
    %v1226 = vunpack.c.l.b16 %v1082
    %v1227 = vunpack.c.h.b16 %v1082
    %v1228 = vunpack.c.l.b16 %v1083
    %v1229 = vunpack.c.h.b16 %v1083
    %v1230 = vunpack.c.l.b16 %v1084
    %v1231 = vunpack.c.h.b16 %v1084
    %v1232 = vunpack.c.l.b16 %v1085
    %v1233 = vunpack.c.h.b16 %v1085
    %v1234 = vunpack.c.l.b16 %v1086
    %v1235 = vunpack.c.h.b16 %v1086
    %v1236 = vunpack.c.l.b16 %v1087
    %v1237 = vunpack.c.h.b16 %v1087
    %v1238 = vunpack.c.l.b16 %v1088
    %v1239 = vunpack.c.h.b16 %v1088
    %v1240 = vunpack.c.l.b16 %v1089
    %v1241 = vunpack.c.h.b16 %v1089
    %v1242 = vunpack.c.l.b16 %v1090
    %v1243 = vunpack.c.h.b16 %v1090
    %v1244 = vunpack.c.l.b16 %v1091
    %v1245 = vunpack.c.h.b16 %v1091
    %v1246 = vunpack.c.l.b16 %v1092
    %v1247 = vunpack.c.h.b16 %v1092
    %v1248 = vunpack.c.l.b16 %v1093
    %v1249 = vunpack.c.h.b16 %v1093
    %v1250 = vunpack.c.l.b16 %v1094
    %v1251 = vunpack.c.h.b16 %v1094
    %v1252 = vunpack.c.l.b16 %v1095
    %v1253 = vunpack.c.h.b16 %v1095
    %v1254 = vunpack.c.l.b16 %v1096
    %v1255 = vunpack.c.h.b16 %v1096
    %v1256 = vunpack.c.l.b16 %v1097
    %v1257 = vunpack.c.h.b16 %v1097
    %v1258 = vpack.c.b16 %v1196, %v1194
    %v1259 = vpack.c.b16 %v1197, %v1195
    %v1260 = vpack.c.b16 %v1200, %v1198
    %v1261 = vpack.c.b16 %v1201, %v1199
    %v1262 = vpack.c.b16 %v1204, %v1202
    %v1263 = vpack.c.b16 %v1205, %v1203
    %v1264 = vpack.c.b16 %v1208, %v1206
    %v1265 = vpack.c.b16 %v1209, %v1207
    %v1266 = vpack.c.b16 %v1212, %v1210
    %v1267 = vpack.c.b16 %v1213, %v1211
    %v1268 = vpack.c.b16 %v1216, %v1214
    %v1269 = vpack.c.b16 %v1217, %v1215
    %v1270 = vpack.c.b16 %v1220, %v1218
    %v1271 = vpack.c.b16 %v1221, %v1219
    %v1272 = vpack.c.b16 %v1224, %v1222
    %v1273 = vpack.c.b16 %v1225, %v1223
    %v1274 = vpack.c.b16 %v1228, %v1226
    %v1275 = vpack.c.b16 %v1229, %v1227
    %v1276 = vpack.c.b16 %v1232, %v1230
    %v1277 = vpack.c.b16 %v1233, %v1231
    %v1278 = vpack.c.b16 %v1236, %v1234
    %v1279 = vpack.c.b16 %v1237, %v1235
    %v1280 = vpack.c.b16 %v1240, %v1238
    %v1281 = vpack.c.b16 %v1241, %v1239
    %v1282 = vpack.c.b16 %v1244, %v1242
    %v1283 = vpack.c.b16 %v1245, %v1243
    %v1284 = vpack.c.b16 %v1248, %v1246
    %v1285 = vpack.c.b16 %v1249, %v1247
    %v1286 = vpack.c.b16 %v1252, %v1250
    %v1287 = vpack.c.b16 %v1253, %v1251
    %v1288 = vpack.c.b16 %v1256, %v1254
    %v1289 = vpack.c.b16 %v1257, %v1255
    %1322 = vmatprep.subr.bf16.mxu0 %v1259
    %1323 = vmatpush1.bf16.msra.mxu0 %v1258
    %1324 = vmatprep.subr.bf16.mxu0 %v1261
    %1325 = vmatpush1.bf16.msra.mxu0 %v1260
    %1326 = vmatprep.subr.bf16.mxu0 %v1263
    %1327 = vmatpush1.bf16.msra.mxu0 %v1262
    %1328 = vmatprep.subr.bf16.mxu0 %v1265
    %1329 = vmatpush1.bf16.msra.mxu0 %v1264
    %1330 = vmatprep.subr.bf16.mxu0 %v1267
    %1331 = vmatpush1.bf16.msra.mxu0 %v1266
    %1332 = vmatprep.subr.bf16.mxu0 %v1269
    %1333 = vmatpush1.bf16.msra.mxu0 %v1268
    %1334 = vmatprep.subr.bf16.mxu0 %v1271
    %1335 = vmatpush1.bf16.msra.mxu0 %v1270
    %1336 = vmatprep.subr.bf16.mxu0 %v1273
    %1337 = vmatpush1.bf16.msra.mxu0 %v1272
    %1338 = vmatprep.subr.bf16.mxu0 %v1275
    %1339 = vmatpush1.bf16.msra.mxu0 %v1274
    %1340 = vmatprep.subr.bf16.mxu0 %v1277
    %1341 = vmatpush1.bf16.msra.mxu0 %v1276
    %1342 = vmatprep.subr.bf16.mxu0 %v1279
    %1343 = vmatpush1.bf16.msra.mxu0 %v1278
    %1344 = vmatprep.subr.bf16.mxu0 %v1281
    %1345 = vmatpush1.bf16.msra.mxu0 %v1280
    %1346 = vmatprep.subr.bf16.mxu0 %v1283
    %1347 = vmatpush1.bf16.msra.mxu0 %v1282
    %1348 = vmatprep.subr.bf16.mxu0 %v1285
    %1349 = vmatpush1.bf16.msra.mxu0 %v1284
    %1350 = vmatprep.subr.bf16.mxu0 %v1287
    %1351 = vmatpush1.bf16.msra.mxu0 %v1286
    %1352 = vmatprep.subr.bf16.mxu0 %v1289
    %1353 = vmatpush1.bf16.msra.mxu0 %v1288
    %1354 = vmatprep.mubr.bf16.mxu0 %v1159
    %1355 = vmatmul.mubr.bf16.gmra.mrb[0].mxu0 %v1158
    %v1356 = vpop.f32.mrb[0].mxu0
    %v1357 = vadd.f32 0.0, %v1356
    %v1358 = vpop.f32.mrb[0].mxu0
    %v1359 = vadd.f32 0.0, %v1358
    %v1360 = vpop.f32.mrb[0].mxu0
    %v1361 = vpop.f32.mrb[0].mxu0
    %1362 = vdwg.mxu0
    %v1379 = vunpack.c.l.b16 %v914
    %v1380 = vunpack.c.l.b16 %v915
    %v1381 = vunpack.c.l.b16 %v916
    %v1382 = vunpack.c.l.b16 %v917
    %v1383 = vunpack.c.l.b16 %v918
    %v1384 = vunpack.c.l.b16 %v919
    %v1385 = vunpack.c.l.b16 %v920
    %v1386 = vunpack.c.l.b16 %v921
    %v1387 = vunpack.c.l.b16 %v922
    %v1388 = vunpack.c.l.b16 %v923
    %v1389 = vunpack.c.l.b16 %v924
    %v1390 = vunpack.c.l.b16 %v925
    %v1391 = vunpack.c.l.b16 %v926
    %v1392 = vunpack.c.l.b16 %v927
    %v1393 = vunpack.c.l.b16 %v928
    %v1394 = vunpack.c.l.b16 %v929
    %v1395 = vrot.slane %v1381, 7
    %v1396 = vsel %vm244, %v1395, %v1379
    %v1397 = vrot.slane %v1383, 6
    %v1398 = vsel %vm246, %v1397, %v1396
    %v1399 = vrot.slane %v1385, 5
    %v1400 = vsel %vm248, %v1399, %v1398
    %v1401 = vrot.slane %v1387, 4
    %v1402 = vsel %vm250, %v1401, %v1400
    %v1403 = vrot.slane %v1389, 3
    %v1404 = vsel %vm252, %v1403, %v1402
    %v1405 = vrot.slane %v1391, 2
    %v1406 = vsel %vm254, %v1405, %v1404
    %v1407 = vrot.slane %v1393, 1
    %v1408 = vsel %vm256, %v1407, %v1406
    %v1409 = vrot.slane %v1382, 7
    %v1410 = vsel %vm244, %v1409, %v1380
    %v1411 = vrot.slane %v1384, 6
    %v1412 = vsel %vm246, %v1411, %v1410
    %v1413 = vrot.slane %v1386, 5
    %v1414 = vsel %vm248, %v1413, %v1412
    %v1415 = vrot.slane %v1388, 4
    %v1416 = vsel %vm250, %v1415, %v1414
    %v1417 = vrot.slane %v1390, 3
    %v1418 = vsel %vm252, %v1417, %v1416
    %v1419 = vrot.slane %v1392, 2
    %v1420 = vsel %vm254, %v1419, %v1418
    %v1421 = vrot.slane %v1394, 1
    %v1422 = vsel %vm256, %v1421, %v1420
    %v1423 = vpack.c.b16 %v1408, %v1408
    %v1424 = vpack.c.b16 %v1422, %v1422
    %v1459 = vunpack.c.l.b16 %v930
    %v1460 = vunpack.c.h.b16 %v930
    %v1461 = vunpack.c.l.b16 %v931
    %v1462 = vunpack.c.h.b16 %v931
    %v1463 = vunpack.c.l.b16 %v932
    %v1464 = vunpack.c.h.b16 %v932
    %v1465 = vunpack.c.l.b16 %v933
    %v1466 = vunpack.c.h.b16 %v933
    %v1467 = vunpack.c.l.b16 %v934
    %v1468 = vunpack.c.h.b16 %v934
    %v1469 = vunpack.c.l.b16 %v935
    %v1470 = vunpack.c.h.b16 %v935
    %v1471 = vunpack.c.l.b16 %v936
    %v1472 = vunpack.c.h.b16 %v936
    %v1473 = vunpack.c.l.b16 %v937
    %v1474 = vunpack.c.h.b16 %v937
    %v1475 = vunpack.c.l.b16 %v938
    %v1476 = vunpack.c.h.b16 %v938
    %v1477 = vunpack.c.l.b16 %v939
    %v1478 = vunpack.c.h.b16 %v939
    %v1479 = vunpack.c.l.b16 %v940
    %v1480 = vunpack.c.h.b16 %v940
    %v1481 = vunpack.c.l.b16 %v941
    %v1482 = vunpack.c.h.b16 %v941
    %v1483 = vunpack.c.l.b16 %v942
    %v1484 = vunpack.c.h.b16 %v942
    %v1485 = vunpack.c.l.b16 %v943
    %v1486 = vunpack.c.h.b16 %v943
    %v1487 = vunpack.c.l.b16 %v944
    %v1488 = vunpack.c.h.b16 %v944
    %v1489 = vunpack.c.l.b16 %v945
    %v1490 = vunpack.c.h.b16 %v945
    %v1491 = vunpack.c.l.b16 %v946
    %v1492 = vunpack.c.h.b16 %v946
    %v1493 = vunpack.c.l.b16 %v947
    %v1494 = vunpack.c.h.b16 %v947
    %v1495 = vunpack.c.l.b16 %v948
    %v1496 = vunpack.c.h.b16 %v948
    %v1497 = vunpack.c.l.b16 %v949
    %v1498 = vunpack.c.h.b16 %v949
    %v1499 = vunpack.c.l.b16 %v950
    %v1500 = vunpack.c.h.b16 %v950
    %v1501 = vunpack.c.l.b16 %v951
    %v1502 = vunpack.c.h.b16 %v951
    %v1503 = vunpack.c.l.b16 %v952
    %v1504 = vunpack.c.h.b16 %v952
    %v1505 = vunpack.c.l.b16 %v953
    %v1506 = vunpack.c.h.b16 %v953
    %v1507 = vunpack.c.l.b16 %v954
    %v1508 = vunpack.c.h.b16 %v954
    %v1509 = vunpack.c.l.b16 %v955
    %v1510 = vunpack.c.h.b16 %v955
    %v1511 = vunpack.c.l.b16 %v956
    %v1512 = vunpack.c.h.b16 %v956
    %v1513 = vunpack.c.l.b16 %v957
    %v1514 = vunpack.c.h.b16 %v957
    %v1515 = vunpack.c.l.b16 %v958
    %v1516 = vunpack.c.h.b16 %v958
    %v1517 = vunpack.c.l.b16 %v959
    %v1518 = vunpack.c.h.b16 %v959
    %v1519 = vunpack.c.l.b16 %v960
    %v1520 = vunpack.c.h.b16 %v960
    %v1521 = vunpack.c.l.b16 %v961
    %v1522 = vunpack.c.h.b16 %v961
    %v1523 = vpack.c.b16 %v1461, %v1459
    %v1524 = vpack.c.b16 %v1462, %v1460
    %v1525 = vpack.c.b16 %v1465, %v1463
    %v1526 = vpack.c.b16 %v1466, %v1464
    %v1527 = vpack.c.b16 %v1469, %v1467
    %v1528 = vpack.c.b16 %v1470, %v1468
    %v1529 = vpack.c.b16 %v1473, %v1471
    %v1530 = vpack.c.b16 %v1474, %v1472
    %v1531 = vpack.c.b16 %v1477, %v1475
    %v1532 = vpack.c.b16 %v1478, %v1476
    %v1533 = vpack.c.b16 %v1481, %v1479
    %v1534 = vpack.c.b16 %v1482, %v1480
    %v1535 = vpack.c.b16 %v1485, %v1483
    %v1536 = vpack.c.b16 %v1486, %v1484
    %v1537 = vpack.c.b16 %v1489, %v1487
    %v1538 = vpack.c.b16 %v1490, %v1488
    %v1539 = vpack.c.b16 %v1493, %v1491
    %v1540 = vpack.c.b16 %v1494, %v1492
    %v1541 = vpack.c.b16 %v1497, %v1495
    %v1542 = vpack.c.b16 %v1498, %v1496
    %v1543 = vpack.c.b16 %v1501, %v1499
    %v1544 = vpack.c.b16 %v1502, %v1500
    %v1545 = vpack.c.b16 %v1505, %v1503
    %v1546 = vpack.c.b16 %v1506, %v1504
    %v1547 = vpack.c.b16 %v1509, %v1507
    %v1548 = vpack.c.b16 %v1510, %v1508
    %v1549 = vpack.c.b16 %v1513, %v1511
    %v1550 = vpack.c.b16 %v1514, %v1512
    %v1551 = vpack.c.b16 %v1517, %v1515
    %v1552 = vpack.c.b16 %v1518, %v1516
    %v1553 = vpack.c.b16 %v1521, %v1519
    %v1554 = vpack.c.b16 %v1522, %v1520
    %1587 = vmatprep.subr.bf16.mxu0 %v1524
    %1588 = vmatpush1.bf16.msra.mxu0 %v1523
    %1589 = vmatprep.subr.bf16.mxu0 %v1526
    %1590 = vmatpush1.bf16.msra.mxu0 %v1525
    %1591 = vmatprep.subr.bf16.mxu0 %v1528
    %1592 = vmatpush1.bf16.msra.mxu0 %v1527
    %1593 = vmatprep.subr.bf16.mxu0 %v1530
    %1594 = vmatpush1.bf16.msra.mxu0 %v1529
    %1595 = vmatprep.subr.bf16.mxu0 %v1532
    %1596 = vmatpush1.bf16.msra.mxu0 %v1531
    %1597 = vmatprep.subr.bf16.mxu0 %v1534
    %1598 = vmatpush1.bf16.msra.mxu0 %v1533
    %1599 = vmatprep.subr.bf16.mxu0 %v1536
    %1600 = vmatpush1.bf16.msra.mxu0 %v1535
    %1601 = vmatprep.subr.bf16.mxu0 %v1538
    %1602 = vmatpush1.bf16.msra.mxu0 %v1537
    %1603 = vmatprep.subr.bf16.mxu0 %v1540
    %1604 = vmatpush1.bf16.msra.mxu0 %v1539
    %1605 = vmatprep.subr.bf16.mxu0 %v1542
    %1606 = vmatpush1.bf16.msra.mxu0 %v1541
    %1607 = vmatprep.subr.bf16.mxu0 %v1544
    %1608 = vmatpush1.bf16.msra.mxu0 %v1543
    %1609 = vmatprep.subr.bf16.mxu0 %v1546
    %1610 = vmatpush1.bf16.msra.mxu0 %v1545
    %1611 = vmatprep.subr.bf16.mxu0 %v1548
    %1612 = vmatpush1.bf16.msra.mxu0 %v1547
    %1613 = vmatprep.subr.bf16.mxu0 %v1550
    %1614 = vmatpush1.bf16.msra.mxu0 %v1549
    %1615 = vmatprep.subr.bf16.mxu0 %v1552
    %1616 = vmatpush1.bf16.msra.mxu0 %v1551
    %1617 = vmatprep.subr.bf16.mxu0 %v1554
    %1618 = vmatpush1.bf16.msra.mxu0 %v1553
    %1619 = vmatprep.mubr.bf16.mxu0 %v1424
    %1620 = vmatmul.mubr.bf16.gmra.mrb[0].mxu0 %v1423
    %v1621 = vpop.f32.mrb[0].mxu0
    %v1622 = vadd.f32 %v1357, %v1621
    %v1623 = vpop.f32.mrb[0].mxu0
    %v1624 = vadd.f32 %v1359, %v1623
    %v1625 = vpop.f32.mrb[0].mxu0
    %v1626 = vpop.f32.mrb[0].mxu0
    %1627 = vdwg.mxu0
    %v1628 = vxor.u32 %v1622, 2147483648
    %v1629 = vxor.u32 %v1624, 2147483648
    %v1630 = vmul.f32 %v1628, 1.442695
    %v1631 = vpow.pop %v1630
    %v1632 = vmul.f32 %v1629, 1.442695
    %v1633 = vpow.pop %v1632
    %v1634 = vadd.f32 %v1631, 1.0
    %v1635 = vadd.f32 %v1633, 1.0
    %v1636 = vrcp.pop %v1634
    %v1637 = vmul.f32 1.0, %v1636
    %v1638 = vrcp.pop %v1635
    %v1639 = vmul.f32 1.0, %v1638
    %v1640 = vlaneseq
    %v1641 = vshrl.u32 %v1640, 7
    %v1642 = vsub.s32 0, %v1641
    %v1643 = vrot.slane %v516, %v1642
    %1645 = vbcast.lane.b32.xlu0 %v1643, 256
    %v1646 = vpop.permute.xlu0 %1645
    %v1647 = vlaneseq
    %v1648 = vshrl.u32 %v1647, 7
    %v1649 = vsub.s32 1, %v1648
    %v1650 = vrot.slane %v516, %v1649
    %1652 = vbcast.lane.b32.xlu0 %v1650, 256
    %v1653 = vpop.permute.xlu0 %1652
    %v1654 = vlaneseq
    %v1655 = vshrl.u32 %v1654, 7
    %v1656 = vsub.s32 2, %v1655
    %v1657 = vrot.slane %v516, %v1656
    %1659 = vbcast.lane.b32.xlu0 %v1657, 256
    %v1660 = vpop.permute.xlu0 %1659
    %v1661 = vlaneseq
    %v1662 = vshrl.u32 %v1661, 7
    %v1663 = vsub.s32 3, %v1662
    %v1664 = vrot.slane %v516, %v1663
    %1666 = vbcast.lane.b32.xlu0 %v1664, 256
    %v1667 = vpop.permute.xlu0 %1666
    %v1668 = vlaneseq
    %v1669 = vshrl.u32 %v1668, 7
    %v1670 = vsub.s32 4, %v1669
    %v1671 = vrot.slane %v516, %v1670
    %1673 = vbcast.lane.b32.xlu0 %v1671, 256
    %v1674 = vpop.permute.xlu0 %1673
    %v1675 = vlaneseq
    %v1676 = vshrl.u32 %v1675, 7
    %v1677 = vsub.s32 5, %v1676
    %v1678 = vrot.slane %v516, %v1677
    %1680 = vbcast.lane.b32.xlu0 %v1678, 256
    %v1681 = vpop.permute.xlu0 %1680
    %v1682 = vlaneseq
    %v1683 = vshrl.u32 %v1682, 7
    %v1684 = vsub.s32 6, %v1683
    %v1685 = vrot.slane %v516, %v1684
    %1687 = vbcast.lane.b32.xlu0 %v1685, 256
    %v1688 = vpop.permute.xlu0 %1687
    %v1689 = vlaneseq
    %v1690 = vshrl.u32 %v1689, 7
    %v1691 = vsub.s32 7, %v1690
    %v1692 = vrot.slane %v516, %v1691
    %1694 = vbcast.lane.b32.xlu0 %v1692, 256
    %v1695 = vpop.permute.xlu0 %1694
    %v1705 = vunpack.c.l.s4 839922192
    %v1706 = vunpack.c.0.s8 %v1705
    %v1707 = vlaneseq
    %v1708 = vshrl.u32 %v1707, 7
    %v1709 = vsub.s32 %v1706, %v1708
    %v1710 = vrot.slane %v1646, %v1709
    %v1712 = vunpack.c.l.s4 839922192
    %v1713 = vunpack.c.0.s8 %v1712
    %v1714 = vlaneseq
    %v1715 = vshrl.u32 %v1714, 7
    %v1716 = vsub.s32 %v1713, %v1715
    %v1717 = vrot.slane %v1653, %v1716
    %v1719 = vunpack.c.l.s4 839922192
    %v1720 = vunpack.c.0.s8 %v1719
    %v1721 = vlaneseq
    %v1722 = vshrl.u32 %v1721, 7
    %v1723 = vsub.s32 %v1720, %v1722
    %v1724 = vrot.slane %v1660, %v1723
    %v1726 = vunpack.c.l.s4 839922192
    %v1727 = vunpack.c.0.s8 %v1726
    %v1728 = vlaneseq
    %v1729 = vshrl.u32 %v1728, 7
    %v1730 = vsub.s32 %v1727, %v1729
    %v1731 = vrot.slane %v1667, %v1730
    %v1733 = vunpack.c.l.s4 839922192
    %v1734 = vunpack.c.0.s8 %v1733
    %v1735 = vlaneseq
    %v1736 = vshrl.u32 %v1735, 7
    %v1737 = vsub.s32 %v1734, %v1736
    %v1738 = vrot.slane %v1674, %v1737
    %v1740 = vunpack.c.l.s4 839922192
    %v1741 = vunpack.c.0.s8 %v1740
    %v1742 = vlaneseq
    %v1743 = vshrl.u32 %v1742, 7
    %v1744 = vsub.s32 %v1741, %v1743
    %v1745 = vrot.slane %v1681, %v1744
    %v1747 = vunpack.c.l.s4 839922192
    %v1748 = vunpack.c.0.s8 %v1747
    %v1749 = vlaneseq
    %v1750 = vshrl.u32 %v1749, 7
    %v1751 = vsub.s32 %v1748, %v1750
    %v1752 = vrot.slane %v1688, %v1751
    %v1754 = vunpack.c.l.s4 839922192
    %v1755 = vunpack.c.0.s8 %v1754
    %v1756 = vlaneseq
    %v1757 = vshrl.u32 %v1756, 7
    %v1758 = vsub.s32 %v1755, %v1757
    %v1759 = vrot.slane %v1695, %v1758
    %v1768 = vmul.f32 %v63, %v1710
    %v1769 = vmul.f32 %v64, %v1717
    %v1770 = vmul.f32 %v65, %v1724
    %v1771 = vmul.f32 %v66, %v1731
    %v1772 = vmul.f32 %v67, %v1738
    %v1773 = vmul.f32 %v68, %v1745
    %v1774 = vmul.f32 %v69, %v1752
    %v1775 = vmul.f32 %v70, %v1759
    %v1778 = vcombine.low %v1637, %v1639
    %v1779 = vcombine.high %v1637, %v1639
    %v1781 = vunpack.c.l.s4 1966171168
    %v1782 = vunpack.c.0.s8 %v1781
    %v1783 = vlaneseq
    %v1784 = vshrl.u32 %v1783, 7
    %v1785 = vsub.s32 %v1782, %v1784
    %v1786 = vrot.slane %v1778, %v1785
    %v1788 = vunpack.c.l.s4 1966171168
    %v1789 = vunpack.c.0.s8 %v1788
    %v1790 = vlaneseq
    %v1791 = vshrl.u32 %v1790, 7
    %v1792 = vsub.s32 %v1789, %v1791
    %v1793 = vrot.slane %v1779, %v1792
    %v1794 = vcombine.high %v1786, %v1786
    %v1795 = vcombine.high %v1793, %v1793
    %v1797 = vunpack.c.l.s4 1966171168
    %v1798 = vunpack.c.0.s8 %v1797
    %v1799 = vlaneseq
    %v1800 = vshrl.u32 %v1799, 7
    %v1801 = vsub.s32 %v1798, %v1800
    %v1802 = vrot.slane %v1786, %v1801
    %v1804 = vunpack.c.l.s4 1966171168
    %v1805 = vunpack.c.0.s8 %v1804
    %v1806 = vlaneseq
    %v1807 = vshrl.u32 %v1806, 7
    %v1808 = vsub.s32 %v1805, %v1807
    %v1809 = vrot.slane %v1793, %v1808
    %v1811 = vunpack.c.l.s4 1966171168
    %v1812 = vunpack.c.0.s8 %v1811
    %v1813 = vlaneseq
    %v1814 = vshrl.u32 %v1813, 7
    %v1815 = vsub.s32 %v1812, %v1814
    %v1816 = vrot.slane %v1794, %v1815
    %v1818 = vunpack.c.l.s4 1966171168
    %v1819 = vunpack.c.0.s8 %v1818
    %v1820 = vlaneseq
    %v1821 = vshrl.u32 %v1820, 7
    %v1822 = vsub.s32 %v1819, %v1821
    %v1823 = vrot.slane %v1795, %v1822
    %v1824 = vcombine.high %v1802, %v1802
    %v1825 = vcombine.high %v1809, %v1809
    %v1826 = vcombine.high %v1816, %v1816
    %v1827 = vcombine.high %v1823, %v1823
    %v1828 = vlaneseq
    %v1829 = vshrl.u32 %v1828, 7
    %v1830 = vsub.s32 0, %v1829
    %v1831 = vrot.slane %v1802, %v1830
    %v1832 = vlaneseq
    %v1833 = vshrl.u32 %v1832, 7
    %v1834 = vsub.s32 1, %v1833
    %v1835 = vrot.slane %v1802, %v1834
    %v1836 = vlaneseq
    %v1837 = vshrl.u32 %v1836, 7
    %v1838 = vsub.s32 0, %v1837
    %v1839 = vrot.slane %v1816, %v1838
    %v1840 = vlaneseq
    %v1841 = vshrl.u32 %v1840, 7
    %v1842 = vsub.s32 1, %v1841
    %v1843 = vrot.slane %v1816, %v1842
    %v1844 = vlaneseq
    %v1845 = vshrl.u32 %v1844, 7
    %v1846 = vsub.s32 0, %v1845
    %v1847 = vrot.slane %v1824, %v1846
    %v1848 = vlaneseq
    %v1849 = vshrl.u32 %v1848, 7
    %v1850 = vsub.s32 1, %v1849
    %v1851 = vrot.slane %v1824, %v1850
    %v1852 = vlaneseq
    %v1853 = vshrl.u32 %v1852, 7
    %v1854 = vsub.s32 0, %v1853
    %v1855 = vrot.slane %v1826, %v1854
    %v1856 = vlaneseq
    %v1857 = vshrl.u32 %v1856, 7
    %v1858 = vsub.s32 1, %v1857
    %v1859 = vrot.slane %v1826, %v1858
    %v1860 = vlaneseq
    %v1861 = vshrl.u32 %v1860, 7
    %v1862 = vsub.s32 0, %v1861
    %v1863 = vrot.slane %v1809, %v1862
    %v1864 = vlaneseq
    %v1865 = vshrl.u32 %v1864, 7
    %v1866 = vsub.s32 1, %v1865
    %v1867 = vrot.slane %v1809, %v1866
    %v1868 = vlaneseq
    %v1869 = vshrl.u32 %v1868, 7
    %v1870 = vsub.s32 0, %v1869
    %v1871 = vrot.slane %v1823, %v1870
    %v1872 = vlaneseq
    %v1873 = vshrl.u32 %v1872, 7
    %v1874 = vsub.s32 1, %v1873
    %v1875 = vrot.slane %v1823, %v1874
    %v1876 = vlaneseq
    %v1877 = vshrl.u32 %v1876, 7
    %v1878 = vsub.s32 0, %v1877
    %v1879 = vrot.slane %v1825, %v1878
    %v1880 = vlaneseq
    %v1881 = vshrl.u32 %v1880, 7
    %v1882 = vsub.s32 1, %v1881
    %v1883 = vrot.slane %v1825, %v1882
    %v1884 = vlaneseq
    %v1885 = vshrl.u32 %v1884, 7
    %v1886 = vsub.s32 0, %v1885
    %v1887 = vrot.slane %v1827, %v1886
    %v1888 = vlaneseq
    %v1889 = vshrl.u32 %v1888, 7
    %v1890 = vsub.s32 1, %v1889
    %v1891 = vrot.slane %v1827, %v1890
    %v1892 = vcombine.low %v1831, %v1835
    %v1893 = vcombine.low %v1839, %v1843
    %v1894 = vcombine.low %v1847, %v1851
    %v1895 = vcombine.low %v1855, %v1859
    %v1896 = vcombine.low %v1863, %v1867
    %v1897 = vcombine.low %v1871, %v1875
    %v1898 = vcombine.low %v1879, %v1883
    %v1899 = vcombine.low %v1887, %v1891
    %v1908 = vmul.f32 %v1768, %v1892
    %v1909 = vmul.f32 %v1769, %v1893
    %v1910 = vmul.f32 %v1770, %v1894
    %v1911 = vmul.f32 %v1771, %v1895
    %v1912 = vmul.f32 %v1772, %v1896
    %v1913 = vmul.f32 %v1773, %v1897
    %v1914 = vmul.f32 %v1774, %v1898
    %v1915 = vmul.f32 %v1775, %v1899
    %1916 = vst [vmem:[#allocation8] sm:$0xff] %v1908
    %1917 = vst [vmem:[#allocation8 + $0x8] sm:$0xff] %v1909
    %1918 = vst [vmem:[#allocation8 + $0x10] sm:$0xff] %v1910
    %1919 = vst [vmem:[#allocation8 + $0x18] sm:$0xff] %v1911
    %1920 = vst [vmem:[#allocation8 + $0x20] sm:$0xff] %v1912
    %1921 = vst [vmem:[#allocation8 + $0x28] sm:$0xff] %v1913
    %1922 = vst [vmem:[#allocation8 + $0x30] sm:$0xff] %v1914
    %1923 = vst [vmem:[#allocation8 + $0x38] sm:$0xff] %v1915
    // Predicated region
    $region34: #{tpu_custom_call.1} parent=1 // pred_check
      _
    $region35: #{tpu_custom_call.1} parent=1 // pred_check_branch
      %1925 = sbr.rel (0) target = $region37
    $region36: #{tpu_custom_call.1} parent=1 // pred_region
      %s1927 = ssub.s32 1024, 1024
      %1928 = vsyncadd [#allocation4], %s1927
      %s1929 = sshll.u32 [#allocation8], 4
      %s1930 = int_to_ptr.vmem [resolvable:$true] %s1929
      %1935 = dma.vmem_to_hbm [thread:$0]  %s1930, 1024, %s5, [#allocation4], 128, 128, 8
    $region37: #{tpu_custom_call.1} parent=1 // pred_fallthru
      _
    // Predicated region
    $region38: #{tpu_custom_call.1} parent=1 // pred_check
      _
    $region39: #{tpu_custom_call.1} parent=1 // pred_check_branch
      %1937 = sbr.rel (0) target = $region41
    $region40: #{tpu_custom_call.1} parent=1 // pred_region
      %1938 = dma.done [#allocation4], 1024
    $region41: #{tpu_custom_call.1} parent=1 // pred_fallthru
      _
    %1939 = vsyncpa [#allocation3], 1
    %1940 = vsyncpa [#allocation6], 1
    %1941 = vsyncpa [#allocation4], 1

// kernel: tpu_custom_call.1
$region0: #{tpu_custom_call.1}
  #allocation0 [shape = 'u32[]', space=smem, size = 0x4, offset = 0x4, fixed_abs, tag = 'smem constant byte address 0x4 - core index']
  #allocation1 [shape = 'u32[144,128]{1,0:T(1,128)}', space=vmem, size = 0x12000, scoped, tag = 'internal scratch']
  %s0 = inlined_call_operand.hbm [shape: f32[8,4,256], index: 0, kind: input, shape index: {}]
  %s1 = inlined_call_operand.vmem [shape: bf16[4,1], index: 1, kind: input, shape index: {}]
  %s2 = inlined_call_operand.vmem [shape: bf16[1,4], index: 2, kind: input, shape index: {}]
  %s3 = inlined_call_operand.hbm [shape: bf16[256,256], index: 3, kind: input, shape index: {}]
  %s4 = inlined_call_operand.hbm [shape: bf16[256,256], index: 4, kind: input, shape index: {}]
  %s5 = inlined_call_operand.hbm [shape: f32[8,4,256], index: 5, kind: output, shape index: {}]
  %s6 = sld [smem:[#allocation0]]
  $region42: #{tpu_custom_call.1} parent=0
    _
  %s8 = ssub.s32 1, %s6
  %s9 = scalar_select 0, %s8, %s6
  $region1: #{tpu_custom_call.1} parent=0
    #allocation2 [shape = 'u8[32768]{0}', space=vmem, size = 0x8000, scoped, tag = 'input window, operand 0, single buffered']
    #allocation3 [shape = 's32[1]{0}', space=sflag, size = 0x4, scoped, tag = 'scoped memory for tpu_custom_call.1']
    #allocation4 [shape = 's32[1]{0}', space=sflag, size = 0x4, scoped, tag = 'scoped memory for tpu_custom_call.1']
    #allocation5 [shape = 'u8[131072]{0}', space=vmem, size = 0x20000, scoped, tag = 'input window, operand 3, single buffered']
    #allocation6 [shape = 's32[1]{0}', space=sflag, size = 0x4, scoped, tag = 'scoped memory for tpu_custom_call.1']
    #allocation7 [shape = 'u8[131072]{0}', space=vmem, size = 0x20000, scoped, tag = 'input window, operand 4, single buffered']
    #allocation8 [shape = 'u8[32768]{0}', space=vmem, size = 0x8000, scoped, tag = 'output window, operand 0, single buffered']
    %10 = vsyncpa [#allocation3], 0
    %11 = vsyncpa [#allocation6], 0
    %12 = vsyncpa [#allocation4], 0
    // Predicated region
    $region2: #{tpu_custom_call.1} parent=1 // pred_check
      _
    $region3: #{tpu_custom_call.1} parent=1 // pred_check_branch
      %14 = sbr.rel (0) target = $region5
    $region4: #{tpu_custom_call.1} parent=1 // pred_region
      %s16 = ssub.s32 1024, 1024
      %17 = vsyncadd [#allocation3], %s16
      %s18 = sshll.u32 [#allocation2], 4
      %s19 = int_to_ptr.vmem [resolvable:$true] %s18
      %24 = dma.hbm_to_vmem [thread:$0]  %s0, 1024, %s19, [#allocation3], 128, 128, 8
    $region5: #{tpu_custom_call.1} parent=1 // pred_fallthru
      _
    // Predicated region
    $region6: #{tpu_custom_call.1} parent=1 // pred_check
      _
    $region7: #{tpu_custom_call.1} parent=1 // pred_check_branch
      %26 = sbr.rel (0) target = $region9
    $region8: #{tpu_custom_call.1} parent=1 // pred_region
      _
    $region9: #{tpu_custom_call.1} parent=1 // pred_fallthru
      _
    // Predicated region
    $region10: #{tpu_custom_call.1} parent=1 // pred_check
      _
    $region11: #{tpu_custom_call.1} parent=1 // pred_check_branch
      %28 = sbr.rel (0) target = $region13
    $region12: #{tpu_custom_call.1} parent=1 // pred_region
      _
    $region13: #{tpu_custom_call.1} parent=1 // pred_fallthru
      _
    // Predicated region
    $region14: #{tpu_custom_call.1} parent=1 // pred_check
      _
    $region15: #{tpu_custom_call.1} parent=1 // pred_check_branch
      %30 = sbr.rel (0) target = $region17
    $region16: #{tpu_custom_call.1} parent=1 // pred_region
      %s32 = ssub.s32 4096, 4096
      %33 = vsyncadd [#allocation6], %s32
      %s34 = sshll.u32 [#allocation5], 4
      %s35 = int_to_ptr.vmem [resolvable:$true] %s34
      %40 = dma.hbm_to_vmem [thread:$0]  %s3, 4096, %s35, [#allocation6], 128, 128, 8
    $region17: #{tpu_custom_call.1} parent=1 // pred_fallthru
      _
    // Predicated region
    $region18: #{tpu_custom_call.1} parent=1 // pred_check
      _
    $region19: #{tpu_custom_call.1} parent=1 // pred_check_branch
      %42 = sbr.rel (0) target = $region21
    $region20: #{tpu_custom_call.1} parent=1 // pred_region
      %s44 = ssub.s32 4096, 4096
      %45 = vsyncadd [#allocation6], %s44
      %s46 = sshll.u32 [#allocation7], 4
      %s47 = int_to_ptr.vmem [resolvable:$true] %s46
      %52 = dma.hbm_to_vmem [thread:$0]  %s4, 4096, %s47, [#allocation6], 128, 128, 8
    $region21: #{tpu_custom_call.1} parent=1 // pred_fallthru
      _
    // Predicated region
    $region22: #{tpu_custom_call.1} parent=1 // pred_check
      _
    $region23: #{tpu_custom_call.1} parent=1 // pred_check_branch
      %54 = sbr.rel (0) target = $region25
    $region24: #{tpu_custom_call.1} parent=1 // pred_region
      %55 = dma.done [#allocation3], 1024
    $region25: #{tpu_custom_call.1} parent=1 // pred_fallthru
      _
    // Predicated region
    $region26: #{tpu_custom_call.1} parent=1 // pred_check
      _
    $region27: #{tpu_custom_call.1} parent=1 // pred_check_branch
      %57 = sbr.rel (0) target = $region29
    $region28: #{tpu_custom_call.1} parent=1 // pred_region
      %58 = dma.done [#allocation6], 4096
    $region29: #{tpu_custom_call.1} parent=1 // pred_fallthru
      _
    // Predicated region
    $region30: #{tpu_custom_call.1} parent=1 // pred_check
      _
    $region31: #{tpu_custom_call.1} parent=1 // pred_check_branch
      %60 = sbr.rel (0) target = $region33
    $region32: #{tpu_custom_call.1} parent=1 // pred_region
      %61 = dma.done [#allocation6], 4096
    $region33: #{tpu_custom_call.1} parent=1 // pred_fallthru
      _
    %v63 = vld [vmem:[#allocation2] sm:$0xff]
    %v64 = vld [vmem:[#allocation2 + $0x8] sm:$0xff]
    %v65 = vld [vmem:[#allocation2 + $0x10] sm:$0xff]
    %v66 = vld [vmem:[#allocation2 + $0x18] sm:$0xff]
    %v67 = vld [vmem:[#allocation2 + $0x20] sm:$0xff]
    %v68 = vld [vmem:[#allocation2 + $0x28] sm:$0xff]
    %v69 = vld [vmem:[#allocation2 + $0x30] sm:$0xff]
    %v70 = vld [vmem:[#allocation2 + $0x38] sm:$0xff]
    %v79 = vcombine.high %v63, %v63
    %v80 = vcombine.high %v64, %v64
    %v81 = vcombine.high %v65, %v65
    %v82 = vcombine.high %v66, %v66
    %v83 = vcombine.high %v67, %v67
    %v84 = vcombine.high %v68, %v68
    %v85 = vcombine.high %v69, %v69
    %v86 = vcombine.high %v70, %v70
    %vm95 = vcmask 1043456
    %v96 = vsel %vm95, %v63, 0.0
    %v97 = vsel %vm95, %v79, 0.0
    %v98 = vadd.f32 %v96, %v97
    %99 = vadd.xlane.f32.xlu0 %v98
    %v100 = vpop.xlane.xlu0 %99
    %v101 = vsel %vm95, %v64, 0.0
    %v102 = vsel %vm95, %v80, 0.0
    %v103 = vadd.f32 %v101, %v102
    %104 = vadd.xlane.f32.xlu0 %v103
    %v105 = vpop.xlane.xlu0 %104
    %v106 = vsel %vm95, %v65, 0.0
    %v107 = vsel %vm95, %v81, 0.0
    %v108 = vadd.f32 %v106, %v107
    %109 = vadd.xlane.f32.xlu0 %v108
    %v110 = vpop.xlane.xlu0 %109
    %v111 = vsel %vm95, %v66, 0.0
    %v112 = vsel %vm95, %v82, 0.0
    %v113 = vadd.f32 %v111, %v112
    %114 = vadd.xlane.f32.xlu0 %v113
    %v115 = vpop.xlane.xlu0 %114
    %v116 = vsel %vm95, %v67, 0.0
    %v117 = vsel %vm95, %v83, 0.0
    %v118 = vadd.f32 %v116, %v117
    %119 = vadd.xlane.f32.xlu0 %v118
    %v120 = vpop.xlane.xlu0 %119
    %v121 = vsel %vm95, %v68, 0.0
    %v122 = vsel %vm95, %v84, 0.0
    %v123 = vadd.f32 %v121, %v122
    %124 = vadd.xlane.f32.xlu0 %v123
    %v125 = vpop.xlane.xlu0 %124
    %v126 = vsel %vm95, %v69, 0.0
    %v127 = vsel %vm95, %v85, 0.0
    %v128 = vadd.f32 %v126, %v127
    %129 = vadd.xlane.f32.xlu0 %v128
    %v130 = vpop.xlane.xlu0 %129
    %v131 = vsel %vm95, %v70, 0.0
    %v132 = vsel %vm95, %v86, 0.0
    %v133 = vadd.f32 %v131, %v132
    %134 = vadd.xlane.f32.xlu0 %v133
    %v135 = vpop.xlane.xlu0 %134
    %v136 = vmul.f32 %v100, 0.00390625
    %v137 = vmul.f32 %v105, 0.00390625
    %v138 = vmul.f32 %v110, 0.00390625
    %v139 = vmul.f32 %v115, 0.00390625
    %v140 = vmul.f32 %v120, 0.00390625
    %v141 = vmul.f32 %v125, 0.00390625
    %v142 = vmul.f32 %v130, 0.00390625
    %v143 = vmul.f32 %v135, 0.00390625
    %v144 = vsel %vm95, %v63, -inf
    %v145 = vsel %vm95, %v79, -inf
    %v146 = vmax.f32 %v144, %v145
    %147 = vmax.xlane.f32.xlu0 %v146
    %v148 = vpop.xlane.xlu0 %147
    %v149 = vsel %vm95, %v64, -inf
    %v150 = vsel %vm95, %v80, -inf
    %v151 = vmax.f32 %v149, %v150
    %152 = vmax.xlane.f32.xlu0 %v151
    %v153 = vpop.xlane.xlu0 %152
    %v154 = vsel %vm95, %v65, -inf
    %v155 = vsel %vm95, %v81, -inf
    %v156 = vmax.f32 %v154, %v155
    %157 = vmax.xlane.f32.xlu0 %v156
    %v158 = vpop.xlane.xlu0 %157
    %v159 = vsel %vm95, %v66, -inf
    %v160 = vsel %vm95, %v82, -inf
    %v161 = vmax.f32 %v159, %v160
    %162 = vmax.xlane.f32.xlu0 %v161
    %v163 = vpop.xlane.xlu0 %162
    %v164 = vsel %vm95, %v67, -inf
    %v165 = vsel %vm95, %v83, -inf
    %v166 = vmax.f32 %v164, %v165
    %167 = vmax.xlane.f32.xlu0 %v166
    %v168 = vpop.xlane.xlu0 %167
    %v169 = vsel %vm95, %v68, -inf
    %v170 = vsel %vm95, %v84, -inf
    %v171 = vmax.f32 %v169, %v170
    %172 = vmax.xlane.f32.xlu0 %v171
    %v173 = vpop.xlane.xlu0 %172
    %v174 = vsel %vm95, %v69, -inf
    %v175 = vsel %vm95, %v85, -inf
    %v176 = vmax.f32 %v174, %v175
    %177 = vmax.xlane.f32.xlu0 %v176
    %v178 = vpop.xlane.xlu0 %177
    %v179 = vsel %vm95, %v70, -inf
    %v180 = vsel %vm95, %v86, -inf
    %v181 = vmax.f32 %v179, %v180
    %182 = vmax.xlane.f32.xlu0 %v181
    %v183 = vpop.xlane.xlu0 %182
    %v184 = vld [vmem:[%s1] sm:$0x3]
    %v185 = vld [vmem:[%s2] sm:$0x1]
    %v186 = vpack.c.bf16 %v136, %v136
    %v187 = vpack.c.bf16 %v137, %v137
    %v188 = vpack.c.bf16 %v138, %v138
    %v189 = vpack.c.bf16 %v139, %v139
    %v190 = vpack.c.bf16 %v140, %v140
    %v191 = vpack.c.bf16 %v141, %v141
    %v192 = vpack.c.bf16 %v142, %v142
    %v193 = vpack.c.bf16 %v143, %v143
    %v202 = vunpack.c.l.b16 %v186
    %v203 = vunpack.c.l.b16 %v187
    %v204 = vunpack.c.l.b16 %v188
    %v205 = vunpack.c.l.b16 %v189
    %v206 = vunpack.c.l.b16 %v190
    %v207 = vunpack.c.l.b16 %v191
    %v208 = vunpack.c.l.b16 %v192
    %v209 = vunpack.c.l.b16 %v193
    %v210 = vlaneseq
    %v211 = vand.u32 %v210, 127
    %v212 = vlaneseq
    %v213 = vshrl.u32 %v212, 7
    %v214 = vsub.s32 %v211, %v213
    %v215 = vrot.slane %v202, %v214
    %v216 = vlaneseq
    %v217 = vshrl.u32 %v216, 7
    %v218 = vsub.s32 %v211, %v217
    %v219 = vrot.slane %v203, %v218
    %v220 = vlaneseq
    %v221 = vshrl.u32 %v220, 7
    %v222 = vsub.s32 %v211, %v221
    %v223 = vrot.slane %v204, %v222
    %v224 = vlaneseq
    %v225 = vshrl.u32 %v224, 7
    %v226 = vsub.s32 %v211, %v225
    %v227 = vrot.slane %v205, %v226
    %v228 = vlaneseq
    %v229 = vshrl.u32 %v228, 7
    %v230 = vsub.s32 %v211, %v229
    %v231 = vrot.slane %v206, %v230
    %v232 = vlaneseq
    %v233 = vshrl.u32 %v232, 7
    %v234 = vsub.s32 %v211, %v233
    %v235 = vrot.slane %v207, %v234
    %v236 = vlaneseq
    %v237 = vshrl.u32 %v236, 7
    %v238 = vsub.s32 %v211, %v237
    %v239 = vrot.slane %v208, %v238
    %v240 = vlaneseq
    %v241 = vshrl.u32 %v240, 7
    %v242 = vsub.s32 %v211, %v241
    %v243 = vrot.slane %v209, %v242
    %vm244 = vcmask 1041409
    %v245 = vsel %vm244, %v219, %v215
    %vm246 = vcmask 1042434
    %v247 = vsel %vm246, %v223, %v245
    %vm248 = vcmask 1043459
    %v249 = vsel %vm248, %v227, %v247
    %vm250 = vcmask 1044484
    %v251 = vsel %vm250, %v231, %v249
    %vm252 = vcmask 1045509
    %v253 = vsel %vm252, %v235, %v251
    %vm254 = vcmask 1046534
    %v255 = vsel %vm254, %v239, %v253
    %vm256 = vcmask 1047559
    %v257 = vsel %vm256, %v243, %v255
    %v258 = vpack.c.b16 %v257, %v257
    %vm259 = vcmask 31744
    %v261 = vsel %vm259, %v258, 0
    %vm263 = vcmask 1041408
    %v265 = vsel %vm263, %v184, 0
    %267 = vmatprep.subr.bf16.mxu0 0
    %268 = vmatpush1.bf16.msra.mxu0 %v265
    %269 = vmatprep.subr.bf16.mxu0 0
    %270 = vmatpush1.bf16.msra.mxu0 0
    %271 = vmatprep.subr.bf16.mxu0 0
    %272 = vmatpush1.bf16.msra.mxu0 0
    %273 = vmatprep.subr.bf16.mxu0 0
    %274 = vmatpush1.bf16.msra.mxu0 0
    %275 = vmatprep.subr.bf16.mxu0 0
    %276 = vmatpush1.bf16.msra.mxu0 0
    %277 = vmatprep.subr.bf16.mxu0 0
    %278 = vmatpush1.bf16.msra.mxu0 0
    %279 = vmatprep.subr.bf16.mxu0 0
    %280 = vmatpush1.bf16.msra.mxu0 0
    %281 = vmatprep.subr.bf16.mxu0 0
    %282 = vmatpush1.bf16.msra.mxu0 0
    %283 = vmatprep.subr.bf16.mxu0 0
    %284 = vmatpush1.bf16.msra.mxu0 0
    %285 = vmatprep.subr.bf16.mxu0 0
    %286 = vmatpush1.bf16.msra.mxu0 0
    %287 = vmatprep.subr.bf16.mxu0 0
    %288 = vmatpush1.bf16.msra.mxu0 0
    %289 = vmatprep.subr.bf16.mxu0 0
    %290 = vmatpush1.bf16.msra.mxu0 0
    %291 = vmatprep.subr.bf16.mxu0 0
    %292 = vmatpush1.bf16.msra.mxu0 0
    %293 = vmatprep.subr.bf16.mxu0 0
    %294 = vmatpush1.bf16.msra.mxu0 0
    %295 = vmatprep.subr.bf16.mxu0 0
    %296 = vmatpush1.bf16.msra.mxu0 0
    %297 = vmatprep.subr.bf16.mxu0 0
    %298 = vmatpush1.bf16.msra.mxu0 0
    %299 = vmatprep.mubr.bf16.mxu0 0
    %300 = vmatmul.mubr.bf16.gmra.mrb[0].mxu0 %v261
    %v301 = vpop.f32.mrb[0].mxu0
    %v302 = vadd.f32 0.0, %v301
    %v303 = vpop.f32.mrb[0].mxu0
    %v304 = vpop.f32.mrb[0].mxu0
    %v305 = vpop.f32.mrb[0].mxu0
    %306 = vdwg.mxu0
    %v307 = vmax.f32 %v302, 0.0
    %v308 = vpack.c.bf16 %v307, %v307
    %v309 = vpack.c.bf16 %v148, %v148
    %v310 = vpack.c.bf16 %v153, %v153
    %v311 = vpack.c.bf16 %v158, %v158
    %v312 = vpack.c.bf16 %v163, %v163
    %v313 = vpack.c.bf16 %v168, %v168
    %v314 = vpack.c.bf16 %v173, %v173
    %v315 = vpack.c.bf16 %v178, %v178
    %v316 = vpack.c.bf16 %v183, %v183
    %v325 = vunpack.c.l.b16 %v309
    %v326 = vunpack.c.l.b16 %v310
    %v327 = vunpack.c.l.b16 %v311
    %v328 = vunpack.c.l.b16 %v312
    %v329 = vunpack.c.l.b16 %v313
    %v330 = vunpack.c.l.b16 %v314
    %v331 = vunpack.c.l.b16 %v315
    %v332 = vunpack.c.l.b16 %v316
    %v333 = vlaneseq
    %v334 = vshrl.u32 %v333, 7
    %v335 = vsub.s32 %v211, %v334
    %v336 = vrot.slane %v325, %v335
    %v337 = vlaneseq
    %v338 = vshrl.u32 %v337, 7
    %v339 = vsub.s32 %v211, %v338
    %v340 = vrot.slane %v326, %v339
    %v341 = vlaneseq
    %v342 = vshrl.u32 %v341, 7
    %v343 = vsub.s32 %v211, %v342
    %v344 = vrot.slane %v327, %v343
    %v345 = vlaneseq
    %v346 = vshrl.u32 %v345, 7
    %v347 = vsub.s32 %v211, %v346
    %v348 = vrot.slane %v328, %v347
    %v349 = vlaneseq
    %v350 = vshrl.u32 %v349, 7
    %v351 = vsub.s32 %v211, %v350
    %v352 = vrot.slane %v329, %v351
    %v353 = vlaneseq
    %v354 = vshrl.u32 %v353, 7
    %v355 = vsub.s32 %v211, %v354
    %v356 = vrot.slane %v330, %v355
    %v357 = vlaneseq
    %v358 = vshrl.u32 %v357, 7
    %v359 = vsub.s32 %v211, %v358
    %v360 = vrot.slane %v331, %v359
    %v361 = vlaneseq
    %v362 = vshrl.u32 %v361, 7
    %v363 = vsub.s32 %v211, %v362
    %v364 = vrot.slane %v332, %v363
    %v365 = vsel %vm244, %v340, %v336
    %v366 = vsel %vm246, %v344, %v365
    %v367 = vsel %vm248, %v348, %v366
    %v368 = vsel %vm250, %v352, %v367
    %v369 = vsel %vm252, %v356, %v368
    %v370 = vsel %vm254, %v360, %v369
    %v371 = vsel %vm256, %v364, %v370
    %v372 = vpack.c.b16 %v371, %v371
    %v374 = vsel %vm259, %v372, 0
    %376 = vmatprep.subr.bf16.mxu0 0
    %377 = vmatpush1.bf16.msra.mxu0 %v265
    %378 = vmatprep.subr.bf16.mxu0 0
    %379 = vmatpush1.bf16.msra.mxu0 0
    %380 = vmatprep.subr.bf16.mxu0 0
    %381 = vmatpush1.bf16.msra.mxu0 0
    %382 = vmatprep.subr.bf16.mxu0 0
    %383 = vmatpush1.bf16.msra.mxu0 0
    %384 = vmatprep.subr.bf16.mxu0 0
    %385 = vmatpush1.bf16.msra.mxu0 0
    %386 = vmatprep.subr.bf16.mxu0 0
    %387 = vmatpush1.bf16.msra.mxu0 0
    %388 = vmatprep.subr.bf16.mxu0 0
    %389 = vmatpush1.bf16.msra.mxu0 0
    %390 = vmatprep.subr.bf16.mxu0 0
    %391 = vmatpush1.bf16.msra.mxu0 0
    %392 = vmatprep.subr.bf16.mxu0 0
    %393 = vmatpush1.bf16.msra.mxu0 0
    %394 = vmatprep.subr.bf16.mxu0 0
    %395 = vmatpush1.bf16.msra.mxu0 0
    %396 = vmatprep.subr.bf16.mxu0 0
    %397 = vmatpush1.bf16.msra.mxu0 0
    %398 = vmatprep.subr.bf16.mxu0 0
    %399 = vmatpush1.bf16.msra.mxu0 0
    %400 = vmatprep.subr.bf16.mxu0 0
    %401 = vmatpush1.bf16.msra.mxu0 0
    %402 = vmatprep.subr.bf16.mxu0 0
    %403 = vmatpush1.bf16.msra.mxu0 0
    %404 = vmatprep.subr.bf16.mxu0 0
    %405 = vmatpush1.bf16.msra.mxu0 0
    %406 = vmatprep.subr.bf16.mxu0 0
    %407 = vmatpush1.bf16.msra.mxu0 0
    %408 = vmatprep.mubr.bf16.mxu0 0
    %409 = vmatmul.mubr.bf16.gmra.mrb[0].mxu0 %v374
    %v410 = vpop.f32.mrb[0].mxu0
    %v411 = vadd.f32 0.0, %v410
    %v412 = vpop.f32.mrb[0].mxu0
    %v413 = vpop.f32.mrb[0].mxu0
    %v414 = vpop.f32.mrb[0].mxu0
    %415 = vdwg.mxu0
    %v416 = vmax.f32 %v411, 0.0
    %v417 = vpack.c.bf16 %v416, %v416
    %vm418 = vcmask 7168
    %v420 = vsel %vm418, %v417, 0
    %vm422 = vcmask 1040384
    %v423 = vsel 0, 4294967295, 65535
    %v424 = vsel %vm422, %v423, 0
    %v426 = vand.u32 %v185, %v424
    %428 = vmatprep.subr.bf16.mxu0 0
    %429 = vmatpush1.bf16.msra.mxu0 %v426
    %430 = vmatprep.subr.bf16.mxu0 0
    %431 = vmatpush1.bf16.msra.mxu0 0
    %432 = vmatprep.subr.bf16.mxu0 0
    %433 = vmatpush1.bf16.msra.mxu0 0
    %434 = vmatprep.subr.bf16.mxu0 0
    %435 = vmatpush1.bf16.msra.mxu0 0
    %436 = vmatprep.subr.bf16.mxu0 0
    %437 = vmatpush1.bf16.msra.mxu0 0
    %438 = vmatprep.subr.bf16.mxu0 0
    %439 = vmatpush1.bf16.msra.mxu0 0
    %440 = vmatprep.subr.bf16.mxu0 0
    %441 = vmatpush1.bf16.msra.mxu0 0
    %442 = vmatprep.subr.bf16.mxu0 0
    %443 = vmatpush1.bf16.msra.mxu0 0
    %444 = vmatprep.subr.bf16.mxu0 0
    %445 = vmatpush1.bf16.msra.mxu0 0
    %446 = vmatprep.subr.bf16.mxu0 0
    %447 = vmatpush1.bf16.msra.mxu0 0
    %448 = vmatprep.subr.bf16.mxu0 0
    %449 = vmatpush1.bf16.msra.mxu0 0
    %450 = vmatprep.subr.bf16.mxu0 0
    %451 = vmatpush1.bf16.msra.mxu0 0
    %452 = vmatprep.subr.bf16.mxu0 0
    %453 = vmatpush1.bf16.msra.mxu0 0
    %454 = vmatprep.subr.bf16.mxu0 0
    %455 = vmatpush1.bf16.msra.mxu0 0
    %456 = vmatprep.subr.bf16.mxu0 0
    %457 = vmatpush1.bf16.msra.mxu0 0
    %458 = vmatprep.subr.bf16.mxu0 0
    %459 = vmatpush1.bf16.msra.mxu0 0
    %460 = vmatprep.mubr.bf16.mxu0 0
    %461 = vmatmul.mubr.bf16.gmra.mrb[0].mxu0 %v420
    %v462 = vpop.f32.mrb[0].mxu0
    %v463 = vadd.f32 0.0, %v462
    %v464 = vpop.f32.mrb[0].mxu0
    %v465 = vpop.f32.mrb[0].mxu0
    %v466 = vpop.f32.mrb[0].mxu0
    %467 = vdwg.mxu0
    %v469 = vsel %vm418, %v308, 0
    %471 = vmatprep.subr.bf16.mxu0 0
    %472 = vmatpush1.bf16.msra.mxu0 %v426
    %473 = vmatprep.subr.bf16.mxu0 0
    %474 = vmatpush1.bf16.msra.mxu0 0
    %475 = vmatprep.subr.bf16.mxu0 0
    %476 = vmatpush1.bf16.msra.mxu0 0
    %477 = vmatprep.subr.bf16.mxu0 0
    %478 = vmatpush1.bf16.msra.mxu0 0
    %479 = vmatprep.subr.bf16.mxu0 0
    %480 = vmatpush1.bf16.msra.mxu0 0
    %481 = vmatprep.subr.bf16.mxu0 0
    %482 = vmatpush1.bf16.msra.mxu0 0
    %483 = vmatprep.subr.bf16.mxu0 0
    %484 = vmatpush1.bf16.msra.mxu0 0
    %485 = vmatprep.subr.bf16.mxu0 0
    %486 = vmatpush1.bf16.msra.mxu0 0
    %487 = vmatprep.subr.bf16.mxu0 0
    %488 = vmatpush1.bf16.msra.mxu0 0
    %489 = vmatprep.subr.bf16.mxu0 0
    %490 = vmatpush1.bf16.msra.mxu0 0
    %491 = vmatprep.subr.bf16.mxu0 0
    %492 = vmatpush1.bf16.msra.mxu0 0
    %493 = vmatprep.subr.bf16.mxu0 0
    %494 = vmatpush1.bf16.msra.mxu0 0
    %495 = vmatprep.subr.bf16.mxu0 0
    %496 = vmatpush1.bf16.msra.mxu0 0
    %497 = vmatprep.subr.bf16.mxu0 0
    %498 = vmatpush1.bf16.msra.mxu0 0
    %499 = vmatprep.subr.bf16.mxu0 0
    %500 = vmatpush1.bf16.msra.mxu0 0
    %501 = vmatprep.subr.bf16.mxu0 0
    %502 = vmatpush1.bf16.msra.mxu0 0
    %503 = vmatprep.mubr.bf16.mxu0 0
    %504 = vmatmul.mubr.bf16.gmra.mrb[0].mxu0 %v469
    %v505 = vpop.f32.mrb[0].mxu0
    %v506 = vadd.f32 %v463, %v505
    %v507 = vpop.f32.mrb[0].mxu0
    %v508 = vpop.f32.mrb[0].mxu0
    %v509 = vpop.f32.mrb[0].mxu0
    %510 = vdwg.mxu0
    %v511 = vxor.u32 %v506, 2147483648
    %v512 = vmul.f32 %v511, 1.442695
    %v513 = vpow.pop %v512
    %v514 = vadd.f32 %v513, 1.0
    %v515 = vrcp.pop %v514
    %v516 = vmul.f32 1.0, %v515
    %518 = vset.pattern.permute.xlu0 0
    %519 = vperm.xlu0 %518, %v516
    %v520 = vpop.permute.xlu0 %519
    %v522 = vunpack.c.l.s4 839922192
    %v523 = vunpack.c.0.s8 %v522
    %v524 = vlaneseq
    %v525 = vshrl.u32 %v524, 7
    %v526 = vsub.s32 %v523, %v525
    %v527 = vrot.slane %v520, %v526
    %v529 = vunpack.c.l.s4 1985246804
    %v530 = vunpack.c.0.s8 %v529
    %v531 = vlaneseq
    %v532 = vshrl.u32 %v531, 7
    %v533 = vsub.s32 %v530, %v532
    %v534 = vrot.slane %v520, %v533
    %v535 = vrot.slane %v527, 1
    %v536 = vrot.slane %v527, 2
    %v537 = vrot.slane %v527, 3
    %v538 = vrot.slane %v534, 1
    %v539 = vrot.slane %v534, 2
    %v540 = vrot.slane %v534, 3
    %v549 = vmul.f32 %v63, %v527
    %v550 = vmul.f32 %v64, %v535
    %v551 = vmul.f32 %v65, %v536
    %v552 = vmul.f32 %v66, %v537
    %v553 = vmul.f32 %v67, %v534
    %v554 = vmul.f32 %v68, %v538
    %v555 = vmul.f32 %v69, %v539
    %v556 = vmul.f32 %v70, %v540
    %557 = vset.pattern.permute.xlu0 1
    %558 = vperm.xlu0 %557, %v516
    %v559 = vpop.permute.xlu0 %558
    %v561 = vunpack.c.l.s4 839922192
    %v562 = vunpack.c.0.s8 %v561
    %v563 = vlaneseq
    %v564 = vshrl.u32 %v563, 7
    %v565 = vsub.s32 %v562, %v564
    %v566 = vrot.slane %v559, %v565
    %v568 = vunpack.c.l.s4 1985246804
    %v569 = vunpack.c.0.s8 %v568
    %v570 = vlaneseq
    %v571 = vshrl.u32 %v570, 7
    %v572 = vsub.s32 %v569, %v571
    %v573 = vrot.slane %v559, %v572
    %v574 = vrot.slane %v566, 7
    %v575 = vrot.slane %v566, 1
    %v576 = vrot.slane %v566, 2
    %v577 = vrot.slane %v573, 7
    %v578 = vrot.slane %v573, 1
    %v579 = vrot.slane %v573, 2
    %v588 = vmul.f32 %v63, %v574
    %v589 = vmul.f32 %v64, %v566
    %v590 = vmul.f32 %v65, %v575
    %v591 = vmul.f32 %v66, %v576
    %v592 = vmul.f32 %v67, %v577
    %v593 = vmul.f32 %v68, %v573
    %v594 = vmul.f32 %v69, %v578
    %v595 = vmul.f32 %v70, %v579
    %v604 = vrot.slane %v588, 5
    %v605 = vrot.slane %v604, 4
    %v606 = vrot.slane %v589, 5
    %v607 = vrot.slane %v606, 4
    %v608 = vrot.slane %v590, 5
    %v609 = vrot.slane %v608, 4
    %v610 = vrot.slane %v591, 5
    %v611 = vrot.slane %v610, 4
    %v612 = vrot.slane %v592, 5
    %v613 = vrot.slane %v612, 4
    %v614 = vrot.slane %v593, 5
    %v615 = vrot.slane %v614, 4
    %v616 = vrot.slane %v594, 5
    %v617 = vrot.slane %v616, 4
    %v618 = vrot.slane %v595, 5
    %v619 = vrot.slane %v618, 4
    %v628 = vadd.f32 %v549, %v605
    %v629 = vadd.f32 %v550, %v607
    %v630 = vadd.f32 %v551, %v609
    %v631 = vadd.f32 %v552, %v611
    %v632 = vadd.f32 %v553, %v613
    %v633 = vadd.f32 %v554, %v615
    %v634 = vadd.f32 %v555, %v617
    %v635 = vadd.f32 %v556, %v619
    %v636 = vmax.f32 %v549, %v605
    %v637 = vmax.f32 %v550, %v607
    %v638 = vmax.f32 %v551, %v609
    %v639 = vmax.f32 %v552, %v611
    %v640 = vmax.f32 %v553, %v613
    %v641 = vmax.f32 %v554, %v615
    %v642 = vmax.f32 %v555, %v617
    %v643 = vmax.f32 %v556, %v619
    %644 = vset.pattern.permute.xlu0 2
    %645 = vperm.xlu0 %644, %v516
    %v646 = vpop.permute.xlu0 %645
    %v648 = vunpack.c.l.s4 839922192
    %v649 = vunpack.c.0.s8 %v648
    %v650 = vlaneseq
    %v651 = vshrl.u32 %v650, 7
    %v652 = vsub.s32 %v649, %v651
    %v653 = vrot.slane %v646, %v652
    %v655 = vunpack.c.l.s4 1985246804
    %v656 = vunpack.c.0.s8 %v655
    %v657 = vlaneseq
    %v658 = vshrl.u32 %v657, 7
    %v659 = vsub.s32 %v656, %v658
    %v660 = vrot.slane %v646, %v659
    %v661 = vrot.slane %v653, 6
    %v662 = vrot.slane %v653, 7
    %v663 = vrot.slane %v653, 1
    %v664 = vrot.slane %v660, 6
    %v665 = vrot.slane %v660, 7
    %v666 = vrot.slane %v660, 1
    %v675 = vmul.f32 %v63, %v661
    %v676 = vmul.f32 %v64, %v662
    %v677 = vmul.f32 %v65, %v653
    %v678 = vmul.f32 %v66, %v663
    %v679 = vmul.f32 %v67, %v664
    %v680 = vmul.f32 %v68, %v665
    %v681 = vmul.f32 %v69, %v660
    %v682 = vmul.f32 %v70, %v666
    %v691 = vrot.slane %v675, 6
    %v692 = vrot.slane %v691, 4
    %v693 = vrot.slane %v676, 6
    %v694 = vrot.slane %v693, 4
    %v695 = vrot.slane %v677, 6
    %v696 = vrot.slane %v695, 4
    %v697 = vrot.slane %v678, 6
    %v698 = vrot.slane %v697, 4
    %v699 = vrot.slane %v679, 6
    %v700 = vrot.slane %v699, 4
    %v701 = vrot.slane %v680, 6
    %v702 = vrot.slane %v701, 4
    %v703 = vrot.slane %v681, 6
    %v704 = vrot.slane %v703, 4
    %v705 = vrot.slane %v682, 6
    %v706 = vrot.slane %v705, 4
    %v715 = vadd.f32 %v628, %v692
    %v716 = vadd.f32 %v629, %v694
    %v717 = vadd.f32 %v630, %v696
    %v718 = vadd.f32 %v631, %v698
    %v719 = vadd.f32 %v632, %v700
    %v720 = vadd.f32 %v633, %v702
    %v721 = vadd.f32 %v634, %v704
    %v722 = vadd.f32 %v635, %v706
    %v723 = vmax.f32 %v636, %v692
    %v724 = vmax.f32 %v637, %v694
    %v725 = vmax.f32 %v638, %v696
    %v726 = vmax.f32 %v639, %v698
    %v727 = vmax.f32 %v640, %v700
    %v728 = vmax.f32 %v641, %v702
    %v729 = vmax.f32 %v642, %v704
    %v730 = vmax.f32 %v643, %v706
    %731 = vset.pattern.permute.xlu0 3
    %732 = vperm.xlu0 %731, %v516
    %v733 = vpop.permute.xlu0 %732
    %v735 = vunpack.c.l.s4 839922192
    %v736 = vunpack.c.0.s8 %v735
    %v737 = vlaneseq
    %v738 = vshrl.u32 %v737, 7
    %v739 = vsub.s32 %v736, %v738
    %v740 = vrot.slane %v733, %v739
    %v742 = vunpack.c.l.s4 1985246804
    %v743 = vunpack.c.0.s8 %v742
    %v744 = vlaneseq
    %v745 = vshrl.u32 %v744, 7
    %v746 = vsub.s32 %v743, %v745
    %v747 = vrot.slane %v733, %v746
    %v748 = vrot.slane %v740, 5
    %v749 = vrot.slane %v740, 6
    %v750 = vrot.slane %v740, 7
    %v751 = vrot.slane %v747, 5
    %v752 = vrot.slane %v747, 6
    %v753 = vrot.slane %v747, 7
    %v762 = vmul.f32 %v63, %v748
    %v763 = vmul.f32 %v64, %v749
    %v764 = vmul.f32 %v65, %v750
    %v765 = vmul.f32 %v66, %v740
    %v766 = vmul.f32 %v67, %v751
    %v767 = vmul.f32 %v68, %v752
    %v768 = vmul.f32 %v69, %v753
    %v769 = vmul.f32 %v70, %v747
    %v778 = vrot.slane %v762, 7
    %v779 = vrot.slane %v778, 4
    %v780 = vrot.slane %v763, 7
    %v781 = vrot.slane %v780, 4
    %v782 = vrot.slane %v764, 7
    %v783 = vrot.slane %v782, 4
    %v784 = vrot.slane %v765, 7
    %v785 = vrot.slane %v784, 4
    %v786 = vrot.slane %v766, 7
    %v787 = vrot.slane %v786, 4
    %v788 = vrot.slane %v767, 7
    %v789 = vrot.slane %v788, 4
    %v790 = vrot.slane %v768, 7
    %v791 = vrot.slane %v790, 4
    %v792 = vrot.slane %v769, 7
    %v793 = vrot.slane %v792, 4
    %v802 = vadd.f32 %v715, %v779
    %v803 = vadd.f32 %v716, %v781
    %v804 = vadd.f32 %v717, %v783
    %v805 = vadd.f32 %v718, %v785
    %v806 = vadd.f32 %v719, %v787
    %v807 = vadd.f32 %v720, %v789
    %v808 = vadd.f32 %v721, %v791
    %v809 = vadd.f32 %v722, %v793
    %v810 = vmax.f32 %v723, %v779
    %v811 = vmax.f32 %v724, %v781
    %v812 = vmax.f32 %v725, %v783
    %v813 = vmax.f32 %v726, %v785
    %v814 = vmax.f32 %v727, %v787
    %v815 = vmax.f32 %v728, %v789
    %v816 = vmax.f32 %v729, %v791
    %v817 = vmax.f32 %v730, %v793
    %v818 = vmul.f32 %v802, 0.25
    %v819 = vmul.f32 %v803, 0.25
    %v820 = vmul.f32 %v804, 0.25
    %v821 = vmul.f32 %v805, 0.25
    %v822 = vmul.f32 %v806, 0.25
    %v823 = vmul.f32 %v807, 0.25
    %v824 = vmul.f32 %v808, 0.25
    %v825 = vmul.f32 %v809, 0.25
    %v834 = vlaneseq
    %v835 = vshrl.u32 %v834, 7
    %v836 = vsub.s32 0, %v835
    %v837 = vrot.slane %v818, %v836
    %v838 = vlaneseq
    %v839 = vshrl.u32 %v838, 7
    %v840 = vsub.s32 4, %v839
    %v841 = vrot.slane %v818, %v840
    %v842 = vlaneseq
    %v843 = vshrl.u32 %v842, 7
    %v844 = vsub.s32 0, %v843
    %v845 = vrot.slane %v819, %v844
    %v846 = vlaneseq
    %v847 = vshrl.u32 %v846, 7
    %v848 = vsub.s32 4, %v847
    %v849 = vrot.slane %v819, %v848
    %v850 = vlaneseq
    %v851 = vshrl.u32 %v850, 7
    %v852 = vsub.s32 0, %v851
    %v853 = vrot.slane %v820, %v852
    %v854 = vlaneseq
    %v855 = vshrl.u32 %v854, 7
    %v856 = vsub.s32 4, %v855
    %v857 = vrot.slane %v820, %v856
    %v858 = vlaneseq
    %v859 = vshrl.u32 %v858, 7
    %v860 = vsub.s32 0, %v859
    %v861 = vrot.slane %v821, %v860
    %v862 = vlaneseq
    %v863 = vshrl.u32 %v862, 7
    %v864 = vsub.s32 4, %v863
    %v865 = vrot.slane %v821, %v864
    %v866 = vlaneseq
    %v867 = vshrl.u32 %v866, 7
    %v868 = vsub.s32 0, %v867
    %v869 = vrot.slane %v822, %v868
    %v870 = vlaneseq
    %v871 = vshrl.u32 %v870, 7
    %v872 = vsub.s32 4, %v871
    %v873 = vrot.slane %v822, %v872
    %v874 = vlaneseq
    %v875 = vshrl.u32 %v874, 7
    %v876 = vsub.s32 0, %v875
    %v877 = vrot.slane %v823, %v876
    %v878 = vlaneseq
    %v879 = vshrl.u32 %v878, 7
    %v880 = vsub.s32 4, %v879
    %v881 = vrot.slane %v823, %v880
    %v882 = vlaneseq
    %v883 = vshrl.u32 %v882, 7
    %v884 = vsub.s32 0, %v883
    %v885 = vrot.slane %v824, %v884
    %v886 = vlaneseq
    %v887 = vshrl.u32 %v886, 7
    %v888 = vsub.s32 4, %v887
    %v889 = vrot.slane %v824, %v888
    %v890 = vlaneseq
    %v891 = vshrl.u32 %v890, 7
    %v892 = vsub.s32 0, %v891
    %v893 = vrot.slane %v825, %v892
    %v894 = vlaneseq
    %v895 = vshrl.u32 %v894, 7
    %v896 = vsub.s32 4, %v895
    %v897 = vrot.slane %v825, %v896
    %v914 = vpack.c.bf16 %v837, %v837
    %v915 = vpack.c.bf16 %v841, %v841
    %v916 = vpack.c.bf16 %v845, %v845
    %v917 = vpack.c.bf16 %v849, %v849
    %v918 = vpack.c.bf16 %v853, %v853
    %v919 = vpack.c.bf16 %v857, %v857
    %v920 = vpack.c.bf16 %v861, %v861
    %v921 = vpack.c.bf16 %v865, %v865
    %v922 = vpack.c.bf16 %v869, %v869
    %v923 = vpack.c.bf16 %v873, %v873
    %v924 = vpack.c.bf16 %v877, %v877
    %v925 = vpack.c.bf16 %v881, %v881
    %v926 = vpack.c.bf16 %v885, %v885
    %v927 = vpack.c.bf16 %v889, %v889
    %v928 = vpack.c.bf16 %v893, %v893
    %v929 = vpack.c.bf16 %v897, %v897
    %v930 = vld [vmem:[#allocation5] sm:$0xff]
    %v931 = vld [vmem:[#allocation5 + $0x8] sm:$0xff]
    %v932 = vld [vmem:[#allocation5 + $0x10] sm:$0xff]
    %v933 = vld [vmem:[#allocation5 + $0x18] sm:$0xff]
    %v934 = vld [vmem:[#allocation5 + $0x20] sm:$0xff]
    %v935 = vld [vmem:[#allocation5 + $0x28] sm:$0xff]
    %v936 = vld [vmem:[#allocation5 + $0x30] sm:$0xff]
    %v937 = vld [vmem:[#allocation5 + $0x38] sm:$0xff]
    %v938 = vld [vmem:[#allocation5 + $0x40] sm:$0xff]
    %v939 = vld [vmem:[#allocation5 + $0x48] sm:$0xff]
    %v940 = vld [vmem:[#allocation5 + $0x50] sm:$0xff]
    %v941 = vld [vmem:[#allocation5 + $0x58] sm:$0xff]
    %v942 = vld [vmem:[#allocation5 + $0x60] sm:$0xff]
    %v943 = vld [vmem:[#allocation5 + $0x68] sm:$0xff]
    %v944 = vld [vmem:[#allocation5 + $0x70] sm:$0xff]
    %v945 = vld [vmem:[#allocation5 + $0x78] sm:$0xff]
    %v946 = vld [vmem:[#allocation5 + $0x80] sm:$0xff]
    %v947 = vld [vmem:[#allocation5 + $0x88] sm:$0xff]
    %v948 = vld [vmem:[#allocation5 + $0x90] sm:$0xff]
    %v949 = vld [vmem:[#allocation5 + $0x98] sm:$0xff]
    %v950 = vld [vmem:[#allocation5 + $0xa0] sm:$0xff]
    %v951 = vld [vmem:[#allocation5 + $0xa8] sm:$0xff]
    %v952 = vld [vmem:[#allocation5 + $0xb0] sm:$0xff]
    %v953 = vld [vmem:[#allocation5 + $0xb8] sm:$0xff]
    %v954 = vld [vmem:[#allocation5 + $0xc0] sm:$0xff]
    %v955 = vld [vmem:[#allocation5 + $0xc8] sm:$0xff]
    %v956 = vld [vmem:[#allocation5 + $0xd0] sm:$0xff]
    %v957 = vld [vmem:[#allocation5 + $0xd8] sm:$0xff]
    %v958 = vld [vmem:[#allocation5 + $0xe0] sm:$0xff]
    %v959 = vld [vmem:[#allocation5 + $0xe8] sm:$0xff]
    %v960 = vld [vmem:[#allocation5 + $0xf0] sm:$0xff]
    %v961 = vld [vmem:[#allocation5 + $0xf8] sm:$0xff]
    %v970 = vlaneseq
    %v971 = vshrl.u32 %v970, 7
    %v972 = vsub.s32 0, %v971
    %v973 = vrot.slane %v810, %v972
    %v974 = vlaneseq
    %v975 = vshrl.u32 %v974, 7
    %v976 = vsub.s32 4, %v975
    %v977 = vrot.slane %v810, %v976
    %v978 = vlaneseq
    %v979 = vshrl.u32 %v978, 7
    %v980 = vsub.s32 0, %v979
    %v981 = vrot.slane %v811, %v980
    %v982 = vlaneseq
    %v983 = vshrl.u32 %v982, 7
    %v984 = vsub.s32 4, %v983
    %v985 = vrot.slane %v811, %v984
    %v986 = vlaneseq
    %v987 = vshrl.u32 %v986, 7
    %v988 = vsub.s32 0, %v987
    %v989 = vrot.slane %v812, %v988
    %v990 = vlaneseq
    %v991 = vshrl.u32 %v990, 7
    %v992 = vsub.s32 4, %v991
    %v993 = vrot.slane %v812, %v992
    %v994 = vlaneseq
    %v995 = vshrl.u32 %v994, 7
    %v996 = vsub.s32 0, %v995
    %v997 = vrot.slane %v813, %v996
    %v998 = vlaneseq
    %v999 = vshrl.u32 %v998, 7
    %v1000 = vsub.s32 4, %v999
    %v1001 = vrot.slane %v813, %v1000
    %v1002 = vlaneseq
    %v1003 = vshrl.u32 %v1002, 7
    %v1004 = vsub.s32 0, %v1003
    %v1005 = vrot.slane %v814, %v1004
    %v1006 = vlaneseq
    %v1007 = vshrl.u32 %v1006, 7
    %v1008 = vsub.s32 4, %v1007
    %v1009 = vrot.slane %v814, %v1008
    %v1010 = vlaneseq
    %v1011 = vshrl.u32 %v1010, 7
    %v1012 = vsub.s32 0, %v1011
    %v1013 = vrot.slane %v815, %v1012
    %v1014 = vlaneseq
    %v1015 = vshrl.u32 %v1014, 7
    %v1016 = vsub.s32 4, %v1015
    %v1017 = vrot.slane %v815, %v1016
    %v1018 = vlaneseq
    %v1019 = vshrl.u32 %v1018, 7
    %v1020 = vsub.s32 0, %v1019
    %v1021 = vrot.slane %v816, %v1020
    %v1022 = vlaneseq
    %v1023 = vshrl.u32 %v1022, 7
    %v1024 = vsub.s32 4, %v1023
    %v1025 = vrot.slane %v816, %v1024
    %v1026 = vlaneseq
    %v1027 = vshrl.u32 %v1026, 7
    %v1028 = vsub.s32 0, %v1027
    %v1029 = vrot.slane %v817, %v1028
    %v1030 = vlaneseq
    %v1031 = vshrl.u32 %v1030, 7
    %v1032 = vsub.s32 4, %v1031
    %v1033 = vrot.slane %v817, %v1032
    %v1050 = vpack.c.bf16 %v973, %v973
    %v1051 = vpack.c.bf16 %v977, %v977
    %v1052 = vpack.c.bf16 %v981, %v981
    %v1053 = vpack.c.bf16 %v985, %v985
    %v1054 = vpack.c.bf16 %v989, %v989
    %v1055 = vpack.c.bf16 %v993, %v993
    %v1056 = vpack.c.bf16 %v997, %v997
    %v1057 = vpack.c.bf16 %v1001, %v1001
    %v1058 = vpack.c.bf16 %v1005, %v1005
    %v1059 = vpack.c.bf16 %v1009, %v1009
    %v1060 = vpack.c.bf16 %v1013, %v1013
    %v1061 = vpack.c.bf16 %v1017, %v1017
    %v1062 = vpack.c.bf16 %v1021, %v1021
    %v1063 = vpack.c.bf16 %v1025, %v1025
    %v1064 = vpack.c.bf16 %v1029, %v1029
    %v1065 = vpack.c.bf16 %v1033, %v1033
    %v1066 = vld [vmem:[#allocation7] sm:$0xff]
    %v1067 = vld [vmem:[#allocation7 + $0x8] sm:$0xff]
    %v1068 = vld [vmem:[#allocation7 + $0x10] sm:$0xff]
    %v1069 = vld [vmem:[#allocation7 + $0x18] sm:$0xff]
    %v1070 = vld [vmem:[#allocation7 + $0x20] sm:$0xff]
    %v1071 = vld [vmem:[#allocation7 + $0x28] sm:$0xff]
    %v1072 = vld [vmem:[#allocation7 + $0x30] sm:$0xff]
    %v1073 = vld [vmem:[#allocation7 + $0x38] sm:$0xff]
    %v1074 = vld [vmem:[#allocation7 + $0x40] sm:$0xff]
    %v1075 = vld [vmem:[#allocation7 + $0x48] sm:$0xff]
    %v1076 = vld [vmem:[#allocation7 + $0x50] sm:$0xff]
    %v1077 = vld [vmem:[#allocation7 + $0x58] sm:$0xff]
    %v1078 = vld [vmem:[#allocation7 + $0x60] sm:$0xff]
    %v1079 = vld [vmem:[#allocation7 + $0x68] sm:$0xff]
    %v1080 = vld [vmem:[#allocation7 + $0x70] sm:$0xff]
    %v1081 = vld [vmem:[#allocation7 + $0x78] sm:$0xff]
    %v1082 = vld [vmem:[#allocation7 + $0x80] sm:$0xff]
    %v1083 = vld [vmem:[#allocation7 + $0x88] sm:$0xff]
    %v1084 = vld [vmem:[#allocation7 + $0x90] sm:$0xff]
    %v1085 = vld [vmem:[#allocation7 + $0x98] sm:$0xff]
    %v1086 = vld [vmem:[#allocation7 + $0xa0] sm:$0xff]
    %v1087 = vld [vmem:[#allocation7 + $0xa8] sm:$0xff]
    %v1088 = vld [vmem:[#allocation7 + $0xb0] sm:$0xff]
    %v1089 = vld [vmem:[#allocation7 + $0xb8] sm:$0xff]
    %v1090 = vld [vmem:[#allocation7 + $0xc0] sm:$0xff]
    %v1091 = vld [vmem:[#allocation7 + $0xc8] sm:$0xff]
    %v1092 = vld [vmem:[#allocation7 + $0xd0] sm:$0xff]
    %v1093 = vld [vmem:[#allocation7 + $0xd8] sm:$0xff]
    %v1094 = vld [vmem:[#allocation7 + $0xe0] sm:$0xff]
    %v1095 = vld [vmem:[#allocation7 + $0xe8] sm:$0xff]
    %v1096 = vld [vmem:[#allocation7 + $0xf0] sm:$0xff]
    %v1097 = vld [vmem:[#allocation7 + $0xf8] sm:$0xff]
    %v1114 = vunpack.c.l.b16 %v1050
    %v1115 = vunpack.c.l.b16 %v1051
    %v1116 = vunpack.c.l.b16 %v1052
    %v1117 = vunpack.c.l.b16 %v1053
    %v1118 = vunpack.c.l.b16 %v1054
    %v1119 = vunpack.c.l.b16 %v1055
    %v1120 = vunpack.c.l.b16 %v1056
    %v1121 = vunpack.c.l.b16 %v1057
    %v1122 = vunpack.c.l.b16 %v1058
    %v1123 = vunpack.c.l.b16 %v1059
    %v1124 = vunpack.c.l.b16 %v1060
    %v1125 = vunpack.c.l.b16 %v1061
    %v1126 = vunpack.c.l.b16 %v1062
    %v1127 = vunpack.c.l.b16 %v1063
    %v1128 = vunpack.c.l.b16 %v1064
    %v1129 = vunpack.c.l.b16 %v1065
    %v1130 = vrot.slane %v1116, 7
    %v1131 = vsel %vm244, %v1130, %v1114
    %v1132 = vrot.slane %v1118, 6
    %v1133 = vsel %vm246, %v1132, %v1131
    %v1134 = vrot.slane %v1120, 5
    %v1135 = vsel %vm248, %v1134, %v1133
    %v1136 = vrot.slane %v1122, 4
    %v1137 = vsel %vm250, %v1136, %v1135
    %v1138 = vrot.slane %v1124, 3
    %v1139 = vsel %vm252, %v1138, %v1137
    %v1140 = vrot.slane %v1126, 2
    %v1141 = vsel %vm254, %v1140, %v1139
    %v1142 = vrot.slane %v1128, 1
    %v1143 = vsel %vm256, %v1142, %v1141
    %v1144 = vrot.slane %v1117, 7
    %v1145 = vsel %vm244, %v1144, %v1115
    %v1146 = vrot.slane %v1119, 6
    %v1147 = vsel %vm246, %v1146, %v1145
    %v1148 = vrot.slane %v1121, 5
    %v1149 = vsel %vm248, %v1148, %v1147
    %v1150 = vrot.slane %v1123, 4
    %v1151 = vsel %vm250, %v1150, %v1149
    %v1152 = vrot.slane %v1125, 3
    %v1153 = vsel %vm252, %v1152, %v1151
    %v1154 = vrot.slane %v1127, 2
    %v1155 = vsel %vm254, %v1154, %v1153
    %v1156 = vrot.slane %v1129, 1
    %v1157 = vsel %vm256, %v1156, %v1155
    %v1158 = vpack.c.b16 %v1143, %v1143
    %v1159 = vpack.c.b16 %v1157, %v1157
    %v1194 = vunpack.c.l.b16 %v1066
    %v1195 = vunpack.c.h.b16 %v1066
    %v1196 = vunpack.c.l.b16 %v1067
    %v1197 = vunpack.c.h.b16 %v1067
    %v1198 = vunpack.c.l.b16 %v1068
    %v1199 = vunpack.c.h.b16 %v1068
    %v1200 = vunpack.c.l.b16 %v1069
    %v1201 = vunpack.c.h.b16 %v1069
    %v1202 = vunpack.c.l.b16 %v1070
    %v1203 = vunpack.c.h.b16 %v1070
    %v1204 = vunpack.c.l.b16 %v1071
    %v1205 = vunpack.c.h.b16 %v1071
    %v1206 = vunpack.c.l.b16 %v1072
    %v1207 = vunpack.c.h.b16 %v1072
    %v1208 = vunpack.c.l.b16 %v1073
    %v1209 = vunpack.c.h.b16 %v1073
    %v1210 = vunpack.c.l.b16 %v1074
    %v1211 = vunpack.c.h.b16 %v1074
    %v1212 = vunpack.c.l.b16 %v1075
    %v1213 = vunpack.c.h.b16 %v1075
    %v1214 = vunpack.c.l.b16 %v1076
    %v1215 = vunpack.c.h.b16 %v1076
    %v1216 = vunpack.c.l.b16 %v1077
    %v1217 = vunpack.c.h.b16 %v1077
    %v1218 = vunpack.c.l.b16 %v1078
    %v1219 = vunpack.c.h.b16 %v1078
    %v1220 = vunpack.c.l.b16 %v1079
    %v1221 = vunpack.c.h.b16 %v1079
    %v1222 = vunpack.c.l.b16 %v1080
    %v1223 = vunpack.c.h.b16 %v1080
    %v1224 = vunpack.c.l.b16 %v1081
    %v1225 = vunpack.c.h.b16 %v1081
    %v1226 = vunpack.c.l.b16 %v1082
    %v1227 = vunpack.c.h.b16 %v1082
    %v1228 = vunpack.c.l.b16 %v1083
    %v1229 = vunpack.c.h.b16 %v1083
    %v1230 = vunpack.c.l.b16 %v1084
    %v1231 = vunpack.c.h.b16 %v1084
    %v1232 = vunpack.c.l.b16 %v1085
    %v1233 = vunpack.c.h.b16 %v1085
    %v1234 = vunpack.c.l.b16 %v1086
    %v1235 = vunpack.c.h.b16 %v1086
    %v1236 = vunpack.c.l.b16 %v1087
    %v1237 = vunpack.c.h.b16 %v1087
    %v1238 = vunpack.c.l.b16 %v1088
    %v1239 = vunpack.c.h.b16 %v1088
    %v1240 = vunpack.c.l.b16 %v1089
    %v1241 = vunpack.c.h.b16 %v1089
    %v1242 = vunpack.c.l.b16 %v1090
    %v1243 = vunpack.c.h.b16 %v1090
    %v1244 = vunpack.c.l.b16 %v1091
    %v1245 = vunpack.c.h.b16 %v1091
    %v1246 = vunpack.c.l.b16 %v1092
    %v1247 = vunpack.c.h.b16 %v1092
    %v1248 = vunpack.c.l.b16 %v1093
    %v1249 = vunpack.c.h.b16 %v1093
    %v1250 = vunpack.c.l.b16 %v1094
    %v1251 = vunpack.c.h.b16 %v1094
    %v1252 = vunpack.c.l.b16 %v1095
    %v1253 = vunpack.c.h.b16 %v1095
    %v1254 = vunpack.c.l.b16 %v1096
    %v1255 = vunpack.c.h.b16 %v1096
    %v1256 = vunpack.c.l.b16 %v1097
    %v1257 = vunpack.c.h.b16 %v1097
    %v1258 = vpack.c.b16 %v1196, %v1194
    %v1259 = vpack.c.b16 %v1197, %v1195
    %v1260 = vpack.c.b16 %v1200, %v1198
    %v1261 = vpack.c.b16 %v1201, %v1199
    %v1262 = vpack.c.b16 %v1204, %v1202
    %v1263 = vpack.c.b16 %v1205, %v1203
    %v1264 = vpack.c.b16 %v1208, %v1206
    %v1265 = vpack.c.b16 %v1209, %v1207
    %v1266 = vpack.c.b16 %v1212, %v1210
    %v1267 = vpack.c.b16 %v1213, %v1211
    %v1268 = vpack.c.b16 %v1216, %v1214
    %v1269 = vpack.c.b16 %v1217, %v1215
    %v1270 = vpack.c.b16 %v1220, %v1218
    %v1271 = vpack.c.b16 %v1221, %v1219
    %v1272 = vpack.c.b16 %v1224, %v1222
    %v1273 = vpack.c.b16 %v1225, %v1223
    %v1274 = vpack.c.b16 %v1228, %v1226
    %v1275 = vpack.c.b16 %v1229, %v1227
    %v1276 = vpack.c.b16 %v1232, %v1230
    %v1277 = vpack.c.b16 %v1233, %v1231
    %v1278 = vpack.c.b16 %v1236, %v1234
    %v1279 = vpack.c.b16 %v1237, %v1235
    %v1280 = vpack.c.b16 %v1240, %v1238
    %v1281 = vpack.c.b16 %v1241, %v1239
    %v1282 = vpack.c.b16 %v1244, %v1242
    %v1283 = vpack.c.b16 %v1245, %v1243
    %v1284 = vpack.c.b16 %v1248, %v1246
    %v1285 = vpack.c.b16 %v1249, %v1247
    %v1286 = vpack.c.b16 %v1252, %v1250
    %v1287 = vpack.c.b16 %v1253, %v1251
    %v1288 = vpack.c.b16 %v1256, %v1254
    %v1289 = vpack.c.b16 %v1257, %v1255
    %1322 = vmatprep.subr.bf16.mxu0 %v1259
    %1323 = vmatpush1.bf16.msra.mxu0 %v1258
    %1324 = vmatprep.subr.bf16.mxu0 %v1261
    %1325 = vmatpush1.bf16.msra.mxu0 %v1260
    %1326 = vmatprep.subr.bf16.mxu0 %v1263
    %1327 = vmatpush1.bf16.msra.mxu0 %v1262
    %1328 = vmatprep.subr.bf16.mxu0 %v1265
    %1329 = vmatpush1.bf16.msra.mxu0 %v1264
    %1330 = vmatprep.subr.bf16.mxu0 %v1267
    %1331 = vmatpush1.bf16.msra.mxu0 %v1266
    %1332 = vmatprep.subr.bf16.mxu0 %v1269
    %1333 = vmatpush1.bf16.msra.mxu0 %v1268
    %1334 = vmatprep.subr.bf16.mxu0 %v1271
    %1335 = vmatpush1.bf16.msra.mxu0 %v1270
    %1336 = vmatprep.subr.bf16.mxu0 %v1273
    %1337 = vmatpush1.bf16.msra.mxu0 %v1272
    %1338 = vmatprep.subr.bf16.mxu0 %v1275
    %1339 = vmatpush1.bf16.msra.mxu0 %v1274
    %1340 = vmatprep.subr.bf16.mxu0 %v1277
    %1341 = vmatpush1.bf16.msra.mxu0 %v1276
    %1342 = vmatprep.subr.bf16.mxu0 %v1279
    %1343 = vmatpush1.bf16.msra.mxu0 %v1278
    %1344 = vmatprep.subr.bf16.mxu0 %v1281
    %1345 = vmatpush1.bf16.msra.mxu0 %v1280
    %1346 = vmatprep.subr.bf16.mxu0 %v1283
    %1347 = vmatpush1.bf16.msra.mxu0 %v1282
    %1348 = vmatprep.subr.bf16.mxu0 %v1285
    %1349 = vmatpush1.bf16.msra.mxu0 %v1284
    %1350 = vmatprep.subr.bf16.mxu0 %v1287
    %1351 = vmatpush1.bf16.msra.mxu0 %v1286
    %1352 = vmatprep.subr.bf16.mxu0 %v1289
    %1353 = vmatpush1.bf16.msra.mxu0 %v1288
    %1354 = vmatprep.mubr.bf16.mxu0 %v1159
    %1355 = vmatmul.mubr.bf16.gmra.mrb[0].mxu0 %v1158
    %v1356 = vpop.f32.mrb[0].mxu0
    %v1357 = vadd.f32 0.0, %v1356
    %v1358 = vpop.f32.mrb[0].mxu0
    %v1359 = vadd.f32 0.0, %v1358
    %v1360 = vpop.f32.mrb[0].mxu0
    %v1361 = vpop.f32.mrb[0].mxu0
    %1362 = vdwg.mxu0
    %v1379 = vunpack.c.l.b16 %v914
    %v1380 = vunpack.c.l.b16 %v915
    %v1381 = vunpack.c.l.b16 %v916
    %v1382 = vunpack.c.l.b16 %v917
    %v1383 = vunpack.c.l.b16 %v918
    %v1384 = vunpack.c.l.b16 %v919
    %v1385 = vunpack.c.l.b16 %v920
    %v1386 = vunpack.c.l.b16 %v921
    %v1387 = vunpack.c.l.b16 %v922
    %v1388 = vunpack.c.l.b16 %v923
    %v1389 = vunpack.c.l.b16 %v924
    %v1390 = vunpack.c.l.b16 %v925
    %v1391 = vunpack.c.l.b16 %v926
    %v1392 = vunpack.c.l.b16 %v927
    %v1393 = vunpack.c.l.b16 %v928
    %v1394 = vunpack.c.l.b16 %v929
    %v1395 = vrot.slane %v1381, 7
    %v1396 = vsel %vm244, %v1395, %v1379
    %v1397 = vrot.slane %v1383, 6
    %v1398 = vsel %vm246, %v1397, %v1396
    %v1399 = vrot.slane %v1385, 5
    %v1400 = vsel %vm248, %v1399, %v1398
    %v1401 = vrot.slane %v1387, 4
    %v1402 = vsel %vm250, %v1401, %v1400
    %v1403 = vrot.slane %v1389, 3
    %v1404 = vsel %vm252, %v1403, %v1402
    %v1405 = vrot.slane %v1391, 2
    %v1406 = vsel %vm254, %v1405, %v1404
    %v1407 = vrot.slane %v1393, 1
    %v1408 = vsel %vm256, %v1407, %v1406
    %v1409 = vrot.slane %v1382, 7
    %v1410 = vsel %vm244, %v1409, %v1380
    %v1411 = vrot.slane %v1384, 6
    %v1412 = vsel %vm246, %v1411, %v1410
    %v1413 = vrot.slane %v1386, 5
    %v1414 = vsel %vm248, %v1413, %v1412
    %v1415 = vrot.slane %v1388, 4
    %v1416 = vsel %vm250, %v1415, %v1414
    %v1417 = vrot.slane %v1390, 3
    %v1418 = vsel %vm252, %v1417, %v1416
    %v1419 = vrot.slane %v1392, 2
    %v1420 = vsel %vm254, %v1419, %v1418
    %v1421 = vrot.slane %v1394, 1
    %v1422 = vsel %vm256, %v1421, %v1420
    %v1423 = vpack.c.b16 %v1408, %v1408
    %v1424 = vpack.c.b16 %v1422, %v1422
    %v1459 = vunpack.c.l.b16 %v930
    %v1460 = vunpack.c.h.b16 %v930
    %v1461 = vunpack.c.l.b16 %v931
    %v1462 = vunpack.c.h.b16 %v931
    %v1463 = vunpack.c.l.b16 %v932
    %v1464 = vunpack.c.h.b16 %v932
    %v1465 = vunpack.c.l.b16 %v933
    %v1466 = vunpack.c.h.b16 %v933
    %v1467 = vunpack.c.l.b16 %v934
    %v1468 = vunpack.c.h.b16 %v934
    %v1469 = vunpack.c.l.b16 %v935
    %v1470 = vunpack.c.h.b16 %v935
    %v1471 = vunpack.c.l.b16 %v936
    %v1472 = vunpack.c.h.b16 %v936
    %v1473 = vunpack.c.l.b16 %v937
    %v1474 = vunpack.c.h.b16 %v937
    %v1475 = vunpack.c.l.b16 %v938
    %v1476 = vunpack.c.h.b16 %v938
    %v1477 = vunpack.c.l.b16 %v939
    %v1478 = vunpack.c.h.b16 %v939
    %v1479 = vunpack.c.l.b16 %v940
    %v1480 = vunpack.c.h.b16 %v940
    %v1481 = vunpack.c.l.b16 %v941
    %v1482 = vunpack.c.h.b16 %v941
    %v1483 = vunpack.c.l.b16 %v942
    %v1484 = vunpack.c.h.b16 %v942
    %v1485 = vunpack.c.l.b16 %v943
    %v1486 = vunpack.c.h.b16 %v943
    %v1487 = vunpack.c.l.b16 %v944
    %v1488 = vunpack.c.h.b16 %v944
    %v1489 = vunpack.c.l.b16 %v945
    %v1490 = vunpack.c.h.b16 %v945
    %v1491 = vunpack.c.l.b16 %v946
    %v1492 = vunpack.c.h.b16 %v946
    %v1493 = vunpack.c.l.b16 %v947
    %v1494 = vunpack.c.h.b16 %v947
    %v1495 = vunpack.c.l.b16 %v948
    %v1496 = vunpack.c.h.b16 %v948
    %v1497 = vunpack.c.l.b16 %v949
    %v1498 = vunpack.c.h.b16 %v949
    %v1499 = vunpack.c.l.b16 %v950
    %v1500 = vunpack.c.h.b16 %v950
    %v1501 = vunpack.c.l.b16 %v951
    %v1502 = vunpack.c.h.b16 %v951
    %v1503 = vunpack.c.l.b16 %v952
    %v1504 = vunpack.c.h.b16 %v952
    %v1505 = vunpack.c.l.b16 %v953
    %v1506 = vunpack.c.h.b16 %v953
    %v1507 = vunpack.c.l.b16 %v954
    %v1508 = vunpack.c.h.b16 %v954
    %v1509 = vunpack.c.l.b16 %v955
    %v1510 = vunpack.c.h.b16 %v955
    %v1511 = vunpack.c.l.b16 %v956
    %v1512 = vunpack.c.h.b16 %v956
    %v1513 = vunpack.c.l.b16 %v957
    %v1514 = vunpack.c.h.b16 %v957
    %v1515 = vunpack.c.l.b16 %v958
    %v1516 = vunpack.c.h.b16 %v958
    %v1517 = vunpack.c.l.b16 %v959
    %v1518 = vunpack.c.h.b16 %v959
    %v1519 = vunpack.c.l.b16 %v960
    %v1520 = vunpack.c.h.b16 %v960
    %v1521 = vunpack.c.l.b16 %v961
    %v1522 = vunpack.c.h.b16 %v961
    %v1523 = vpack.c.b16 %v1461, %v1459
    %v1524 = vpack.c.b16 %v1462, %v1460
    %v1525 = vpack.c.b16 %v1465, %v1463
    %v1526 = vpack.c.b16 %v1466, %v1464
    %v1527 = vpack.c.b16 %v1469, %v1467
    %v1528 = vpack.c.b16 %v1470, %v1468
    %v1529 = vpack.c.b16 %v1473, %v1471
    %v1530 = vpack.c.b16 %v1474, %v1472
    %v1531 = vpack.c.b16 %v1477, %v1475
    %v1532 = vpack.c.b16 %v1478, %v1476
    %v1533 = vpack.c.b16 %v1481, %v1479
    %v1534 = vpack.c.b16 %v1482, %v1480
    %v1535 = vpack.c.b16 %v1485, %v1483
    %v1536 = vpack.c.b16 %v1486, %v1484
    %v1537 = vpack.c.b16 %v1489, %v1487
    %v1538 = vpack.c.b16 %v1490, %v1488
    %v1539 = vpack.c.b16 %v1493, %v1491
    %v1540 = vpack.c.b16 %v1494, %v1492
    %v1541 = vpack.c.b16 %v1497, %v1495
    %v1542 = vpack.c.b16 %v1498, %v1496
    %v1543 = vpack.c.b16 %v1501, %v1499
    %v1544 = vpack.c.b16 %v1502, %v1500
    %v1545 = vpack.c.b16 %v1505, %v1503
    %v1546 = vpack.c.b16 %v1506, %v1504
    %v1547 = vpack.c.b16 %v1509, %v1507
    %v1548 = vpack.c.b16 %v1510, %v1508
    %v1549 = vpack.c.b16 %v1513, %v1511
    %v1550 = vpack.c.b16 %v1514, %v1512
    %v1551 = vpack.c.b16 %v1517, %v1515
    %v1552 = vpack.c.b16 %v1518, %v1516
    %v1553 = vpack.c.b16 %v1521, %v1519
    %v1554 = vpack.c.b16 %v1522, %v1520
    %1587 = vmatprep.subr.bf16.mxu0 %v1524
    %1588 = vmatpush1.bf16.msra.mxu0 %v1523
    %1589 = vmatprep.subr.bf16.mxu0 %v1526
    %1590 = vmatpush1.bf16.msra.mxu0 %v1525
    %1591 = vmatprep.subr.bf16.mxu0 %v1528
    %1592 = vmatpush1.bf16.msra.mxu0 %v1527
    %1593 = vmatprep.subr.bf16.mxu0 %v1530
    %1594 = vmatpush1.bf16.msra.mxu0 %v1529
    %1595 = vmatprep.subr.bf16.mxu0 %v1532
    %1596 = vmatpush1.bf16.msra.mxu0 %v1531
    %1597 = vmatprep.subr.bf16.mxu0 %v1534
    %1598 = vmatpush1.bf16.msra.mxu0 %v1533
    %1599 = vmatprep.subr.bf16.mxu0 %v1536
    %1600 = vmatpush1.bf16.msra.mxu0 %v1535
    %1601 = vmatprep.subr.bf16.mxu0 %v1538
    %1602 = vmatpush1.bf16.msra.mxu0 %v1537
    %1603 = vmatprep.subr.bf16.mxu0 %v1540
    %1604 = vmatpush1.bf16.msra.mxu0 %v1539
    %1605 = vmatprep.subr.bf16.mxu0 %v1542
    %1606 = vmatpush1.bf16.msra.mxu0 %v1541
    %1607 = vmatprep.subr.bf16.mxu0 %v1544
    %1608 = vmatpush1.bf16.msra.mxu0 %v1543
    %1609 = vmatprep.subr.bf16.mxu0 %v1546
    %1610 = vmatpush1.bf16.msra.mxu0 %v1545
    %1611 = vmatprep.subr.bf16.mxu0 %v1548
    %1612 = vmatpush1.bf16.msra.mxu0 %v1547
    %1613 = vmatprep.subr.bf16.mxu0 %v1550
    %1614 = vmatpush1.bf16.msra.mxu0 %v1549
    %1615 = vmatprep.subr.bf16.mxu0 %v1552
    %1616 = vmatpush1.bf16.msra.mxu0 %v1551
    %1617 = vmatprep.subr.bf16.mxu0 %v1554
    %1618 = vmatpush1.bf16.msra.mxu0 %v1553
    %1619 = vmatprep.mubr.bf16.mxu0 %v1424
    %1620 = vmatmul.mubr.bf16.gmra.mrb[0].mxu0 %v1423
    %v1621 = vpop.f32.mrb[0].mxu0
    %v1622 = vadd.f32 %v1357, %v1621
    %v1623 = vpop.f32.mrb[0].mxu0
    %v1624 = vadd.f32 %v1359, %v1623
    %v1625 = vpop.f32.mrb[0].mxu0
    %v1626 = vpop.f32.mrb[0].mxu0
    %1627 = vdwg.mxu0
    %v1628 = vxor.u32 %v1622, 2147483648
    %v1629 = vxor.u32 %v1624, 2147483648
    %v1630 = vmul.f32 %v1628, 1.442695
    %v1631 = vpow.pop %v1630
    %v1632 = vmul.f32 %v1629, 1.442695
    %v1633 = vpow.pop %v1632
    %v1634 = vadd.f32 %v1631, 1.0
    %v1635 = vadd.f32 %v1633, 1.0
    %v1636 = vrcp.pop %v1634
    %v1637 = vmul.f32 1.0, %v1636
    %v1638 = vrcp.pop %v1635
    %v1639 = vmul.f32 1.0, %v1638
    %v1640 = vlaneseq
    %v1641 = vshrl.u32 %v1640, 7
    %v1642 = vsub.s32 0, %v1641
    %v1643 = vrot.slane %v516, %v1642
    %1645 = vbcast.lane.b32.xlu0 %v1643, 256
    %v1646 = vpop.permute.xlu0 %1645
    %v1647 = vlaneseq
    %v1648 = vshrl.u32 %v1647, 7
    %v1649 = vsub.s32 1, %v1648
    %v1650 = vrot.slane %v516, %v1649
    %1652 = vbcast.lane.b32.xlu0 %v1650, 256
    %v1653 = vpop.permute.xlu0 %1652
    %v1654 = vlaneseq
    %v1655 = vshrl.u32 %v1654, 7
    %v1656 = vsub.s32 2, %v1655
    %v1657 = vrot.slane %v516, %v1656
    %1659 = vbcast.lane.b32.xlu0 %v1657, 256
    %v1660 = vpop.permute.xlu0 %1659
    %v1661 = vlaneseq
    %v1662 = vshrl.u32 %v1661, 7
    %v1663 = vsub.s32 3, %v1662
    %v1664 = vrot.slane %v516, %v1663
    %1666 = vbcast.lane.b32.xlu0 %v1664, 256
    %v1667 = vpop.permute.xlu0 %1666
    %v1668 = vlaneseq
    %v1669 = vshrl.u32 %v1668, 7
    %v1670 = vsub.s32 4, %v1669
    %v1671 = vrot.slane %v516, %v1670
    %1673 = vbcast.lane.b32.xlu0 %v1671, 256
    %v1674 = vpop.permute.xlu0 %1673
    %v1675 = vlaneseq
    %v1676 = vshrl.u32 %v1675, 7
    %v1677 = vsub.s32 5, %v1676
    %v1678 = vrot.slane %v516, %v1677
    %1680 = vbcast.lane.b32.xlu0 %v1678, 256
    %v1681 = vpop.permute.xlu0 %1680
    %v1682 = vlaneseq
    %v1683 = vshrl.u32 %v1682, 7
    %v1684 = vsub.s32 6, %v1683
    %v1685 = vrot.slane %v516, %v1684
    %1687 = vbcast.lane.b32.xlu0 %v1685, 256
    %v1688 = vpop.permute.xlu0 %1687
    %v1689 = vlaneseq
    %v1690 = vshrl.u32 %v1689, 7
    %v1691 = vsub.s32 7, %v1690
    %v1692 = vrot.slane %v516, %v1691
    %1694 = vbcast.lane.b32.xlu0 %v1692, 256
    %v1695 = vpop.permute.xlu0 %1694
    %v1705 = vunpack.c.l.s4 839922192
    %v1706 = vunpack.c.0.s8 %v1705
    %v1707 = vlaneseq
    %v1708 = vshrl.u32 %v1707, 7
    %v1709 = vsub.s32 %v1706, %v1708
    %v1710 = vrot.slane %v1646, %v1709
    %v1712 = vunpack.c.l.s4 839922192
    %v1713 = vunpack.c.0.s8 %v1712
    %v1714 = vlaneseq
    %v1715 = vshrl.u32 %v1714, 7
    %v1716 = vsub.s32 %v1713, %v1715
    %v1717 = vrot.slane %v1653, %v1716
    %v1719 = vunpack.c.l.s4 839922192
    %v1720 = vunpack.c.0.s8 %v1719
    %v1721 = vlaneseq
    %v1722 = vshrl.u32 %v1721, 7
    %v1723 = vsub.s32 %v1720, %v1722
    %v1724 = vrot.slane %v1660, %v1723
    %v1726 = vunpack.c.l.s4 839922192
    %v1727 = vunpack.c.0.s8 %v1726
    %v1728 = vlaneseq
    %v1729 = vshrl.u32 %v1728, 7
    %v1730 = vsub.s32 %v1727, %v1729
    %v1731 = vrot.slane %v1667, %v1730
    %v1733 = vunpack.c.l.s4 839922192
    %v1734 = vunpack.c.0.s8 %v1733
    %v1735 = vlaneseq
    %v1736 = vshrl.u32 %v1735, 7
    %v1737 = vsub.s32 %v1734, %v1736
    %v1738 = vrot.slane %v1674, %v1737
    %v1740 = vunpack.c.l.s4 839922192
    %v1741 = vunpack.c.0.s8 %v1740
    %v1742 = vlaneseq
    %v1743 = vshrl.u32 %v1742, 7
    %v1744 = vsub.s32 %v1741, %v1743
    %v1745 = vrot.slane %v1681, %v1744
    %v1747 = vunpack.c.l.s4 839922192
    %v1748 = vunpack.c.0.s8 %v1747
    %v1749 = vlaneseq
    %v1750 = vshrl.u32 %v1749, 7
    %v1751 = vsub.s32 %v1748, %v1750
    %v1752 = vrot.slane %v1688, %v1751
    %v1754 = vunpack.c.l.s4 839922192
    %v1755 = vunpack.c.0.s8 %v1754
    %v1756 = vlaneseq
    %v1757 = vshrl.u32 %v1756, 7
    %v1758 = vsub.s32 %v1755, %v1757
    %v1759 = vrot.slane %v1695, %v1758
    %v1768 = vmul.f32 %v63, %v1710
    %v1769 = vmul.f32 %v64, %v1717
    %v1770 = vmul.f32 %v65, %v1724
    %v1771 = vmul.f32 %v66, %v1731
    %v1772 = vmul.f32 %v67, %v1738
    %v1773 = vmul.f32 %v68, %v1745
    %v1774 = vmul.f32 %v69, %v1752
    %v1775 = vmul.f32 %v70, %v1759
    %v1778 = vcombine.low %v1637, %v1639
    %v1779 = vcombine.high %v1637, %v1639
    %v1781 = vunpack.c.l.s4 1966171168
    %v1782 = vunpack.c.0.s8 %v1781
    %v1783 = vlaneseq
    %v1784 = vshrl.u32 %v1783, 7
    %v1785 = vsub.s32 %v1782, %v1784
    %v1786 = vrot.slane %v1778, %v1785
    %v1788 = vunpack.c.l.s4 1966171168
    %v1789 = vunpack.c.0.s8 %v1788
    %v1790 = vlaneseq
    %v1791 = vshrl.u32 %v1790, 7
    %v1792 = vsub.s32 %v1789, %v1791
    %v1793 = vrot.slane %v1779, %v1792
    %v1794 = vcombine.high %v1786, %v1786
    %v1795 = vcombine.high %v1793, %v1793
    %v1797 = vunpack.c.l.s4 1966171168
    %v1798 = vunpack.c.0.s8 %v1797
    %v1799 = vlaneseq
    %v1800 = vshrl.u32 %v1799, 7
    %v1801 = vsub.s32 %v1798, %v1800
    %v1802 = vrot.slane %v1786, %v1801
    %v1804 = vunpack.c.l.s4 1966171168
    %v1805 = vunpack.c.0.s8 %v1804
    %v1806 = vlaneseq
    %v1807 = vshrl.u32 %v1806, 7
    %v1808 = vsub.s32 %v1805, %v1807
    %v1809 = vrot.slane %v1793, %v1808
    %v1811 = vunpack.c.l.s4 1966171168
    %v1812 = vunpack.c.0.s8 %v1811
    %v1813 = vlaneseq
    %v1814 = vshrl.u32 %v1813, 7
    %v1815 = vsub.s32 %v1812, %v1814
    %v1816 = vrot.slane %v1794, %v1815
    %v1818 = vunpack.c.l.s4 1966171168
    %v1819 = vunpack.c.0.s8 %v1818
    %v1820 = vlaneseq
    %v1821 = vshrl.u32 %v1820, 7
    %v1822 = vsub.s32 %v1819, %v1821
    %v1823 = vrot.slane %v1795, %v1822
    %v1824 = vcombine.high %v1802, %v1802
    %v1825 = vcombine.high %v1809, %v1809
    %v1826 = vcombine.high %v1816, %v1816
    %v1827 = vcombine.high %v1823, %v1823
    %v1828 = vlaneseq
    %v1829 = vshrl.u32 %v1828, 7
    %v1830 = vsub.s32 0, %v1829
    %v1831 = vrot.slane %v1802, %v1830
    %v1832 = vlaneseq
    %v1833 = vshrl.u32 %v1832, 7
    %v1834 = vsub.s32 1, %v1833
    %v1835 = vrot.slane %v1802, %v1834
    %v1836 = vlaneseq
    %v1837 = vshrl.u32 %v1836, 7
    %v1838 = vsub.s32 0, %v1837
    %v1839 = vrot.slane %v1816, %v1838
    %v1840 = vlaneseq
    %v1841 = vshrl.u32 %v1840, 7
    %v1842 = vsub.s32 1, %v1841
    %v1843 = vrot.slane %v1816, %v1842
    %v1844 = vlaneseq
    %v1845 = vshrl.u32 %v1844, 7
    %v1846 = vsub.s32 0, %v1845
    %v1847 = vrot.slane %v1824, %v1846
    %v1848 = vlaneseq
    %v1849 = vshrl.u32 %v1848, 7
    %v1850 = vsub.s32 1, %v1849
    %v1851 = vrot.slane %v1824, %v1850
    %v1852 = vlaneseq
    %v1853 = vshrl.u32 %v1852, 7
    %v1854 = vsub.s32 0, %v1853
    %v1855 = vrot.slane %v1826, %v1854
    %v1856 = vlaneseq
    %v1857 = vshrl.u32 %v1856, 7
    %v1858 = vsub.s32 1, %v1857
    %v1859 = vrot.slane %v1826, %v1858
    %v1860 = vlaneseq
    %v1861 = vshrl.u32 %v1860, 7
    %v1862 = vsub.s32 0, %v1861
    %v1863 = vrot.slane %v1809, %v1862
    %v1864 = vlaneseq
    %v1865 = vshrl.u32 %v1864, 7
    %v1866 = vsub.s32 1, %v1865
    %v1867 = vrot.slane %v1809, %v1866
    %v1868 = vlaneseq
    %v1869 = vshrl.u32 %v1868, 7
    %v1870 = vsub.s32 0, %v1869
    %v1871 = vrot.slane %v1823, %v1870
    %v1872 = vlaneseq
    %v1873 = vshrl.u32 %v1872, 7
    %v1874 = vsub.s32 1, %v1873
    %v1875 = vrot.slane %v1823, %v1874
    %v1876 = vlaneseq
    %v1877 = vshrl.u32 %v1876, 7
    %v1878 = vsub.s32 0, %v1877
    %v1879 = vrot.slane %v1825, %v1878
    %v1880 = vlaneseq
    %v1881 = vshrl.u32 %v1880, 7
    %v1882 = vsub.s32 1, %v1881
    %v1883 = vrot.slane %v1825, %v1882
    %v1884 = vlaneseq
    %v1885 = vshrl.u32 %v1884, 7
    %v1886 = vsub.s32 0, %v1885
    %v1887 = vrot.slane %v1827, %v1886
    %v1888 = vlaneseq
    %v1889 = vshrl.u32 %v1888, 7
    %v1890 = vsub.s32 1, %v1889
    %v1891 = vrot.slane %v1827, %v1890
    %v1892 = vcombine.low %v1831, %v1835
    %v1893 = vcombine.low %v1839, %v1843
    %v1894 = vcombine.low %v1847, %v1851
    %v1895 = vcombine.low %v1855, %v1859
    %v1896 = vcombine.low %v1863, %v1867
    %v1897 = vcombine.low %v1871, %v1875
    %v1898 = vcombine.low %v1879, %v1883
    %v1899 = vcombine.low %v1887, %v1891
    %v1908 = vmul.f32 %v1768, %v1892
    %v1909 = vmul.f32 %v1769, %v1893
    %v1910 = vmul.f32 %v1770, %v1894
    %v1911 = vmul.f32 %v1771, %v1895
    %v1912 = vmul.f32 %v1772, %v1896
    %v1913 = vmul.f32 %v1773, %v1897
    %v1914 = vmul.f32 %v1774, %v1898
    %v1915 = vmul.f32 %v1775, %v1899
    %1916 = vst [vmem:[#allocation8] sm:$0xff] %v1908
    %1917 = vst [vmem:[#allocation8 + $0x8] sm:$0xff] %v1909
    %1918 = vst [vmem:[#allocation8 + $0x10] sm:$0xff] %v1910
    %1919 = vst [vmem:[#allocation8 + $0x18] sm:$0xff] %v1911
    %1920 = vst [vmem:[#allocation8 + $0x20] sm:$0xff] %v1912
    %1921 = vst [vmem:[#allocation8 + $0x28] sm:$0xff] %v1913
    %1922 = vst [vmem:[#allocation8 + $0x30] sm:$0xff] %v1914
    %1923 = vst [vmem:[#allocation8 + $0x38] sm:$0xff] %v1915
    // Predicated region
    $region34: #{tpu_custom_call.1} parent=1 // pred_check
      _
    $region35: #{tpu_custom_call.1} parent=1 // pred_check_branch
      %1925 = sbr.rel (0) target = $region37
    $region36: #{tpu_custom_call.1} parent=1 // pred_region
      %s1927 = ssub.s32 1024, 1024
      %1928 = vsyncadd [#allocation4], %s1927
      %s1929 = sshll.u32 [#allocation8], 4
      %s1930 = int_to_ptr.vmem [resolvable:$true] %s1929
      %1935 = dma.vmem_to_hbm [thread:$0]  %s1930, 1024, %s5, [#allocation4], 128, 128, 8
    $region37: #{tpu_custom_call.1} parent=1 // pred_fallthru
      _
    // Predicated region
    $region38: #{tpu_custom_call.1} parent=1 // pred_check
      _
    $region39: #{tpu_custom_call.1} parent=1 // pred_check_branch
      %1937 = sbr.rel (0) target = $region41
    $region40: #{tpu_custom_call.1} parent=1 // pred_region
      %1938 = dma.done [#allocation4], 1024
    $region41: #{tpu_custom_call.1} parent=1 // pred_fallthru
      _
    %1939 = vsyncpa [#allocation3], 1
    %1940 = vsyncpa [#allocation6], 1
    %1941 = vsyncpa [#allocation4], 1

</llo_original>
